<compile_context>
chip_gen: v5e
topology: v5e:2x2
jax: 0.10.0
libtpu: 0.0.40
codegen_flags: <defaults>
</compile_context>

<pallas_src>
import jax
import jax.numpy as jnp
from jax.experimental import pallas as pl
from jax.experimental.pallas import tpu as pltpu

_EPS = 1e-5
_LANE = 128
_SINGLE_BUF_BYTES = 2 * 1024 * 1024   # single-buffer resident weights above this


def _round_up(x, m):
    return (x + m - 1) // m * m


def _tpu_budgets():
    """Per-generation tiling knobs.

    v7x has 64 MiB VMEM per TensorCore (2 cores/chip) -> smaller M tiles,
    48 MiB scoped limit, and a 2-way column split of the stats matmul so the
    second core gets work on the 'parallel' axis.  v5e/v6e have 128 MiB ->
    much larger M tiles (fewer grid steps, longer uninterrupted MXU runs).
    """
    try:
        vmem = pltpu.get_tpu_info().vmem_capacity_bytes
    except Exception:
        vmem = 128 * 1024 * 1024
    if vmem <= 80 * 1024 * 1024:                          # v7x-class
        return dict(tm_max=512, vmem_limit=48 * 1024 * 1024, n_split=2)
    return dict(tm_max=2048, vmem_limit=100 * 1024 * 1024, n_split=1)


_BUDGET = _tpu_budgets()


def _tile_rows(m, tm_max):
    # bf16 operands/outputs: second-minor dim 16-aligned (2 rows per sublane).
    tm = min(tm_max, _round_up(m, 16))
    return tm, _round_up(m, tm)


def _weight_spec(shape, index_map):
    # Resident weight block (index constant across the M axis).  Large blocks
    # are single-buffered to halve their VMEM footprint (matters on v7x at
    # DCGAN-64 sizes); small ones keep default double-buffering.
    if shape[0] * shape[1] * 2 > _SINGLE_BUF_BYTES:
        return pl.BlockSpec(shape, index_map, pipeline_mode=pl.Buffered(1))
    return pl.BlockSpec(shape, index_map)


# ----------------------------------------------------------------------------
# Pallas kernels
# ----------------------------------------------------------------------------
def _mm_stats_kernel(p_ref, w_ref, y_ref, sum_ref, sq_ref):
    """Tiled matmul (bf16 x bf16 -> f32 MXU acc) + per-column sum / sumsq.

    Stats are kept as (8, tn) partials (whole-vreg VPU adds, no per-tile
    cross-sublane XLU reduce), resident in VMEM across the inner 'arbitrary'
    M axis, and collapsed to per-column scalars on the host.  Zero-padded
    rows contribute 0 to both sums, so the batch statistics stay exact.
    """
    @pl.when(pl.program_id(1) == 0)
    def _init():
        sum_ref[...] = jnp.zeros_like(sum_ref)
        sq_ref[...] = jnp.zeros_like(sq_ref)

    acc = jnp.dot(p_ref[...], w_ref[...], preferred_element_type=jnp.float32)
    part = acc.reshape(acc.shape[0] // 8, 8, acc.shape[1])
    sum_ref[...] += jnp.sum(part, axis=0)
    sq_ref[...] += jnp.sum(part * part, axis=0)
    y_ref[...] = acc.astype(y_ref.dtype)           # pre-BN activations (bf16)


def _mm_tanh_kernel(p_ref, w_ref, y_ref):
    """Tiled matmul + fused tanh for the final (no-BN) layer; bf16 store."""
    acc = jnp.dot(p_ref[...], w_ref[...], preferred_element_type=jnp.float32)
    y_ref[...] = jnp.tanh(acc).astype(y_ref.dtype)


def _bn_relu_kernel(y_ref, scale_ref, shift_ref, o_ref):
    """Apply folded BatchNorm (y*scale + shift) + ReLU, f32 math, bf16 out."""
    y = y_ref[...].astype(jnp.float32)
    o_ref[...] = jnp.maximum(y * scale_ref[...] + shift_ref[...], 0.0).astype(
        o_ref.dtype)


# ----------------------------------------------------------------------------
# pallas_call wrappers (tiling / specs)
# ----------------------------------------------------------------------------
def _pad_operand(x2d, m_pad, k_pad):
    m, k = x2d.shape
    if m_pad != m or k_pad != k:
        x2d = jnp.pad(x2d, ((0, m_pad - m), (0, k_pad - k)))
    return x2d


def _matmul_stats(x2d, w2d):
    m, _ = x2d.shape
    k_pad, n_pad = w2d.shape
    tm, m_pad = _tile_rows(m, _BUDGET["tm_max"])
    x2d = _pad_operand(x2d, m_pad, k_pad)
    n_split = _BUDGET["n_split"]
    n_tiles = n_split if (n_split > 1 and n_pad % (n_split * _LANE) == 0) else 1
    tn = n_pad // n_tiles
    grid = (n_tiles, m_pad // tm)       # column axis parallel, M axis carries
    y, s, sq = pl.pallas_call(
        _mm_stats_kernel,
        out_shape=(jax.ShapeDtypeStruct((m_pad, n_pad), jnp.bfloat16),
                   jax.ShapeDtypeStruct((8, n_pad), jnp.float32),
                   jax.ShapeDtypeStruct((8, n_pad), jnp.float32)),
        grid=grid,
        in_specs=[pl.BlockSpec((tm, k_pad), lambda j, i: (i, 0)),
                  _weight_spec((k_pad, tn), lambda j, i: (0, j))],
        out_specs=[pl.BlockSpec((tm, tn), lambda j, i: (i, j)),
                   pl.BlockSpec((8, tn), lambda j, i: (0, j)),   # accumulator
                   pl.BlockSpec((8, tn), lambda j, i: (0, j))],  # accumulator
        compiler_params=pltpu.CompilerParams(
            dimension_semantics=("parallel", "arbitrary"),
            vmem_limit_bytes=_BUDGET["vmem_limit"]),
        cost_estimate=pl.CostEstimate(
            flops=2 * m_pad * k_pad * n_pad, transcendentals=0,
            bytes_accessed=(n_tiles * m_pad * k_pad + k_pad * n_pad
                            + m_pad * n_pad) * 2 + 2 * 8 * n_pad * 4),
    )(x2d, w2d)
    return y, s, sq


def _matmul_tanh(x2d, w2d):
    m, _ = x2d.shape
    k_pad, n_pad = w2d.shape
    tm, m_pad = _tile_rows(m, _BUDGET["tm_max"])
    x2d = _pad_operand(x2d, m_pad, k_pad)
    grid = (m_pad // tm,)
    return pl.pallas_call(
        _mm_tanh_kernel,
        out_shape=jax.ShapeDtypeStruct((m_pad, n_pad), jnp.bfloat16),
        grid=grid,
        in_specs=[pl.BlockSpec((tm, k_pad), lambda i: (i, 0)),
                  _weight_spec((k_pad, n_pad), lambda i: (0, 0))],
        out_specs=pl.BlockSpec((tm, n_pad), lambda i: (i, 0)),
        compiler_params=pltpu.CompilerParams(
            dimension_semantics=("parallel",),
            vmem_limit_bytes=_BUDGET["vmem_limit"]),
        cost_estimate=pl.CostEstimate(
            flops=2 * m_pad * k_pad * n_pad, transcendentals=m_pad * n_pad,
            bytes_accessed=(m_pad * k_pad + k_pad * n_pad + m_pad * n_pad) * 2),
    )(x2d, w2d)


def _bn_relu(y, scale, shift):
    m_pad, n_pad = y.shape
    # Pure HBM-bound VPU pass: use the largest lane-dense row tile that fits,
    # decoupled from the matmul tile, capped at 4096 rows.
    cap = max(16, min(4096, _BUDGET["vmem_limit"] // (16 * n_pad)))
    tm = min(m_pad, cap - cap % 16)
    tm = max(tm, 16)
    while m_pad % tm:                 # m_pad is a multiple of 16 -> terminates
        tm -= 16
    grid = (m_pad // tm,)
    return pl.pallas_call(
        _bn_relu_kernel,
        out_shape=jax.ShapeDtypeStruct((m_pad, n_pad), jnp.bfloat16),
        grid=grid,
        in_specs=[pl.BlockSpec((tm, n_pad), lambda i: (i, 0)),
                  pl.BlockSpec((1, n_pad), lambda i: (0, 0)),
                  pl.BlockSpec((1, n_pad), lambda i: (0, 0))],
        out_specs=pl.BlockSpec((tm, n_pad), lambda i: (i, 0)),
        compiler_params=pltpu.CompilerParams(
            dimension_semantics=("parallel",),
            vmem_limit_bytes=_BUDGET["vmem_limit"]),
    )(y, scale, shift)


# ----------------------------------------------------------------------------
# Glue (plain JAX): im2col, weight prepacking, BN folding
# ----------------------------------------------------------------------------
def _im2col(x_pad, k):
    # x_pad: (N, Hp, Wp, C) -> (N*OH*OW, k*k*C), patch element order (ky, kx, c)
    n, hp, wp, c = x_pad.shape
    oh, ow = hp - k + 1, wp - k + 1
    cols = []
    for ky in range(k):
        for kx in range(k):
            cols.append(x_pad[:, ky:ky + oh, kx:kx + ow, :])
    p = jnp.stack(cols, axis=3)                    # (N, OH, OW, k*k, C)
    return p.reshape(n * oh * ow, k * k * c), (n, oh, ow)


def _pack_stride2_weight(w):
    """ConvTranspose2d(k=4, s=2, p=1) -> sub-pixel packed weight (9*Cin, 4*Cout).

    Output pixel (2j+ry, 2i+rx) only touches a 2x2 sub-window of the 3x3 patch
    taken at padded-input position (j, i), with kernel taps
    kh = 3 - 2*dy - ry, kw = 3 - 2*dx - rx (dy, dx in {0,1}); unused taps = 0.
    Column order is (ry, rx, cout) so the result is a depth-to-space away
    from the true output.
    """
    cin, cout = w.shape[0], w.shape[1]
    wc = jnp.zeros((3, 3, cin, 2, 2, cout), dtype=w.dtype)
    for ry in range(2):
        for rx in range(2):
            for dy in range(2):
                for dx in range(2):
                    wc = wc.at[ry + dy, rx + dx, :, ry, rx, :].set(
                        w[:, :, 3 - 2 * dy - ry, 3 - 2 * dx - rx])
    return wc.reshape(9 * cin, 4 * cout)


def prepack_params(params):
    """One-time weight re-layout: direct / sub-pixel packing, K rows and
    output columns zero-padded to 128-lane multiples, bf16 cast."""
    packed = []
    # layer 1 (1x1 input, stride 1, pad 0): direct matmul
    #   y(N, 16*Cout) = x(N, z) @ W(z, 16*Cout), columns ordered (ky, kx, c).
    w, gamma, beta = params[0]
    z, cout = w.shape[0], w.shape[1]
    w2d = w.transpose(0, 2, 3, 1).reshape(z, 16 * cout)
    k_pad = _round_up(z, _LANE)
    n_pad = _round_up(16 * cout, _LANE)
    packed.append(dict(
        w2d=jnp.pad(w2d, ((0, k_pad - z),
                          (0, n_pad - 16 * cout))).astype(jnp.bfloat16),
        gamma=gamma.reshape(-1).astype(jnp.float32),
        beta=beta.reshape(-1).astype(jnp.float32),
        cout=cout, n_pad=n_pad, groups=16, use_bn=True))
    # layers 2..4 (stride 2, pad 1): packed sub-pixel weight (9*Cin, 4*Cout)
    for idx, (w, gamma, beta) in enumerate(params[1:], start=1):
        cin, cout = w.shape[0], w.shape[1]
        w2d = _pack_stride2_weight(w)
        k_pad = _round_up(9 * cin, _LANE)
        n_pad = _round_up(4 * cout, _LANE)
        use_bn = idx < 3
        packed.append(dict(
            w2d=jnp.pad(w2d, ((0, k_pad - 9 * cin),
                              (0, n_pad - 4 * cout))).astype(jnp.bfloat16),
            gamma=gamma.reshape(-1).astype(jnp.float32) if use_bn else None,
            beta=beta.reshape(-1).astype(jnp.float32) if use_bn else None,
            cout=cout, n_pad=n_pad, groups=4, use_bn=use_bn))
    return packed


def _bn_scale_shift(s8, sq8, count, p):
    """Fold exact batch stats (partial (8, n) sums over all M tiles, `groups`
    parity/spatial column-groups per channel) + gamma/beta into per-column
    scale & shift."""
    cout, n_pad, groups = p["cout"], p["n_pad"], p["groups"]
    s = jnp.sum(s8, axis=0)
    sq = jnp.sum(sq8, axis=0)
    s_c = s[:groups * cout].reshape(groups, cout).sum(axis=0)
    sq_c = sq[:groups * cout].reshape(groups, cout).sum(axis=0)
    mean = s_c / count
    var = jnp.maximum(sq_c / count - mean * mean, 0.0)
    scale = p["gamma"] * jax.lax.rsqrt(var + _EPS)
    shift = p["beta"] - mean * scale
    pad = ((0, n_pad - groups * cout),)
    scale = jnp.pad(jnp.tile(scale, groups), pad).reshape(1, n_pad)
    shift = jnp.pad(jnp.tile(shift, groups), pad).reshape(1, n_pad)
    return scale, shift


# ----------------------------------------------------------------------------
# Forward pass
# ----------------------------------------------------------------------------
def generator_forward(x_nchw, packed):
    """x_nchw: (N, z_dim, 1, 1) f32 -> (N, img_channels, 32, 32) f32."""
    n = x_nchw.shape[0]

    # ---- layer 1: ConvT(z, 8f, 4, 1, 0) + BN + ReLU  (1x1 -> 4x4) ----------
    p = packed[0]
    x2d = x_nchw.reshape(n, -1).astype(jnp.bfloat16)      # (N, z)
    y, s, sq = _matmul_stats(x2d, p["w2d"])
    scale, shift = _bn_scale_shift(s, sq, 16 * n, p)      # N*16 elems/channel
    y = _bn_relu(y, scale, shift)
    x = y[:n, :16 * p["cout"]].reshape(n, 4, 4, p["cout"])   # NHWC

    # ---- layers 2..4: ConvT(., ., 4, 2, 1) via sub-pixel decomposition -----
    # TODO(synk): move the 3x3 im2col in-kernel (halo DMA from HBM-resident
    # activation) to remove the remaining 9x host-side patch materialization.
    for p in packed[1:]:
        h, w = x.shape[1], x.shape[2]
        xp = jnp.pad(x, ((0, 0), (1, 1), (1, 1), (0, 0)))
        patches, _ = _im2col(xp, 3)                      # (N*H*W, 9*Cin)
        rows = patches.shape[0]
        if p["use_bn"]:
            y, s, sq = _matmul_stats(patches, p["w2d"])
            scale, shift = _bn_scale_shift(s, sq, 4 * rows, p)
            y = _bn_relu(y, scale, shift)
        else:
            y = _matmul_tanh(patches, p["w2d"])          # final layer, bf16
        y = y[:rows, :4 * p["cout"]]
        # depth-to-space: (N, H, W, ry, rx, C) -> (N, 2H, 2W, C)
        y = y.reshape(n, h, w, 2, 2, p["cout"])
        x = y.transpose(0, 1, 3, 2, 4, 5).reshape(n, 2 * h, 2 * w, p["cout"])

    return jnp.transpose(x, (0, 3, 1, 2)).astype(jnp.float32)      # NCHW


# ----------------------------------------------------------------------------
# Pure-JAX f32 reference (lax conv with lhs_dilation) for validation
# ----------------------------------------------------------------------------
_LAYER_CFG = [
    (1, 0, True, "relu"),
    (2, 1, True, "relu"),
    (2, 1, True, "relu"),
    (2, 1, False, "tanh"),
]


def generator_reference(x, params):
    for (w, gamma, beta), (stride, pad, use_bn, act) in zip(params, _LAYER_CFG):
        k = w.shape[2]
        w_f = jnp.flip(w, axis=(2, 3)).transpose(1, 0, 2, 3)   # (Cout,Cin,K,K)
        x = jax.lax.conv_general_dilated(
            x, w_f, window_strides=(1, 1),
            padding=[(k - 1 - pad, k - 1 - pad)] * 2,
            lhs_dilation=(stride, stride),
            dimension_numbers=("NCHW", "OIHW", "NCHW"))
        if use_bn:
            mean = jnp.mean(x, axis=(0, 2, 3), keepdims=True)
            var = jnp.mean(jnp.square(x - mean), axis=(0, 2, 3), keepdims=True)
            x = (x - mean) * jax.lax.rsqrt(var + _EPS)
            x = x * gamma.reshape(1, -1, 1, 1) + beta.reshape(1, -1, 1, 1)
        x = jnp.maximum(x, 0.0) if act == "relu" else jnp.tanh(x)
    return x


def init_params(key, z_dim, img_channels, features_g):
    chans = [z_dim, features_g * 8, features_g * 4, features_g * 2,
             img_channels]
    k = 4
    params = []
    for i in range(4):
        key, sub = jax.random.split(key)
        cin, cout = chans[i], chans[i + 1]
        w = 0.05 * jax.random.normal(sub, (cin, cout, k, k), jnp.float32)
        gamma = jnp.ones((1, cout), jnp.float32)   # PyTorch BN default weight
        beta = jnp.zeros((1, cout), jnp.float32)   # PyTorch BN default bias
        params.append((w, gamma, beta))
    return params


if __name__ == "__main__":
    # Small shapes: z_dim=32, features_g=8, img_channels=3, batch=2
    Z_DIM, IMG_C, FEAT_G, BATCH = 32, 3, 8, 2

    key = jax.random.PRNGKey(0)
    key, kx = jax.random.split(key)
    x = jax.random.normal(kx, (BATCH, Z_DIM, 1, 1), jnp.float32)
    params = init_params(key, Z_DIM, IMG_C, FEAT_G)
    packed = prepack_params(params)            # one-time weight prepacking

    gen = jax.jit(lambda inp: generator_forward(inp, packed))
    out = jax.block_until_ready(gen(x))

    assert out.shape == (BATCH, IMG_C, 32, 32), out.shape
    assert bool(jnp.all(jnp.isfinite(out)))
    ref = jax.block_until_ready(generator_reference(x, params))
    # bf16 matmul operands vs the f32 reference -> small numerical drift.
    max_err = float(jnp.max(jnp.abs(out - ref)))
    assert jnp.allclose(out, ref, atol=5e-2, rtol=5e-2), max_err
    print("KERNEL_OK")
</pallas_src>

<mosaic_0001>
module attributes {stable_mosaic.version = 11 : i64} {
  func.func @_mm_stats_kernel(%arg0: i32, %arg1: i32, %arg2: memref<16x128xbf16, #tpu.memory_space<vmem>>, %arg3: memref<128x1024xbf16, #tpu.memory_space<vmem>>, %arg4: memref<16x1024xbf16, #tpu.memory_space<vmem>>, %arg5: memref<8x1024xf32, #tpu.memory_space<vmem>>, %arg6: memref<8x1024xf32, #tpu.memory_space<vmem>>) attributes {dimension_semantics = [#tpu.dimension_semantics<parallel>, #tpu.dimension_semantics<arbitrary>], iteration_bounds = array<i64: 1, 1>, scalar_prefetch = 0 : i64, scratch_operands = 0 : i64, tpu.core_type = #tpu.core_type<tc>, window_params = [{transform_indices = @transform_0, window_bounds = array<i64: 16, 128>}, {transform_indices = @transform_1, window_bounds = array<i64: 128, 1024>}, {transform_indices = @transform_2, window_bounds = array<i64: 16, 1024>}, {transform_indices = @transform_3, window_bounds = array<i64: 8, 1024>}, {transform_indices = @transform_4, window_bounds = array<i64: 8, 1024>}]} {
    %c0_i32 = arith.constant 0 : i32
    %0 = arith.cmpi eq, %arg1, %c0_i32 : i32
    %1 = arith.extui %0 : i1 to i32
    %c0_i32_0 = arith.constant 0 : i32
    %2 = arith.cmpi ne, %1, %c0_i32_0 : i32
    scf.if %2 {
      %cst_16 = arith.constant 0.000000e+00 : f32
      %18 = vector.broadcast %cst_16 : f32 to vector<8x1024xf32>
      %c0_17 = arith.constant 0 : index
      %c0_18 = arith.constant 0 : index
      %19 = vector.load %arg5[%c0_17, %c0_18] : memref<8x1024xf32, #tpu.memory_space<vmem>>, vector<8x1024xf32>
      tpu.vector_store %arg5[%c0_17, %c0_18], %18 {strides = array<i32>} : memref<8x1024xf32, #tpu.memory_space<vmem>>, vector<8x1024xf32>,
      %cst_19 = arith.constant 0.000000e+00 : f32
      %20 = vector.broadcast %cst_19 : f32 to vector<8x1024xf32>
      %c0_20 = arith.constant 0 : index
      %c0_21 = arith.constant 0 : index
      %21 = vector.load %arg6[%c0_20, %c0_21] : memref<8x1024xf32, #tpu.memory_space<vmem>>, vector<8x1024xf32>
      tpu.vector_store %arg6[%c0_20, %c0_21], %20 {strides = array<i32>} : memref<8x1024xf32, #tpu.memory_space<vmem>>, vector<8x1024xf32>,
    } else {
    }
    %c0 = arith.constant 0 : index
    %c0_1 = arith.constant 0 : index
    %3 = vector.load %arg2[%c0, %c0_1] : memref<16x128xbf16, #tpu.memory_space<vmem>>, vector<16x128xbf16>
    %c0_2 = arith.constant 0 : index
    %c0_3 = arith.constant 0 : index
    %4 = vector.load %arg3[%c0_2, %c0_3] : memref<128x1024xbf16, #tpu.memory_space<vmem>>, vector<128x1024xbf16>
    %cst = arith.constant dense<0.000000e+00> : vector<16x1024xf32>
    %5 = tpu.matmul %3, %4, %cst {dimension_numbers = #tpu.dot_dimension_numbers<[1], [0], [0], [1], [0, 0, 1, 1], [], []>} : vector<16x128xbf16>, vector<128x1024xbf16>, vector<16x1024xf32> -> vector<16x1024xf32>
    %6 = vector.shape_cast %5 : vector<16x1024xf32> to vector<2x8x1024xf32>
    %c0_4 = arith.constant 0 : index
    %c0_5 = arith.constant 0 : index
    %7 = vector.load %arg5[%c0_4, %c0_5] : memref<8x1024xf32, #tpu.memory_space<vmem>>, vector<8x1024xf32>
    %cst_6 = arith.constant dense<0.000000e+00> : vector<8x1024xf32>
    %8 = vector.multi_reduction <add>, %6, %cst_6 [0] : vector<2x8x1024xf32> to vector<8x1024xf32>
    %9 = arith.addf %7, %8 : vector<8x1024xf32>
    %c0_7 = arith.constant 0 : index
    %c0_8 = arith.constant 0 : index
    %10 = vector.load %arg5[%c0_7, %c0_8] : memref<8x1024xf32, #tpu.memory_space<vmem>>, vector<8x1024xf32>
    tpu.vector_store %arg5[%c0_7, %c0_8], %9 {strides = array<i32>} : memref<8x1024xf32, #tpu.memory_space<vmem>>, vector<8x1024xf32>,
    %c0_9 = arith.constant 0 : index
    %c0_10 = arith.constant 0 : index
    %11 = vector.load %arg6[%c0_9, %c0_10] : memref<8x1024xf32, #tpu.memory_space<vmem>>, vector<8x1024xf32>
    %12 = arith.mulf %6, %6 : vector<2x8x1024xf32>
    %cst_11 = arith.constant dense<0.000000e+00> : vector<8x1024xf32>
    %13 = vector.multi_reduction <add>, %12, %cst_11 [0] : vector<2x8x1024xf32> to vector<8x1024xf32>
    %14 = arith.addf %11, %13 : vector<8x1024xf32>
    %c0_12 = arith.constant 0 : index
    %c0_13 = arith.constant 0 : index
    %15 = vector.load %arg6[%c0_12, %c0_13] : memref<8x1024xf32, #tpu.memory_space<vmem>>, vector<8x1024xf32>
    tpu.vector_store %arg6[%c0_12, %c0_13], %14 {strides = array<i32>} : memref<8x1024xf32, #tpu.memory_space<vmem>>, vector<8x1024xf32>,
    %16 = arith.truncf %5 : vector<16x1024xf32> to vector<16x1024xbf16>
    %c0_14 = arith.constant 0 : index
    %c0_15 = arith.constant 0 : index
    %17 = vector.load %arg4[%c0_14, %c0_15] : memref<16x1024xbf16, #tpu.memory_space<vmem>>, vector<16x1024xbf16>
    tpu.vector_store %arg4[%c0_14, %c0_15], %16 {strides = array<i32>} : memref<16x1024xbf16, #tpu.memory_space<vmem>>, vector<16x1024xbf16>,
    return
  }
  func.func @transform_0(%arg0: i32, %arg1: i32) -> (i32, i32) {
    %c0_i32 = arith.constant 0 : i32
    %c0_i32_0 = arith.constant 0 : i32
    return %arg1, %c0_i32 : i32, i32
  }
  func.func @transform_1(%arg0: i32, %arg1: i32) -> (i32, i32) {
    %c0_i32 = arith.constant 0 : i32
    %c0_i32_0 = arith.constant 0 : i32
    return %c0_i32, %arg0 : i32, i32
  }
  func.func @transform_2(%arg0: i32, %arg1: i32) -> (i32, i32) {
    %c0_i32 = arith.constant 0 : i32
    return %arg1, %arg0 : i32, i32
  }
  func.func @transform_3(%arg0: i32, %arg1: i32) -> (i32, i32) {
    %c0_i32 = arith.constant 0 : i32
    %c0_i32_0 = arith.constant 0 : i32
    return %c0_i32, %arg0 : i32, i32
  }
  func.func @transform_4(%arg0: i32, %arg1: i32) -> (i32, i32) {
    %c0_i32 = arith.constant 0 : i32
    %c0_i32_0 = arith.constant 0 : i32
    return %c0_i32, %arg0 : i32, i32
  }
}

module attributes {stable_mosaic.version = 11 : i64} {
  func.func @_bn_relu_kernel(%arg0: i32, %arg1: memref<16x1024xbf16, #tpu.memory_space<vmem>>, %arg2: memref<1x1024xf32, #tpu.memory_space<vmem>>, %arg3: memref<1x1024xf32, #tpu.memory_space<vmem>>, %arg4: memref<16x1024xbf16, #tpu.memory_space<vmem>>) attributes {dimension_semantics = [#tpu.dimension_semantics<parallel>], iteration_bounds = array<i64: 1>, scalar_prefetch = 0 : i64, scratch_operands = 0 : i64, tpu.core_type = #tpu.core_type<tc>, window_params = [{transform_indices = @transform_0, window_bounds = array<i64: 16, 1024>}, {pipeline_mode = #tpu.pipeline_mode<synchronous>, transform_indices = @transform_1, window_bounds = array<i64: 1, 1024>}, {pipeline_mode = #tpu.pipeline_mode<synchronous>, transform_indices = @transform_2, window_bounds = array<i64: 1, 1024>}, {transform_indices = @transform_3, window_bounds = array<i64: 16, 1024>}]} {
    %c0 = arith.constant 0 : index
    %c0_0 = arith.constant 0 : index
    %0 = vector.load %arg1[%c0, %c0_0] : memref<16x1024xbf16, #tpu.memory_space<vmem>>, vector<16x1024xbf16>
    %1 = arith.extf %0 : vector<16x1024xbf16> to vector<16x1024xf32>
    %c0_1 = arith.constant 0 : index
    %c0_2 = arith.constant 0 : index
    %2 = vector.load %arg2[%c0_1, %c0_2] : memref<1x1024xf32, #tpu.memory_space<vmem>>, vector<1x1024xf32>
    %3 = vector.broadcast %2 : vector<1x1024xf32> to vector<16x1024xf32>
    %4 = arith.mulf %1, %3 : vector<16x1024xf32>
    %c0_3 = arith.constant 0 : index
    %c0_4 = arith.constant 0 : index
    %5 = vector.load %arg3[%c0_3, %c0_4] : memref<1x1024xf32, #tpu.memory_space<vmem>>, vector<1x1024xf32>
    %6 = vector.broadcast %5 : vector<1x1024xf32> to vector<16x1024xf32>
    %7 = arith.addf %4, %6 : vector<16x1024xf32>
    %cst = arith.constant 0.000000e+00 : f32
    %8 = vector.broadcast %cst : f32 to vector<16x1024xf32>
    %9 = arith.maximumf %7, %8 : vector<16x1024xf32>
    %10 = arith.truncf %9 : vector<16x1024xf32> to vector<16x1024xbf16>
    %c0_5 = arith.constant 0 : index
    %c0_6 = arith.constant 0 : index
    %11 = vector.load %arg4[%c0_5, %c0_6] : memref<16x1024xbf16, #tpu.memory_space<vmem>>, vector<16x1024xbf16>
    tpu.vector_store %arg4[%c0_5, %c0_6], %10 {strides = array<i32>} : memref<16x1024xbf16, #tpu.memory_space<vmem>>, vector<16x1024xbf16>,
    return
  }
  func.func @transform_0(%arg0: i32) -> (i32, i32) {
    %c0_i32 = arith.constant 0 : i32
    %c0_i32_0 = arith.constant 0 : i32
    return %arg0, %c0_i32 : i32, i32
  }
  func.func @transform_1(%arg0: i32) -> (i32, i32) {
    %c0_i32 = arith.constant 0 : i32
    %c0_i32_0 = arith.constant 0 : i32
    %c0_i32_1 = arith.constant 0 : i32
    return %c0_i32, %c0_i32_0 : i32, i32
  }
  func.func @transform_2(%arg0: i32) -> (i32, i32) {
    %c0_i32 = arith.constant 0 : i32
    %c0_i32_0 = arith.constant 0 : i32
    %c0_i32_1 = arith.constant 0 : i32
    return %c0_i32, %c0_i32_0 : i32, i32
  }
  func.func @transform_3(%arg0: i32) -> (i32, i32) {
    %c0_i32 = arith.constant 0 : i32
    %c0_i32_0 = arith.constant 0 : i32
    return %arg0, %c0_i32 : i32, i32
  }
}

module attributes {stable_mosaic.version = 11 : i64} {
  func.func @_mm_stats_kernel(%arg0: i32, %arg1: i32, %arg2: memref<32x640xbf16, #tpu.memory_space<vmem>>, %arg3: memref<640x128xbf16, #tpu.memory_space<vmem>>, %arg4: memref<32x128xbf16, #tpu.memory_space<vmem>>, %arg5: memref<8x128xf32, #tpu.memory_space<vmem>>, %arg6: memref<8x128xf32, #tpu.memory_space<vmem>>) attributes {dimension_semantics = [#tpu.dimension_semantics<parallel>, #tpu.dimension_semantics<arbitrary>], iteration_bounds = array<i64: 1, 1>, scalar_prefetch = 0 : i64, scratch_operands = 0 : i64, tpu.core_type = #tpu.core_type<tc>, window_params = [{transform_indices = @transform_0, window_bounds = array<i64: 32, 640>}, {transform_indices = @transform_1, window_bounds = array<i64: 640, 128>}, {transform_indices = @transform_2, window_bounds = array<i64: 32, 128>}, {transform_indices = @transform_3, window_bounds = array<i64: 8, 128>}, {transform_indices = @transform_4, window_bounds = array<i64: 8, 128>}]} {
    %c0_i32 = arith.constant 0 : i32
    %0 = arith.cmpi eq, %arg1, %c0_i32 : i32
    %1 = arith.extui %0 : i1 to i32
    %c0_i32_0 = arith.constant 0 : i32
    %2 = arith.cmpi ne, %1, %c0_i32_0 : i32
    scf.if %2 {
      %cst_16 = arith.constant 0.000000e+00 : f32
      %18 = vector.broadcast %cst_16 : f32 to vector<8x128xf32>
      %c0_17 = arith.constant 0 : index
      %c0_18 = arith.constant 0 : index
      %19 = vector.load %arg5[%c0_17, %c0_18] : memref<8x128xf32, #tpu.memory_space<vmem>>, vector<8x128xf32>
      tpu.vector_store %arg5[%c0_17, %c0_18], %18 {strides = array<i32>} : memref<8x128xf32, #tpu.memory_space<vmem>>, vector<8x128xf32>,
      %cst_19 = arith.constant 0.000000e+00 : f32
      %20 = vector.broadcast %cst_19 : f32 to vector<8x128xf32>
      %c0_20 = arith.constant 0 : index
      %c0_21 = arith.constant 0 : index
      %21 = vector.load %arg6[%c0_20, %c0_21] : memref<8x128xf32, #tpu.memory_space<vmem>>, vector<8x128xf32>
      tpu.vector_store %arg6[%c0_20, %c0_21], %20 {strides = array<i32>} : memref<8x128xf32, #tpu.memory_space<vmem>>, vector<8x128xf32>,
    } else {
    }
    %c0 = arith.constant 0 : index
    %c0_1 = arith.constant 0 : index
    %3 = vector.load %arg2[%c0, %c0_1] : memref<32x640xbf16, #tpu.memory_space<vmem>>, vector<32x640xbf16>
    %c0_2 = arith.constant 0 : index
    %c0_3 = arith.constant 0 : index
    %4 = vector.load %arg3[%c0_2, %c0_3] : memref<640x128xbf16, #tpu.memory_space<vmem>>, vector<640x128xbf16>
    %cst = arith.constant dense<0.000000e+00> : vector<32x128xf32>
    %5 = tpu.matmul %3, %4, %cst {dimension_numbers = #tpu.dot_dimension_numbers<[1], [0], [0], [1], [0, 0, 1, 1], [], []>} : vector<32x640xbf16>, vector<640x128xbf16>, vector<32x128xf32> -> vector<32x128xf32>
    %6 = vector.shape_cast %5 : vector<32x128xf32> to vector<4x8x128xf32>
    %c0_4 = arith.constant 0 : index
    %c0_5 = arith.constant 0 : index
    %7 = vector.load %arg5[%c0_4, %c0_5] : memref<8x128xf32, #tpu.memory_space<vmem>>, vector<8x128xf32>
    %cst_6 = arith.constant dense<0.000000e+00> : vector<8x128xf32>
    %8 = vector.multi_reduction <add>, %6, %cst_6 [0] : vector<4x8x128xf32> to vector<8x128xf32>
    %9 = arith.addf %7, %8 : vector<8x128xf32>
    %c0_7 = arith.constant 0 : index
    %c0_8 = arith.constant 0 : index
    %10 = vector.load %arg5[%c0_7, %c0_8] : memref<8x128xf32, #tpu.memory_space<vmem>>, vector<8x128xf32>
    tpu.vector_store %arg5[%c0_7, %c0_8], %9 {strides = array<i32>} : memref<8x128xf32, #tpu.memory_space<vmem>>, vector<8x128xf32>,
    %c0_9 = arith.constant 0 : index
    %c0_10 = arith.constant 0 : index
    %11 = vector.load %arg6[%c0_9, %c0_10] : memref<8x128xf32, #tpu.memory_space<vmem>>, vector<8x128xf32>
    %12 = arith.mulf %6, %6 : vector<4x8x128xf32>
    %cst_11 = arith.constant dense<0.000000e+00> : vector<8x128xf32>
    %13 = vector.multi_reduction <add>, %12, %cst_11 [0] : vector<4x8x128xf32> to vector<8x128xf32>
    %14 = arith.addf %11, %13 : vector<8x128xf32>
    %c0_12 = arith.constant 0 : index
    %c0_13 = arith.constant 0 : index
    %15 = vector.load %arg6[%c0_12, %c0_13] : memref<8x128xf32, #tpu.memory_space<vmem>>, vector<8x128xf32>
    tpu.vector_store %arg6[%c0_12, %c0_13], %14 {strides = array<i32>} : memref<8x128xf32, #tpu.memory_space<vmem>>, vector<8x128xf32>,
    %16 = arith.truncf %5 : vector<32x128xf32> to vector<32x128xbf16>
    %c0_14 = arith.constant 0 : index
    %c0_15 = arith.constant 0 : index
    %17 = vector.load %arg4[%c0_14, %c0_15] : memref<32x128xbf16, #tpu.memory_space<vmem>>, vector<32x128xbf16>
    tpu.vector_store %arg4[%c0_14, %c0_15], %16 {strides = array<i32>} : memref<32x128xbf16, #tpu.memory_space<vmem>>, vector<32x128xbf16>,
    return
  }
  func.func @transform_0(%arg0: i32, %arg1: i32) -> (i32, i32) {
    %c0_i32 = arith.constant 0 : i32
    %c0_i32_0 = arith.constant 0 : i32
    return %arg1, %c0_i32 : i32, i32
  }
  func.func @transform_1(%arg0: i32, %arg1: i32) -> (i32, i32) {
    %c0_i32 = arith.constant 0 : i32
    %c0_i32_0 = arith.constant 0 : i32
    return %c0_i32, %arg0 : i32, i32
  }
  func.func @transform_2(%arg0: i32, %arg1: i32) -> (i32, i32) {
    %c0_i32 = arith.constant 0 : i32
    return %arg1, %arg0 : i32, i32
  }
  func.func @transform_3(%arg0: i32, %arg1: i32) -> (i32, i32) {
    %c0_i32 = arith.constant 0 : i32
    %c0_i32_0 = arith.constant 0 : i32
    return %c0_i32, %arg0 : i32, i32
  }
  func.func @transform_4(%arg0: i32, %arg1: i32) -> (i32, i32) {
    %c0_i32 = arith.constant 0 : i32
    %c0_i32_0 = arith.constant 0 : i32
    return %c0_i32, %arg0 : i32, i32
  }
}

module attributes {stable_mosaic.version = 11 : i64} {
  func.func @_bn_relu_kernel(%arg0: i32, %arg1: memref<32x128xbf16, #tpu.memory_space<vmem>>, %arg2: memref<1x128xf32, #tpu.memory_space<vmem>>, %arg3: memref<1x128xf32, #tpu.memory_space<vmem>>, %arg4: memref<32x128xbf16, #tpu.memory_space<vmem>>) attributes {dimension_semantics = [#tpu.dimension_semantics<parallel>], iteration_bounds = array<i64: 1>, scalar_prefetch = 0 : i64, scratch_operands = 0 : i64, tpu.core_type = #tpu.core_type<tc>, window_params = [{transform_indices = @transform_0, window_bounds = array<i64: 32, 128>}, {pipeline_mode = #tpu.pipeline_mode<synchronous>, transform_indices = @transform_1, window_bounds = array<i64: 1, 128>}, {pipeline_mode = #tpu.pipeline_mode<synchronous>, transform_indices = @transform_2, window_bounds = array<i64: 1, 128>}, {transform_indices = @transform_3, window_bounds = array<i64: 32, 128>}]} {
    %c0 = arith.constant 0 : index
    %c0_0 = arith.constant 0 : index
    %0 = vector.load %arg1[%c0, %c0_0] : memref<32x128xbf16, #tpu.memory_space<vmem>>, vector<32x128xbf16>
    %1 = arith.extf %0 : vector<32x128xbf16> to vector<32x128xf32>
    %c0_1 = arith.constant 0 : index
    %c0_2 = arith.constant 0 : index
    %2 = vector.load %arg2[%c0_1, %c0_2] : memref<1x128xf32, #tpu.memory_space<vmem>>, vector<1x128xf32>
    %3 = vector.broadcast %2 : vector<1x128xf32> to vector<32x128xf32>
    %4 = arith.mulf %1, %3 : vector<32x128xf32>
    %c0_3 = arith.constant 0 : index
    %c0_4 = arith.constant 0 : index
    %5 = vector.load %arg3[%c0_3, %c0_4] : memref<1x128xf32, #tpu.memory_space<vmem>>, vector<1x128xf32>
    %6 = vector.broadcast %5 : vector<1x128xf32> to vector<32x128xf32>
    %7 = arith.addf %4, %6 : vector<32x128xf32>
    %cst = arith.constant 0.000000e+00 : f32
    %8 = vector.broadcast %cst : f32 to vector<32x128xf32>
    %9 = arith.maximumf %7, %8 : vector<32x128xf32>
    %10 = arith.truncf %9 : vector<32x128xf32> to vector<32x128xbf16>
    %c0_5 = arith.constant 0 : index
    %c0_6 = arith.constant 0 : index
    %11 = vector.load %arg4[%c0_5, %c0_6] : memref<32x128xbf16, #tpu.memory_space<vmem>>, vector<32x128xbf16>
    tpu.vector_store %arg4[%c0_5, %c0_6], %10 {strides = array<i32>} : memref<32x128xbf16, #tpu.memory_space<vmem>>, vector<32x128xbf16>,
    return
  }
  func.func @transform_0(%arg0: i32) -> (i32, i32) {
    %c0_i32 = arith.constant 0 : i32
    %c0_i32_0 = arith.constant 0 : i32
    return %arg0, %c0_i32 : i32, i32
  }
  func.func @transform_1(%arg0: i32) -> (i32, i32) {
    %c0_i32 = arith.constant 0 : i32
    %c0_i32_0 = arith.constant 0 : i32
    %c0_i32_1 = arith.constant 0 : i32
    return %c0_i32, %c0_i32_0 : i32, i32
  }
  func.func @transform_2(%arg0: i32) -> (i32, i32) {
    %c0_i32 = arith.constant 0 : i32
    %c0_i32_0 = arith.constant 0 : i32
    %c0_i32_1 = arith.constant 0 : i32
    return %c0_i32, %c0_i32_0 : i32, i32
  }
  func.func @transform_3(%arg0: i32) -> (i32, i32) {
    %c0_i32 = arith.constant 0 : i32
    %c0_i32_0 = arith.constant 0 : i32
    return %arg0, %c0_i32 : i32, i32
  }
}

module attributes {stable_mosaic.version = 11 : i64} {
  func.func @_mm_stats_kernel(%arg0: i32, %arg1: i32, %arg2: memref<128x384xbf16, #tpu.memory_space<vmem>>, %arg3: memref<384x128xbf16, #tpu.memory_space<vmem>>, %arg4: memref<128x128xbf16, #tpu.memory_space<vmem>>, %arg5: memref<8x128xf32, #tpu.memory_space<vmem>>, %arg6: memref<8x128xf32, #tpu.memory_space<vmem>>) attributes {dimension_semantics = [#tpu.dimension_semantics<parallel>, #tpu.dimension_semantics<arbitrary>], iteration_bounds = array<i64: 1, 1>, scalar_prefetch = 0 : i64, scratch_operands = 0 : i64, tpu.core_type = #tpu.core_type<tc>, window_params = [{transform_indices = @transform_0, window_bounds = array<i64: 128, 384>}, {transform_indices = @transform_1, window_bounds = array<i64: 384, 128>}, {transform_indices = @transform_2, window_bounds = array<i64: 128, 128>}, {transform_indices = @transform_3, window_bounds = array<i64: 8, 128>}, {transform_indices = @transform_4, window_bounds = array<i64: 8, 128>}]} {
    %c0_i32 = arith.constant 0 : i32
    %0 = arith.cmpi eq, %arg1, %c0_i32 : i32
    %1 = arith.extui %0 : i1 to i32
    %c0_i32_0 = arith.constant 0 : i32
    %2 = arith.cmpi ne, %1, %c0_i32_0 : i32
    scf.if %2 {
      %cst_16 = arith.constant 0.000000e+00 : f32
      %18 = vector.broadcast %cst_16 : f32 to vector<8x128xf32>
      %c0_17 = arith.constant 0 : index
      %c0_18 = arith.constant 0 : index
      %19 = vector.load %arg5[%c0_17, %c0_18] : memref<8x128xf32, #tpu.memory_space<vmem>>, vector<8x128xf32>
      tpu.vector_store %arg5[%c0_17, %c0_18], %18 {strides = array<i32>} : memref<8x128xf32, #tpu.memory_space<vmem>>, vector<8x128xf32>,
      %cst_19 = arith.constant 0.000000e+00 : f32
      %20 = vector.broadcast %cst_19 : f32 to vector<8x128xf32>
      %c0_20 = arith.constant 0 : index
      %c0_21 = arith.constant 0 : index
      %21 = vector.load %arg6[%c0_20, %c0_21] : memref<8x128xf32, #tpu.memory_space<vmem>>, vector<8x128xf32>
      tpu.vector_store %arg6[%c0_20, %c0_21], %20 {strides = array<i32>} : memref<8x128xf32, #tpu.memory_space<vmem>>, vector<8x128xf32>,
    } else {
    }
    %c0 = arith.constant 0 : index
    %c0_1 = arith.constant 0 : index
    %3 = vector.load %arg2[%c0, %c0_1] : memref<128x384xbf16, #tpu.memory_space<vmem>>, vector<128x384xbf16>
    %c0_2 = arith.constant 0 : index
    %c0_3 = arith.constant 0 : index
    %4 = vector.load %arg3[%c0_2, %c0_3] : memref<384x128xbf16, #tpu.memory_space<vmem>>, vector<384x128xbf16>
    %cst = arith.constant dense<0.000000e+00> : vector<128x128xf32>
    %5 = tpu.matmul %3, %4, %cst {dimension_numbers = #tpu.dot_dimension_numbers<[1], [0], [0], [1], [0, 0, 1, 1], [], []>} : vector<128x384xbf16>, vector<384x128xbf16>, vector<128x128xf32> -> vector<128x128xf32>
    %6 = vector.shape_cast %5 : vector<128x128xf32> to vector<16x8x128xf32>
    %c0_4 = arith.constant 0 : index
    %c0_5 = arith.constant 0 : index
    %7 = vector.load %arg5[%c0_4, %c0_5] : memref<8x128xf32, #tpu.memory_space<vmem>>, vector<8x128xf32>
    %cst_6 = arith.constant dense<0.000000e+00> : vector<8x128xf32>
    %8 = vector.multi_reduction <add>, %6, %cst_6 [0] : vector<16x8x128xf32> to vector<8x128xf32>
    %9 = arith.addf %7, %8 : vector<8x128xf32>
    %c0_7 = arith.constant 0 : index
    %c0_8 = arith.constant 0 : index
    %10 = vector.load %arg5[%c0_7, %c0_8] : memref<8x128xf32, #tpu.memory_space<vmem>>, vector<8x128xf32>
    tpu.vector_store %arg5[%c0_7, %c0_8], %9 {strides = array<i32>} : memref<8x128xf32, #tpu.memory_space<vmem>>, vector<8x128xf32>,
    %c0_9 = arith.constant 0 : index
    %c0_10 = arith.constant 0 : index
    %11 = vector.load %arg6[%c0_9, %c0_10] : memref<8x128xf32, #tpu.memory_space<vmem>>, vector<8x128xf32>
    %12 = arith.mulf %6, %6 : vector<16x8x128xf32>
    %cst_11 = arith.constant dense<0.000000e+00> : vector<8x128xf32>
    %13 = vector.multi_reduction <add>, %12, %cst_11 [0] : vector<16x8x128xf32> to vector<8x128xf32>
    %14 = arith.addf %11, %13 : vector<8x128xf32>
    %c0_12 = arith.constant 0 : index
    %c0_13 = arith.constant 0 : index
    %15 = vector.load %arg6[%c0_12, %c0_13] : memref<8x128xf32, #tpu.memory_space<vmem>>, vector<8x128xf32>
    tpu.vector_store %arg6[%c0_12, %c0_13], %14 {strides = array<i32>} : memref<8x128xf32, #tpu.memory_space<vmem>>, vector<8x128xf32>,
    %16 = arith.truncf %5 : vector<128x128xf32> to vector<128x128xbf16>
    %c0_14 = arith.constant 0 : index
    %c0_15 = arith.constant 0 : index
    %17 = vector.load %arg4[%c0_14, %c0_15] : memref<128x128xbf16, #tpu.memory_space<vmem>>, vector<128x128xbf16>
    tpu.vector_store %arg4[%c0_14, %c0_15], %16 {strides = array<i32>} : memref<128x128xbf16, #tpu.memory_space<vmem>>, vector<128x128xbf16>,
    return
  }
  func.func @transform_0(%arg0: i32, %arg1: i32) -> (i32, i32) {
    %c0_i32 = arith.constant 0 : i32
    %c0_i32_0 = arith.constant 0 : i32
    return %arg1, %c0_i32 : i32, i32
  }
  func.func @transform_1(%arg0: i32, %arg1: i32) -> (i32, i32) {
    %c0_i32 = arith.constant 0 : i32
    %c0_i32_0 = arith.constant 0 : i32
    return %c0_i32, %arg0 : i32, i32
  }
  func.func @transform_2(%arg0: i32, %arg1: i32) -> (i32, i32) {
    %c0_i32 = arith.constant 0 : i32
    return %arg1, %arg0 : i32, i32
  }
  func.func @transform_3(%arg0: i32, %arg1: i32) -> (i32, i32) {
    %c0_i32 = arith.constant 0 : i32
    %c0_i32_0 = arith.constant 0 : i32
    return %c0_i32, %arg0 : i32, i32
  }
  func.func @transform_4(%arg0: i32, %arg1: i32) -> (i32, i32) {
    %c0_i32 = arith.constant 0 : i32
    %c0_i32_0 = arith.constant 0 : i32
    return %c0_i32, %arg0 : i32, i32
  }
}

module attributes {stable_mosaic.version = 11 : i64} {
  func.func @_bn_relu_kernel(%arg0: i32, %arg1: memref<128x128xbf16, #tpu.memory_space<vmem>>, %arg2: memref<1x128xf32, #tpu.memory_space<vmem>>, %arg3: memref<1x128xf32, #tpu.memory_space<vmem>>, %arg4: memref<128x128xbf16, #tpu.memory_space<vmem>>) attributes {dimension_semantics = [#tpu.dimension_semantics<parallel>], iteration_bounds = array<i64: 1>, scalar_prefetch = 0 : i64, scratch_operands = 0 : i64, tpu.core_type = #tpu.core_type<tc>, window_params = [{transform_indices = @transform_0, window_bounds = array<i64: 128, 128>}, {pipeline_mode = #tpu.pipeline_mode<synchronous>, transform_indices = @transform_1, window_bounds = array<i64: 1, 128>}, {pipeline_mode = #tpu.pipeline_mode<synchronous>, transform_indices = @transform_2, window_bounds = array<i64: 1, 128>}, {transform_indices = @transform_3, window_bounds = array<i64: 128, 128>}]} {
    %c0 = arith.constant 0 : index
    %c0_0 = arith.constant 0 : index
    %0 = vector.load %arg1[%c0, %c0_0] : memref<128x128xbf16, #tpu.memory_space<vmem>>, vector<128x128xbf16>
    %1 = arith.extf %0 : vector<128x128xbf16> to vector<128x128xf32>
    %c0_1 = arith.constant 0 : index
    %c0_2 = arith.constant 0 : index
    %2 = vector.load %arg2[%c0_1, %c0_2] : memref<1x128xf32, #tpu.memory_space<vmem>>, vector<1x128xf32>
    %3 = vector.broadcast %2 : vector<1x128xf32> to vector<128x128xf32>
    %4 = arith.mulf %1, %3 : vector<128x128xf32>
    %c0_3 = arith.constant 0 : index
    %c0_4 = arith.constant 0 : index
    %5 = vector.load %arg3[%c0_3, %c0_4] : memref<1x128xf32, #tpu.memory_space<vmem>>, vector<1x128xf32>
    %6 = vector.broadcast %5 : vector<1x128xf32> to vector<128x128xf32>
    %7 = arith.addf %4, %6 : vector<128x128xf32>
    %cst = arith.constant 0.000000e+00 : f32
    %8 = vector.broadcast %cst : f32 to vector<128x128xf32>
    %9 = arith.maximumf %7, %8 : vector<128x128xf32>
    %10 = arith.truncf %9 : vector<128x128xf32> to vector<128x128xbf16>
    %c0_5 = arith.constant 0 : index
    %c0_6 = arith.constant 0 : index
    %11 = vector.load %arg4[%c0_5, %c0_6] : memref<128x128xbf16, #tpu.memory_space<vmem>>, vector<128x128xbf16>
    tpu.vector_store %arg4[%c0_5, %c0_6], %10 {strides = array<i32>} : memref<128x128xbf16, #tpu.memory_space<vmem>>, vector<128x128xbf16>,
    return
  }
  func.func @transform_0(%arg0: i32) -> (i32, i32) {
    %c0_i32 = arith.constant 0 : i32
    %c0_i32_0 = arith.constant 0 : i32
    return %arg0, %c0_i32 : i32, i32
  }
  func.func @transform_1(%arg0: i32) -> (i32, i32) {
    %c0_i32 = arith.constant 0 : i32
    %c0_i32_0 = arith.constant 0 : i32
    %c0_i32_1 = arith.constant 0 : i32
    return %c0_i32, %c0_i32_0 : i32, i32
  }
  func.func @transform_2(%arg0: i32) -> (i32, i32) {
    %c0_i32 = arith.constant 0 : i32
    %c0_i32_0 = arith.constant 0 : i32
    %c0_i32_1 = arith.constant 0 : i32
    return %c0_i32, %c0_i32_0 : i32, i32
  }
  func.func @transform_3(%arg0: i32) -> (i32, i32) {
    %c0_i32 = arith.constant 0 : i32
    %c0_i32_0 = arith.constant 0 : i32
    return %arg0, %c0_i32 : i32, i32
  }
}

module attributes {stable_mosaic.version = 11 : i64} {
  func.func @_mm_tanh_kernel(%arg0: i32, %arg1: memref<512x256xbf16, #tpu.memory_space<vmem>>, %arg2: memref<256x128xbf16, #tpu.memory_space<vmem>>, %arg3: memref<512x128xbf16, #tpu.memory_space<vmem>>) attributes {dimension_semantics = [#tpu.dimension_semantics<parallel>], iteration_bounds = array<i64: 1>, scalar_prefetch = 0 : i64, scratch_operands = 0 : i64, tpu.core_type = #tpu.core_type<tc>, window_params = [{transform_indices = @transform_0, window_bounds = array<i64: 512, 256>}, {pipeline_mode = #tpu.pipeline_mode<synchronous>, transform_indices = @transform_1, window_bounds = array<i64: 256, 128>}, {transform_indices = @transform_2, window_bounds = array<i64: 512, 128>}]} {
    %c0 = arith.constant 0 : index
    %c0_0 = arith.constant 0 : index
    %0 = vector.load %arg1[%c0, %c0_0] : memref<512x256xbf16, #tpu.memory_space<vmem>>, vector<512x256xbf16>
    %c0_1 = arith.constant 0 : index
    %c0_2 = arith.constant 0 : index
    %1 = vector.load %arg2[%c0_1, %c0_2] : memref<256x128xbf16, #tpu.memory_space<vmem>>, vector<256x128xbf16>
    %cst = arith.constant dense<0.000000e+00> : vector<512x128xf32>
    %2 = tpu.matmul %0, %1, %cst {dimension_numbers = #tpu.dot_dimension_numbers<[1], [0], [0], [1], [0, 0, 1, 1], [], []>} : vector<512x256xbf16>, vector<256x128xbf16>, vector<512x128xf32> -> vector<512x128xf32>
    %3 = math.tanh %2 : vector<512x128xf32>
    %4 = arith.truncf %3 : vector<512x128xf32> to vector<512x128xbf16>
    %c0_3 = arith.constant 0 : index
    %c0_4 = arith.constant 0 : index
    %5 = vector.load %arg3[%c0_3, %c0_4] : memref<512x128xbf16, #tpu.memory_space<vmem>>, vector<512x128xbf16>
    tpu.vector_store %arg3[%c0_3, %c0_4], %4 {strides = array<i32>} : memref<512x128xbf16, #tpu.memory_space<vmem>>, vector<512x128xbf16>,
    return
  }
  func.func @transform_0(%arg0: i32) -> (i32, i32) {
    %c0_i32 = arith.constant 0 : i32
    %c0_i32_0 = arith.constant 0 : i32
    return %arg0, %c0_i32 : i32, i32
  }
  func.func @transform_1(%arg0: i32) -> (i32, i32) {
    %c0_i32 = arith.constant 0 : i32
    %c0_i32_0 = arith.constant 0 : i32
    %c0_i32_1 = arith.constant 0 : i32
    return %c0_i32, %c0_i32_0 : i32, i32
  }
  func.func @transform_2(%arg0: i32) -> (i32, i32) {
    %c0_i32 = arith.constant 0 : i32
    %c0_i32_0 = arith.constant 0 : i32
    return %arg0, %c0_i32 : i32, i32
  }
}

</mosaic_0001>

<llo_original>
// kernel: tile.38
$region0: #{tile.38}
  #allocation0 [shape = 's32[1]{0}', space=sflag, size = 0x4, scoped, tag = 'scoped memory for tile.38']
  %s0 = inlined_call_operand.vmem [shape: f32[64], index: 0, kind: input, shape index: {}]
  %s1 = inlined_call_operand.vmem [shape: f32[16,64], index: 1, kind: output, shape index: {}]
  // Predicated region
  $region2: #{tile.38} parent=0 // pred_check
    _
  $region3: #{tile.38} parent=0 // pred_check_branch
    %3 = sbr.rel (0) target = $region5
  $region4: #{tile.38} parent=0 // pred_region
    _
  $region5: #{tile.38} parent=0 // pred_fallthru
    _
  %v4 = vld [vmem:[%s0] ss:$0 sm:$0xff]
  %5 = vst [vmem:[%s1] sm:$0xff] %v4
  %s6 = scalar_lea.vmem %s1, 8
  %7 = vst [vmem:[%s6] sm:$0xff] %v4

// kernel: _lambda_.8
$region0: #{_lambda_.8}
  #allocation0 [shape = 'u32[]', space=smem, size = 0x4, offset = 0x4, fixed_abs, tag = 'smem constant byte address 0x4 - core index']
  #allocation1 [shape = 'u32[72,128]{1,0:T(1,128)}', space=vmem, size = 0x9000, scoped, tag = 'internal scratch']
  %s0 = inlined_call_operand.vmem [shape: bf16[16,1024], index: 0, kind: input, shape index: {}]
  %s1 = inlined_call_operand.vmem [shape: f32[1,1024], index: 1, kind: input, shape index: {}]
  %s2 = inlined_call_operand.vmem [shape: f32[1,1024], index: 2, kind: input, shape index: {}]
  %s3 = inlined_call_operand.vmem [shape: bf16[16,1024], index: 3, kind: output, shape index: {}]
  %s4 = sld [smem:[#allocation0]]
  $region22: #{_lambda_.8} parent=0
    _
  %s6 = ssub.s32 1, %s4
  %s7 = scalar_select 0, %s6, %s4
  // Predicated region
  $region2: #{_lambda_.8} parent=0 // pred_check
    _
  $region3: #{_lambda_.8} parent=0 // pred_check_branch
    %9 = sbr.rel (0) target = $region5
  $region4: #{_lambda_.8} parent=0 // pred_region
    _
  $region5: #{_lambda_.8} parent=0 // pred_fallthru
    _
  // Predicated region
  $region6: #{_lambda_.8} parent=0 // pred_check
    _
  $region7: #{_lambda_.8} parent=0 // pred_check_branch
    %11 = sbr.rel (0) target = $region9
  $region8: #{_lambda_.8} parent=0 // pred_region
    _
  $region9: #{_lambda_.8} parent=0 // pred_fallthru
    _
  // Predicated region
  $region10: #{_lambda_.8} parent=0 // pred_check
    _
  $region11: #{_lambda_.8} parent=0 // pred_check_branch
    %13 = sbr.rel (0) target = $region13
  $region12: #{_lambda_.8} parent=0 // pred_region
    _
  $region13: #{_lambda_.8} parent=0 // pred_fallthru
    _
  %v14 = vld [vmem:[%s0] sm:$0xff]
  %v15 = vld [vmem:[%s0 + $0x8] sm:$0xff]
  %v16 = vld [vmem:[%s0 + $0x10] sm:$0xff]
  %v17 = vld [vmem:[%s0 + $0x18] sm:$0xff]
  %v18 = vld [vmem:[%s0 + $0x20] sm:$0xff]
  %v19 = vld [vmem:[%s0 + $0x28] sm:$0xff]
  %v20 = vld [vmem:[%s0 + $0x30] sm:$0xff]
  %v21 = vld [vmem:[%s0 + $0x38] sm:$0xff]
  %v22 = vunpack.c.l.bf16 %v14
  %v23 = vunpack.c.h.bf16 %v14
  %v24 = vunpack.c.l.bf16 %v15
  %v25 = vunpack.c.h.bf16 %v15
  %v26 = vunpack.c.l.bf16 %v16
  %v27 = vunpack.c.h.bf16 %v16
  %v28 = vunpack.c.l.bf16 %v17
  %v29 = vunpack.c.h.bf16 %v17
  %v30 = vunpack.c.l.bf16 %v18
  %v31 = vunpack.c.h.bf16 %v18
  %v32 = vunpack.c.l.bf16 %v19
  %v33 = vunpack.c.h.bf16 %v19
  %v34 = vunpack.c.l.bf16 %v20
  %v35 = vunpack.c.h.bf16 %v20
  %v36 = vunpack.c.l.bf16 %v21
  %v37 = vunpack.c.h.bf16 %v21
  %v38 = vld [vmem:[%s1] sm:$0xff]
  %v40 = vperm.slane %v38, 0
  %v41 = vperm.slane %v38, 1
  %v42 = vperm.slane %v38, 2
  %v43 = vperm.slane %v38, 3
  %v44 = vperm.slane %v38, 4
  %v45 = vperm.slane %v38, 5
  %v46 = vperm.slane %v38, 6
  %v47 = vperm.slane %v38, 7
  %v56 = vmul.f32 %v22, %v40
  %v57 = vmul.f32 %v23, %v41
  %v58 = vmul.f32 %v24, %v42
  %v59 = vmul.f32 %v25, %v43
  %v60 = vmul.f32 %v26, %v44
  %v61 = vmul.f32 %v27, %v45
  %v62 = vmul.f32 %v28, %v46
  %v63 = vmul.f32 %v29, %v47
  %v64 = vmul.f32 %v30, %v40
  %v65 = vmul.f32 %v31, %v41
  %v66 = vmul.f32 %v32, %v42
  %v67 = vmul.f32 %v33, %v43
  %v68 = vmul.f32 %v34, %v44
  %v69 = vmul.f32 %v35, %v45
  %v70 = vmul.f32 %v36, %v46
  %v71 = vmul.f32 %v37, %v47
  %v72 = vld [vmem:[%s2] sm:$0xff]
  %v74 = vperm.slane %v72, 0
  %v75 = vperm.slane %v72, 1
  %v76 = vperm.slane %v72, 2
  %v77 = vperm.slane %v72, 3
  %v78 = vperm.slane %v72, 4
  %v79 = vperm.slane %v72, 5
  %v80 = vperm.slane %v72, 6
  %v81 = vperm.slane %v72, 7
  %v90 = vadd.f32 %v56, %v74
  %v91 = vadd.f32 %v57, %v75
  %v92 = vadd.f32 %v58, %v76
  %v93 = vadd.f32 %v59, %v77
  %v94 = vadd.f32 %v60, %v78
  %v95 = vadd.f32 %v61, %v79
  %v96 = vadd.f32 %v62, %v80
  %v97 = vadd.f32 %v63, %v81
  %v98 = vadd.f32 %v64, %v74
  %v99 = vadd.f32 %v65, %v75
  %v100 = vadd.f32 %v66, %v76
  %v101 = vadd.f32 %v67, %v77
  %v102 = vadd.f32 %v68, %v78
  %v103 = vadd.f32 %v69, %v79
  %v104 = vadd.f32 %v70, %v80
  %v105 = vadd.f32 %v71, %v81
  %v106 = vmax.f32 %v90, 0.0
  %v107 = vmax.f32 %v91, 0.0
  %v108 = vmax.f32 %v92, 0.0
  %v109 = vmax.f32 %v93, 0.0
  %v110 = vmax.f32 %v94, 0.0
  %v111 = vmax.f32 %v95, 0.0
  %v112 = vmax.f32 %v96, 0.0
  %v113 = vmax.f32 %v97, 0.0
  %v114 = vmax.f32 %v98, 0.0
  %v115 = vmax.f32 %v99, 0.0
  %v116 = vmax.f32 %v100, 0.0
  %v117 = vmax.f32 %v101, 0.0
  %v118 = vmax.f32 %v102, 0.0
  %v119 = vmax.f32 %v103, 0.0
  %v120 = vmax.f32 %v104, 0.0
  %v121 = vmax.f32 %v105, 0.0
  %v122 = vpack.c.bf16 %v107, %v106
  %v123 = vpack.c.bf16 %v109, %v108
  %v124 = vpack.c.bf16 %v111, %v110
  %v125 = vpack.c.bf16 %v113, %v112
  %v126 = vpack.c.bf16 %v115, %v114
  %v127 = vpack.c.bf16 %v117, %v116
  %v128 = vpack.c.bf16 %v119, %v118
  %v129 = vpack.c.bf16 %v121, %v120
  %130 = vst [vmem:[%s3] sm:$0xff] %v122
  %131 = vst [vmem:[%s3 + $0x8] sm:$0xff] %v123
  %132 = vst [vmem:[%s3 + $0x10] sm:$0xff] %v124
  %133 = vst [vmem:[%s3 + $0x18] sm:$0xff] %v125
  %134 = vst [vmem:[%s3 + $0x20] sm:$0xff] %v126
  %135 = vst [vmem:[%s3 + $0x28] sm:$0xff] %v127
  %136 = vst [vmem:[%s3 + $0x30] sm:$0xff] %v128
  %137 = vst [vmem:[%s3 + $0x38] sm:$0xff] %v129
  // Predicated region
  $region14: #{_lambda_.8} parent=0 // pred_check
    _
  $region15: #{_lambda_.8} parent=0 // pred_check_branch
    %139 = sbr.rel (0) target = $region17
  $region16: #{_lambda_.8} parent=0 // pred_region
    _
  $region17: #{_lambda_.8} parent=0 // pred_fallthru
    _
  // Predicated region
  $region18: #{_lambda_.8} parent=0 // pred_check
    _
  $region19: #{_lambda_.8} parent=0 // pred_check_branch
    %141 = sbr.rel (0) target = $region21
  $region20: #{_lambda_.8} parent=0 // pred_region
    _
  $region21: #{_lambda_.8} parent=0 // pred_fallthru
    _

// kernel: _lambda_.7
$region0: #{_lambda_.7}
  #allocation0 [shape = 'u32[]', space=smem, size = 0x4, offset = 0x4, fixed_abs, tag = 'smem constant byte address 0x4 - core index']
  #allocation1 [shape = 'u32[72,128]{1,0:T(1,128)}', space=vmem, size = 0x9000, scoped, tag = 'internal scratch']
  %s0 = inlined_call_operand.vmem [shape: bf16[16,128], index: 0, kind: input, shape index: {}]
  %s1 = inlined_call_operand.hbm [shape: bf16[128,1024], index: 1, kind: input, shape index: {}]
  %s2 = inlined_call_operand.vmem [shape: bf16[16,1024], index: 2, kind: output, shape index: {0}]
  %s3 = inlined_call_operand.vmem [shape: f32[8,1024], index: 3, kind: output, shape index: {1}]
  %s4 = inlined_call_operand.vmem [shape: f32[8,1024], index: 4, kind: output, shape index: {2}]
  %5 = xla_tuple %s2, %s3, %s4
  %s6 = sld [smem:[#allocation0]]
  $region42: #{_lambda_.7} parent=0
    _
  %s8 = ssub.s32 1, %s6
  %s9 = scalar_select 0, %s8, %s6
  $region1: #{_lambda_.7} parent=0
    #allocation2 [shape = 'u8[262144]{0}', space=vmem, size = 0x40000, scoped, tag = 'input window, operand 1, single buffered']
    #allocation3 [shape = 's32[1]{0}', space=sflag, size = 0x4, scoped, tag = 'scoped memory for _lambda_.7']
    %10 = vsyncpa [#allocation3], 0
    // Predicated region
    $region2: #{_lambda_.7} parent=1 // pred_check
      _
    $region3: #{_lambda_.7} parent=1 // pred_check_branch
      %12 = sbr.rel (0) target = $region5
    $region4: #{_lambda_.7} parent=1 // pred_region
      _
    $region5: #{_lambda_.7} parent=1 // pred_fallthru
      _
    // Predicated region
    $region6: #{_lambda_.7} parent=1 // pred_check
      _
    $region7: #{_lambda_.7} parent=1 // pred_check_branch
      %14 = sbr.rel (0) target = $region9
    $region8: #{_lambda_.7} parent=1 // pred_region
      %16 = vsyncadd [#allocation3], 0
      %s17 = sshll.u32 %s1, 4
      %s18 = int_to_ptr.hbm [resolvable:$true] %s17
      %s19 = sshll.u32 [#allocation2], 4
      %s20 = int_to_ptr.vmem [resolvable:$true] %s19
      %25 = dma.hbm_to_vmem [thread:$0]  %s18, 8192, %s20, [#allocation3], 512, 512, 32
    $region9: #{_lambda_.7} parent=1 // pred_fallthru
      _
    // Predicated region
    $region10: #{_lambda_.7} parent=1 // pred_check
      _
    $region11: #{_lambda_.7} parent=1 // pred_check_branch
      %27 = sbr.rel (0) target = $region13
    $region12: #{_lambda_.7} parent=1 // pred_region
      %29 = dma.done [#allocation3], 8192
    $region13: #{_lambda_.7} parent=1 // pred_fallthru
      _
    %p30 = scmp.eq.s32.totalorder 0, 0
    // Predicated region
    $region14: #{_lambda_.7} parent=1 // pred_check
      %p31 = pneg %p30
    $region15: #{_lambda_.7} parent=1 // pred_check_branch
      %33 = sbr.rel (%p31) target = $region17
    $region16: #{_lambda_.7} parent=1 // pred_region
      %34 = vst [vmem:[%s3] sm:$0xff] 0.0
      %35 = vst [vmem:[%s3 + $0x8] sm:$0xff] 0.0
      %36 = vst [vmem:[%s3 + $0x10] sm:$0xff] 0.0
      %37 = vst [vmem:[%s3 + $0x18] sm:$0xff] 0.0
      %38 = vst [vmem:[%s3 + $0x20] sm:$0xff] 0.0
      %39 = vst [vmem:[%s3 + $0x28] sm:$0xff] 0.0
      %40 = vst [vmem:[%s3 + $0x30] sm:$0xff] 0.0
      %41 = vst [vmem:[%s3 + $0x38] sm:$0xff] 0.0
      %42 = vst [vmem:[%s4] sm:$0xff] 0.0
      %43 = vst [vmem:[%s4 + $0x8] sm:$0xff] 0.0
      %44 = vst [vmem:[%s4 + $0x10] sm:$0xff] 0.0
      %45 = vst [vmem:[%s4 + $0x18] sm:$0xff] 0.0
      %46 = vst [vmem:[%s4 + $0x20] sm:$0xff] 0.0
      %47 = vst [vmem:[%s4 + $0x28] sm:$0xff] 0.0
      %48 = vst [vmem:[%s4 + $0x30] sm:$0xff] 0.0
      %49 = vst [vmem:[%s4 + $0x38] sm:$0xff] 0.0
    $region17: #{_lambda_.7} parent=1 // pred_fallthru
      _
    %v50 = vld [vmem:[%s0] sm:$0xf]
    %v51 = vld [vmem:[%s0 + $0x4] sm:$0xf]
    %v52 = vld [vmem:[#allocation2] sm:$0xff]
    %v53 = vld [vmem:[#allocation2 + $0x8] sm:$0xff]
    %v54 = vld [vmem:[#allocation2 + $0x10] sm:$0xff]
    %v55 = vld [vmem:[#allocation2 + $0x18] sm:$0xff]
    %v56 = vld [vmem:[#allocation2 + $0x20] sm:$0xff]
    %v57 = vld [vmem:[#allocation2 + $0x28] sm:$0xff]
    %v58 = vld [vmem:[#allocation2 + $0x30] sm:$0xff]
    %v59 = vld [vmem:[#allocation2 + $0x38] sm:$0xff]
    %v60 = vld [vmem:[#allocation2 + $0x40] sm:$0xff]
    %v61 = vld [vmem:[#allocation2 + $0x48] sm:$0xff]
    %v62 = vld [vmem:[#allocation2 + $0x50] sm:$0xff]
    %v63 = vld [vmem:[#allocation2 + $0x58] sm:$0xff]
    %v64 = vld [vmem:[#allocation2 + $0x60] sm:$0xff]
    %v65 = vld [vmem:[#allocation2 + $0x68] sm:$0xff]
    %v66 = vld [vmem:[#allocation2 + $0x70] sm:$0xff]
    %v67 = vld [vmem:[#allocation2 + $0x78] sm:$0xff]
    %v68 = vld [vmem:[#allocation2 + $0x80] sm:$0xff]
    %v69 = vld [vmem:[#allocation2 + $0x88] sm:$0xff]
    %v70 = vld [vmem:[#allocation2 + $0x90] sm:$0xff]
    %v71 = vld [vmem:[#allocation2 + $0x98] sm:$0xff]
    %v72 = vld [vmem:[#allocation2 + $0xa0] sm:$0xff]
    %v73 = vld [vmem:[#allocation2 + $0xa8] sm:$0xff]
    %v74 = vld [vmem:[#allocation2 + $0xb0] sm:$0xff]
    %v75 = vld [vmem:[#allocation2 + $0xb8] sm:$0xff]
    %v76 = vld [vmem:[#allocation2 + $0xc0] sm:$0xff]
    %v77 = vld [vmem:[#allocation2 + $0xc8] sm:$0xff]
    %v78 = vld [vmem:[#allocation2 + $0xd0] sm:$0xff]
    %v79 = vld [vmem:[#allocation2 + $0xd8] sm:$0xff]
    %v80 = vld [vmem:[#allocation2 + $0xe0] sm:$0xff]
    %v81 = vld [vmem:[#allocation2 + $0xe8] sm:$0xff]
    %v82 = vld [vmem:[#allocation2 + $0xf0] sm:$0xff]
    %v83 = vld [vmem:[#allocation2 + $0xf8] sm:$0xff]
    %v84 = vld [vmem:[#allocation2 + $0x100] sm:$0xff]
    %v85 = vld [vmem:[#allocation2 + $0x108] sm:$0xff]
    %v86 = vld [vmem:[#allocation2 + $0x110] sm:$0xff]
    %v87 = vld [vmem:[#allocation2 + $0x118] sm:$0xff]
    %v88 = vld [vmem:[#allocation2 + $0x120] sm:$0xff]
    %v89 = vld [vmem:[#allocation2 + $0x128] sm:$0xff]
    %v90 = vld [vmem:[#allocation2 + $0x130] sm:$0xff]
    %v91 = vld [vmem:[#allocation2 + $0x138] sm:$0xff]
    %v92 = vld [vmem:[#allocation2 + $0x140] sm:$0xff]
    %v93 = vld [vmem:[#allocation2 + $0x148] sm:$0xff]
    %v94 = vld [vmem:[#allocation2 + $0x150] sm:$0xff]
    %v95 = vld [vmem:[#allocation2 + $0x158] sm:$0xff]
    %v96 = vld [vmem:[#allocation2 + $0x160] sm:$0xff]
    %v97 = vld [vmem:[#allocation2 + $0x168] sm:$0xff]
    %v98 = vld [vmem:[#allocation2 + $0x170] sm:$0xff]
    %v99 = vld [vmem:[#allocation2 + $0x178] sm:$0xff]
    %v100 = vld [vmem:[#allocation2 + $0x180] sm:$0xff]
    %v101 = vld [vmem:[#allocation2 + $0x188] sm:$0xff]
    %v102 = vld [vmem:[#allocation2 + $0x190] sm:$0xff]
    %v103 = vld [vmem:[#allocation2 + $0x198] sm:$0xff]
    %v104 = vld [vmem:[#allocation2 + $0x1a0] sm:$0xff]
    %v105 = vld [vmem:[#allocation2 + $0x1a8] sm:$0xff]
    %v106 = vld [vmem:[#allocation2 + $0x1b0] sm:$0xff]
    %v107 = vld [vmem:[#allocation2 + $0x1b8] sm:$0xff]
    %v108 = vld [vmem:[#allocation2 + $0x1c0] sm:$0xff]
    %v109 = vld [vmem:[#allocation2 + $0x1c8] sm:$0xff]
    %v110 = vld [vmem:[#allocation2 + $0x1d0] sm:$0xff]
    %v111 = vld [vmem:[#allocation2 + $0x1d8] sm:$0xff]
    %v112 = vld [vmem:[#allocation2 + $0x1e0] sm:$0xff]
    %v113 = vld [vmem:[#allocation2 + $0x1e8] sm:$0xff]
    %v114 = vld [vmem:[#allocation2 + $0x1f0] sm:$0xff]
    %v115 = vld [vmem:[#allocation2 + $0x1f8] sm:$0xff]
    %v118 = vunpack.c.l.b16 %v50
    %v119 = vunpack.c.l.b16 %v51
    %v120 = vpack.c.b16 %v119, %v118
    %v186 = vunpack.c.l.b16 %v52
    %v187 = vunpack.c.h.b16 %v52
    %v188 = vunpack.c.l.b16 %v53
    %v189 = vunpack.c.h.b16 %v53
    %v190 = vunpack.c.l.b16 %v54
    %v191 = vunpack.c.h.b16 %v54
    %v192 = vunpack.c.l.b16 %v55
    %v193 = vunpack.c.h.b16 %v55
    %v194 = vunpack.c.l.b16 %v56
    %v195 = vunpack.c.h.b16 %v56
    %v196 = vunpack.c.l.b16 %v57
    %v197 = vunpack.c.h.b16 %v57
    %v198 = vunpack.c.l.b16 %v58
    %v199 = vunpack.c.h.b16 %v58
    %v200 = vunpack.c.l.b16 %v59
    %v201 = vunpack.c.h.b16 %v59
    %v202 = vunpack.c.l.b16 %v60
    %v203 = vunpack.c.h.b16 %v60
    %v204 = vunpack.c.l.b16 %v61
    %v205 = vunpack.c.h.b16 %v61
    %v206 = vunpack.c.l.b16 %v62
    %v207 = vunpack.c.h.b16 %v62
    %v208 = vunpack.c.l.b16 %v63
    %v209 = vunpack.c.h.b16 %v63
    %v210 = vunpack.c.l.b16 %v64
    %v211 = vunpack.c.h.b16 %v64
    %v212 = vunpack.c.l.b16 %v65
    %v213 = vunpack.c.h.b16 %v65
    %v214 = vunpack.c.l.b16 %v66
    %v215 = vunpack.c.h.b16 %v66
    %v216 = vunpack.c.l.b16 %v67
    %v217 = vunpack.c.h.b16 %v67
    %v218 = vunpack.c.l.b16 %v68
    %v219 = vunpack.c.h.b16 %v68
    %v220 = vunpack.c.l.b16 %v69
    %v221 = vunpack.c.h.b16 %v69
    %v222 = vunpack.c.l.b16 %v70
    %v223 = vunpack.c.h.b16 %v70
    %v224 = vunpack.c.l.b16 %v71
    %v225 = vunpack.c.h.b16 %v71
    %v226 = vunpack.c.l.b16 %v72
    %v227 = vunpack.c.h.b16 %v72
    %v228 = vunpack.c.l.b16 %v73
    %v229 = vunpack.c.h.b16 %v73
    %v230 = vunpack.c.l.b16 %v74
    %v231 = vunpack.c.h.b16 %v74
    %v232 = vunpack.c.l.b16 %v75
    %v233 = vunpack.c.h.b16 %v75
    %v234 = vunpack.c.l.b16 %v76
    %v235 = vunpack.c.h.b16 %v76
    %v236 = vunpack.c.l.b16 %v77
    %v237 = vunpack.c.h.b16 %v77
    %v238 = vunpack.c.l.b16 %v78
    %v239 = vunpack.c.h.b16 %v78
    %v240 = vunpack.c.l.b16 %v79
    %v241 = vunpack.c.h.b16 %v79
    %v242 = vunpack.c.l.b16 %v80
    %v243 = vunpack.c.h.b16 %v80
    %v244 = vunpack.c.l.b16 %v81
    %v245 = vunpack.c.h.b16 %v81
    %v246 = vunpack.c.l.b16 %v82
    %v247 = vunpack.c.h.b16 %v82
    %v248 = vunpack.c.l.b16 %v83
    %v249 = vunpack.c.h.b16 %v83
    %v250 = vunpack.c.l.b16 %v84
    %v251 = vunpack.c.h.b16 %v84
    %v252 = vunpack.c.l.b16 %v85
    %v253 = vunpack.c.h.b16 %v85
    %v254 = vunpack.c.l.b16 %v86
    %v255 = vunpack.c.h.b16 %v86
    %v256 = vunpack.c.l.b16 %v87
    %v257 = vunpack.c.h.b16 %v87
    %v258 = vunpack.c.l.b16 %v88
    %v259 = vunpack.c.h.b16 %v88
    %v260 = vunpack.c.l.b16 %v89
    %v261 = vunpack.c.h.b16 %v89
    %v262 = vunpack.c.l.b16 %v90
    %v263 = vunpack.c.h.b16 %v90
    %v264 = vunpack.c.l.b16 %v91
    %v265 = vunpack.c.h.b16 %v91
    %v266 = vunpack.c.l.b16 %v92
    %v267 = vunpack.c.h.b16 %v92
    %v268 = vunpack.c.l.b16 %v93
    %v269 = vunpack.c.h.b16 %v93
    %v270 = vunpack.c.l.b16 %v94
    %v271 = vunpack.c.h.b16 %v94
    %v272 = vunpack.c.l.b16 %v95
    %v273 = vunpack.c.h.b16 %v95
    %v274 = vunpack.c.l.b16 %v96
    %v275 = vunpack.c.h.b16 %v96
    %v276 = vunpack.c.l.b16 %v97
    %v277 = vunpack.c.h.b16 %v97
    %v278 = vunpack.c.l.b16 %v98
    %v279 = vunpack.c.h.b16 %v98
    %v280 = vunpack.c.l.b16 %v99
    %v281 = vunpack.c.h.b16 %v99
    %v282 = vunpack.c.l.b16 %v100
    %v283 = vunpack.c.h.b16 %v100
    %v284 = vunpack.c.l.b16 %v101
    %v285 = vunpack.c.h.b16 %v101
    %v286 = vunpack.c.l.b16 %v102
    %v287 = vunpack.c.h.b16 %v102
    %v288 = vunpack.c.l.b16 %v103
    %v289 = vunpack.c.h.b16 %v103
    %v290 = vunpack.c.l.b16 %v104
    %v291 = vunpack.c.h.b16 %v104
    %v292 = vunpack.c.l.b16 %v105
    %v293 = vunpack.c.h.b16 %v105
    %v294 = vunpack.c.l.b16 %v106
    %v295 = vunpack.c.h.b16 %v106
    %v296 = vunpack.c.l.b16 %v107
    %v297 = vunpack.c.h.b16 %v107
    %v298 = vunpack.c.l.b16 %v108
    %v299 = vunpack.c.h.b16 %v108
    %v300 = vunpack.c.l.b16 %v109
    %v301 = vunpack.c.h.b16 %v109
    %v302 = vunpack.c.l.b16 %v110
    %v303 = vunpack.c.h.b16 %v110
    %v304 = vunpack.c.l.b16 %v111
    %v305 = vunpack.c.h.b16 %v111
    %v306 = vunpack.c.l.b16 %v112
    %v307 = vunpack.c.h.b16 %v112
    %v308 = vunpack.c.l.b16 %v113
    %v309 = vunpack.c.h.b16 %v113
    %v310 = vunpack.c.l.b16 %v114
    %v311 = vunpack.c.h.b16 %v114
    %v312 = vunpack.c.l.b16 %v115
    %v313 = vunpack.c.h.b16 %v115
    %v314 = vpack.c.b16 %v194, %v186
    %v315 = vpack.c.b16 %v195, %v187
    %v316 = vpack.c.b16 %v196, %v188
    %v317 = vpack.c.b16 %v197, %v189
    %v318 = vpack.c.b16 %v198, %v190
    %v319 = vpack.c.b16 %v199, %v191
    %v320 = vpack.c.b16 %v200, %v192
    %v321 = vpack.c.b16 %v201, %v193
    %v322 = vpack.c.b16 %v210, %v202
    %v323 = vpack.c.b16 %v211, %v203
    %v324 = vpack.c.b16 %v212, %v204
    %v325 = vpack.c.b16 %v213, %v205
    %v326 = vpack.c.b16 %v214, %v206
    %v327 = vpack.c.b16 %v215, %v207
    %v328 = vpack.c.b16 %v216, %v208
    %v329 = vpack.c.b16 %v217, %v209
    %v330 = vpack.c.b16 %v226, %v218
    %v331 = vpack.c.b16 %v227, %v219
    %v332 = vpack.c.b16 %v228, %v220
    %v333 = vpack.c.b16 %v229, %v221
    %v334 = vpack.c.b16 %v230, %v222
    %v335 = vpack.c.b16 %v231, %v223
    %v336 = vpack.c.b16 %v232, %v224
    %v337 = vpack.c.b16 %v233, %v225
    %v338 = vpack.c.b16 %v242, %v234
    %v339 = vpack.c.b16 %v243, %v235
    %v340 = vpack.c.b16 %v244, %v236
    %v341 = vpack.c.b16 %v245, %v237
    %v342 = vpack.c.b16 %v246, %v238
    %v343 = vpack.c.b16 %v247, %v239
    %v344 = vpack.c.b16 %v248, %v240
    %v345 = vpack.c.b16 %v249, %v241
    %v346 = vpack.c.b16 %v258, %v250
    %v347 = vpack.c.b16 %v259, %v251
    %v348 = vpack.c.b16 %v260, %v252
    %v349 = vpack.c.b16 %v261, %v253
    %v350 = vpack.c.b16 %v262, %v254
    %v351 = vpack.c.b16 %v263, %v255
    %v352 = vpack.c.b16 %v264, %v256
    %v353 = vpack.c.b16 %v265, %v257
    %v354 = vpack.c.b16 %v274, %v266
    %v355 = vpack.c.b16 %v275, %v267
    %v356 = vpack.c.b16 %v276, %v268
    %v357 = vpack.c.b16 %v277, %v269
    %v358 = vpack.c.b16 %v278, %v270
    %v359 = vpack.c.b16 %v279, %v271
    %v360 = vpack.c.b16 %v280, %v272
    %v361 = vpack.c.b16 %v281, %v273
    %v362 = vpack.c.b16 %v290, %v282
    %v363 = vpack.c.b16 %v291, %v283
    %v364 = vpack.c.b16 %v292, %v284
    %v365 = vpack.c.b16 %v293, %v285
    %v366 = vpack.c.b16 %v294, %v286
    %v367 = vpack.c.b16 %v295, %v287
    %v368 = vpack.c.b16 %v296, %v288
    %v369 = vpack.c.b16 %v297, %v289
    %v370 = vpack.c.b16 %v306, %v298
    %v371 = vpack.c.b16 %v307, %v299
    %v372 = vpack.c.b16 %v308, %v300
    %v373 = vpack.c.b16 %v309, %v301
    %v374 = vpack.c.b16 %v310, %v302
    %v375 = vpack.c.b16 %v311, %v303
    %v376 = vpack.c.b16 %v312, %v304
    %v377 = vpack.c.b16 %v313, %v305
    %442 = vmatpush.bf16.msra.mxu0 %v370
    %443 = vmatpush.bf16.msra.mxu0 %v362
    %444 = vmatpush.bf16.msra.mxu0 %v354
    %445 = vmatpush.bf16.msra.mxu0 %v346
    %446 = vmatpush.bf16.msra.mxu0 %v338
    %447 = vmatpush.bf16.msra.mxu0 %v330
    %448 = vmatpush.bf16.msra.mxu0 %v322
    %449 = vmatpush.bf16.msra.mxu0 %v314
    %450 = vmatmul.bf16.gmra.mxu0 %v120
    %v451 = vpop.f32.mrf.mxu0
    %v452 = vadd.f32 0.0, %v451
    %v453 = vpop.f32.mrf.mxu0
    %v454 = vadd.f32 0.0, %v453
    %455 = vdwg.mxu0
    %456 = vmatpush.bf16.msra.mxu0 %v371
    %457 = vmatpush.bf16.msra.mxu0 %v363
    %458 = vmatpush.bf16.msra.mxu0 %v355
    %459 = vmatpush.bf16.msra.mxu0 %v347
    %460 = vmatpush.bf16.msra.mxu0 %v339
    %461 = vmatpush.bf16.msra.mxu0 %v331
    %462 = vmatpush.bf16.msra.mxu0 %v323
    %463 = vmatpush.bf16.msra.mxu0 %v315
    %464 = vmatmul.bf16.gmra.mxu0 %v120
    %v465 = vpop.f32.mrf.mxu0
    %v466 = vadd.f32 0.0, %v465
    %v467 = vpop.f32.mrf.mxu0
    %v468 = vadd.f32 0.0, %v467
    %469 = vdwg.mxu0
    %470 = vmatpush.bf16.msra.mxu0 %v372
    %471 = vmatpush.bf16.msra.mxu0 %v364
    %472 = vmatpush.bf16.msra.mxu0 %v356
    %473 = vmatpush.bf16.msra.mxu0 %v348
    %474 = vmatpush.bf16.msra.mxu0 %v340
    %475 = vmatpush.bf16.msra.mxu0 %v332
    %476 = vmatpush.bf16.msra.mxu0 %v324
    %477 = vmatpush.bf16.msra.mxu0 %v316
    %478 = vmatmul.bf16.gmra.mxu0 %v120
    %v479 = vpop.f32.mrf.mxu0
    %v480 = vadd.f32 0.0, %v479
    %v481 = vpop.f32.mrf.mxu0
    %v482 = vadd.f32 0.0, %v481
    %483 = vdwg.mxu0
    %484 = vmatpush.bf16.msra.mxu0 %v373
    %485 = vmatpush.bf16.msra.mxu0 %v365
    %486 = vmatpush.bf16.msra.mxu0 %v357
    %487 = vmatpush.bf16.msra.mxu0 %v349
    %488 = vmatpush.bf16.msra.mxu0 %v341
    %489 = vmatpush.bf16.msra.mxu0 %v333
    %490 = vmatpush.bf16.msra.mxu0 %v325
    %491 = vmatpush.bf16.msra.mxu0 %v317
    %492 = vmatmul.bf16.gmra.mxu0 %v120
    %v493 = vpop.f32.mrf.mxu0
    %v494 = vadd.f32 0.0, %v493
    %v495 = vpop.f32.mrf.mxu0
    %v496 = vadd.f32 0.0, %v495
    %497 = vdwg.mxu0
    %498 = vmatpush.bf16.msra.mxu0 %v374
    %499 = vmatpush.bf16.msra.mxu0 %v366
    %500 = vmatpush.bf16.msra.mxu0 %v358
    %501 = vmatpush.bf16.msra.mxu0 %v350
    %502 = vmatpush.bf16.msra.mxu0 %v342
    %503 = vmatpush.bf16.msra.mxu0 %v334
    %504 = vmatpush.bf16.msra.mxu0 %v326
    %505 = vmatpush.bf16.msra.mxu0 %v318
    %506 = vmatmul.bf16.gmra.mxu0 %v120
    %v507 = vpop.f32.mrf.mxu0
    %v508 = vadd.f32 0.0, %v507
    %v509 = vpop.f32.mrf.mxu0
    %v510 = vadd.f32 0.0, %v509
    %511 = vdwg.mxu0
    %512 = vmatpush.bf16.msra.mxu0 %v375
    %513 = vmatpush.bf16.msra.mxu0 %v367
    %514 = vmatpush.bf16.msra.mxu0 %v359
    %515 = vmatpush.bf16.msra.mxu0 %v351
    %516 = vmatpush.bf16.msra.mxu0 %v343
    %517 = vmatpush.bf16.msra.mxu0 %v335
    %518 = vmatpush.bf16.msra.mxu0 %v327
    %519 = vmatpush.bf16.msra.mxu0 %v319
    %520 = vmatmul.bf16.gmra.mxu0 %v120
    %v521 = vpop.f32.mrf.mxu0
    %v522 = vadd.f32 0.0, %v521
    %v523 = vpop.f32.mrf.mxu0
    %v524 = vadd.f32 0.0, %v523
    %525 = vdwg.mxu0
    %526 = vmatpush.bf16.msra.mxu0 %v376
    %527 = vmatpush.bf16.msra.mxu0 %v368
    %528 = vmatpush.bf16.msra.mxu0 %v360
    %529 = vmatpush.bf16.msra.mxu0 %v352
    %530 = vmatpush.bf16.msra.mxu0 %v344
    %531 = vmatpush.bf16.msra.mxu0 %v336
    %532 = vmatpush.bf16.msra.mxu0 %v328
    %533 = vmatpush.bf16.msra.mxu0 %v320
    %534 = vmatmul.bf16.gmra.mxu0 %v120
    %v535 = vpop.f32.mrf.mxu0
    %v536 = vadd.f32 0.0, %v535
    %v537 = vpop.f32.mrf.mxu0
    %v538 = vadd.f32 0.0, %v537
    %539 = vdwg.mxu0
    %540 = vmatpush.bf16.msra.mxu0 %v377
    %541 = vmatpush.bf16.msra.mxu0 %v369
    %542 = vmatpush.bf16.msra.mxu0 %v361
    %543 = vmatpush.bf16.msra.mxu0 %v353
    %544 = vmatpush.bf16.msra.mxu0 %v345
    %545 = vmatpush.bf16.msra.mxu0 %v337
    %546 = vmatpush.bf16.msra.mxu0 %v329
    %547 = vmatpush.bf16.msra.mxu0 %v321
    %548 = vmatmul.bf16.gmra.mxu0 %v120
    %v549 = vpop.f32.mrf.mxu0
    %v550 = vadd.f32 0.0, %v549
    %v551 = vpop.f32.mrf.mxu0
    %v552 = vadd.f32 0.0, %v551
    %553 = vdwg.mxu0
    %v554 = vld [vmem:[%s3] sm:$0xff]
    %v555 = vld [vmem:[%s3 + $0x8] sm:$0xff]
    %v556 = vld [vmem:[%s3 + $0x10] sm:$0xff]
    %v557 = vld [vmem:[%s3 + $0x18] sm:$0xff]
    %v558 = vld [vmem:[%s3 + $0x20] sm:$0xff]
    %v559 = vld [vmem:[%s3 + $0x28] sm:$0xff]
    %v560 = vld [vmem:[%s3 + $0x30] sm:$0xff]
    %v561 = vld [vmem:[%s3 + $0x38] sm:$0xff]
    %v562 = vadd.f32 %v452, %v454
    %v563 = vadd.f32 %v466, %v468
    %v564 = vadd.f32 %v480, %v482
    %v565 = vadd.f32 %v494, %v496
    %v566 = vadd.f32 %v508, %v510
    %v567 = vadd.f32 %v522, %v524
    %v568 = vadd.f32 %v536, %v538
    %v569 = vadd.f32 %v550, %v552
    %v570 = vadd.f32 %v554, %v562
    %v571 = vadd.f32 %v555, %v563
    %v572 = vadd.f32 %v556, %v564
    %v573 = vadd.f32 %v557, %v565
    %v574 = vadd.f32 %v558, %v566
    %v575 = vadd.f32 %v559, %v567
    %v576 = vadd.f32 %v560, %v568
    %v577 = vadd.f32 %v561, %v569
    %578 = vst [vmem:[%s3] sm:$0xff] %v570
    %579 = vst [vmem:[%s3 + $0x8] sm:$0xff] %v571
    %580 = vst [vmem:[%s3 + $0x10] sm:$0xff] %v572
    %581 = vst [vmem:[%s3 + $0x18] sm:$0xff] %v573
    %582 = vst [vmem:[%s3 + $0x20] sm:$0xff] %v574
    %583 = vst [vmem:[%s3 + $0x28] sm:$0xff] %v575
    %584 = vst [vmem:[%s3 + $0x30] sm:$0xff] %v576
    %585 = vst [vmem:[%s3 + $0x38] sm:$0xff] %v577
    %v586 = vld [vmem:[%s4] sm:$0xff]
    %v587 = vld [vmem:[%s4 + $0x8] sm:$0xff]
    %v588 = vld [vmem:[%s4 + $0x10] sm:$0xff]
    %v589 = vld [vmem:[%s4 + $0x18] sm:$0xff]
    %v590 = vld [vmem:[%s4 + $0x20] sm:$0xff]
    %v591 = vld [vmem:[%s4 + $0x28] sm:$0xff]
    %v592 = vld [vmem:[%s4 + $0x30] sm:$0xff]
    %v593 = vld [vmem:[%s4 + $0x38] sm:$0xff]
    %v594 = vmul.f32 %v452, %v452
    %v595 = vmul.f32 %v466, %v466
    %v596 = vmul.f32 %v480, %v480
    %v597 = vmul.f32 %v494, %v494
    %v598 = vmul.f32 %v508, %v508
    %v599 = vmul.f32 %v522, %v522
    %v600 = vmul.f32 %v536, %v536
    %v601 = vmul.f32 %v550, %v550
    %v602 = vmul.f32 %v454, %v454
    %v603 = vmul.f32 %v468, %v468
    %v604 = vmul.f32 %v482, %v482
    %v605 = vmul.f32 %v496, %v496
    %v606 = vmul.f32 %v510, %v510
    %v607 = vmul.f32 %v524, %v524
    %v608 = vmul.f32 %v538, %v538
    %v609 = vmul.f32 %v552, %v552
    %v610 = vadd.f32 %v594, %v602
    %v611 = vadd.f32 %v595, %v603
    %v612 = vadd.f32 %v596, %v604
    %v613 = vadd.f32 %v597, %v605
    %v614 = vadd.f32 %v598, %v606
    %v615 = vadd.f32 %v599, %v607
    %v616 = vadd.f32 %v600, %v608
    %v617 = vadd.f32 %v601, %v609
    %v618 = vadd.f32 %v586, %v610
    %v619 = vadd.f32 %v587, %v611
    %v620 = vadd.f32 %v588, %v612
    %v621 = vadd.f32 %v589, %v613
    %v622 = vadd.f32 %v590, %v614
    %v623 = vadd.f32 %v591, %v615
    %v624 = vadd.f32 %v592, %v616
    %v625 = vadd.f32 %v593, %v617
    %626 = vst [vmem:[%s4] sm:$0xff] %v618
    %627 = vst [vmem:[%s4 + $0x8] sm:$0xff] %v619
    %628 = vst [vmem:[%s4 + $0x10] sm:$0xff] %v620
    %629 = vst [vmem:[%s4 + $0x18] sm:$0xff] %v621
    %630 = vst [vmem:[%s4 + $0x20] sm:$0xff] %v622
    %631 = vst [vmem:[%s4 + $0x28] sm:$0xff] %v623
    %632 = vst [vmem:[%s4 + $0x30] sm:$0xff] %v624
    %633 = vst [vmem:[%s4 + $0x38] sm:$0xff] %v625
    %v634 = vpack.c.bf16 %v466, %v452
    %v635 = vpack.c.bf16 %v494, %v480
    %v636 = vpack.c.bf16 %v522, %v508
    %v637 = vpack.c.bf16 %v550, %v536
    %v638 = vpack.c.bf16 %v468, %v454
    %v639 = vpack.c.bf16 %v496, %v482
    %v640 = vpack.c.bf16 %v524, %v510
    %v641 = vpack.c.bf16 %v552, %v538
    %642 = vst [vmem:[%s2] sm:$0xff] %v634
    %643 = vst [vmem:[%s2 + $0x8] sm:$0xff] %v635
    %644 = vst [vmem:[%s2 + $0x10] sm:$0xff] %v636
    %645 = vst [vmem:[%s2 + $0x18] sm:$0xff] %v637
    %646 = vst [vmem:[%s2 + $0x20] sm:$0xff] %v638
    %647 = vst [vmem:[%s2 + $0x28] sm:$0xff] %v639
    %648 = vst [vmem:[%s2 + $0x30] sm:$0xff] %v640
    %649 = vst [vmem:[%s2 + $0x38] sm:$0xff] %v641
    // Predicated region
    $region18: #{_lambda_.7} parent=1 // pred_check
      _
    $region19: #{_lambda_.7} parent=1 // pred_check_branch
      %651 = sbr.rel (0) target = $region21
    $region20: #{_lambda_.7} parent=1 // pred_region
      _
    $region21: #{_lambda_.7} parent=1 // pred_fallthru
      _
    // Predicated region
    $region22: #{_lambda_.7} parent=1 // pred_check
      _
    $region23: #{_lambda_.7} parent=1 // pred_check_branch
      %653 = sbr.rel (0) target = $region25
    $region24: #{_lambda_.7} parent=1 // pred_region
      _
    $region25: #{_lambda_.7} parent=1 // pred_fallthru
      _
    // Predicated region
    $region26: #{_lambda_.7} parent=1 // pred_check
      _
    $region27: #{_lambda_.7} parent=1 // pred_check_branch
      %655 = sbr.rel (0) target = $region29
    $region28: #{_lambda_.7} parent=1 // pred_region
      _
    $region29: #{_lambda_.7} parent=1 // pred_fallthru
      _
    // Predicated region
    $region30: #{_lambda_.7} parent=1 // pred_check
      _
    $region31: #{_lambda_.7} parent=1 // pred_check_branch
      %657 = sbr.rel (0) target = $region33
    $region32: #{_lambda_.7} parent=1 // pred_region
      _
    $region33: #{_lambda_.7} parent=1 // pred_fallthru
      _
    // Predicated region
    $region34: #{_lambda_.7} parent=1 // pred_check
      _
    $region35: #{_lambda_.7} parent=1 // pred_check_branch
      %659 = sbr.rel (0) target = $region37
    $region36: #{_lambda_.7} parent=1 // pred_region
      _
    $region37: #{_lambda_.7} parent=1 // pred_fallthru
      _
    // Predicated region
    $region38: #{_lambda_.7} parent=1 // pred_check
      _
    $region39: #{_lambda_.7} parent=1 // pred_check_branch
      %661 = sbr.rel (0) target = $region41
    $region40: #{_lambda_.7} parent=1 // pred_region
      _
    $region41: #{_lambda_.7} parent=1 // pred_fallthru
      _
    %662 = vsyncpa [#allocation3], 1

// kernel: tile.48
$region0: #{tile.48}
  #allocation0 [shape = 's32[1]{0}', space=sflag, size = 0x4, scoped, tag = 'scoped memory for tile.48']
  %s0 = inlined_call_operand.vmem [shape: f32[32], index: 0, kind: input, shape index: {}]
  %s1 = inlined_call_operand.vmem [shape: f32[4,32], index: 1, kind: output, shape index: {}]
  // Predicated region
  $region2: #{tile.48} parent=0 // pred_check
    _
  $region3: #{tile.48} parent=0 // pred_check_branch
    %3 = sbr.rel (0) target = $region5
  $region4: #{tile.48} parent=0 // pred_region
    _
  $region5: #{tile.48} parent=0 // pred_fallthru
    _
  %v4 = vld [vmem:[%s0] ss:$0 sm:$0xff]
  %5 = vst [vmem:[%s1] sm:$0xf] %v4

// kernel: _lambda_.9
$region0: #{_lambda_.9}
  #allocation0 [shape = 'u32[]', space=smem, size = 0x4, offset = 0x4, fixed_abs, tag = 'smem constant byte address 0x4 - core index']
  #allocation1 [shape = 'u32[72,128]{1,0:T(1,128)}', space=vmem, size = 0x9000, scoped, tag = 'internal scratch']
  %s0 = inlined_call_operand.vmem [shape: bf16[32,640], index: 0, kind: input, shape index: {}]
  %s1 = inlined_call_operand.vmem [shape: bf16[640,128], index: 1, kind: input, shape index: {}]
  %s2 = inlined_call_operand.vmem [shape: bf16[32,128], index: 2, kind: output, shape index: {0}]
  %s3 = inlined_call_operand.vmem [shape: f32[8,128], index: 3, kind: output, shape index: {1}]
  %s4 = inlined_call_operand.vmem [shape: f32[8,128], index: 4, kind: output, shape index: {2}]
  %5 = xla_tuple %s2, %s3, %s4
  %s6 = sld [smem:[#allocation0]]
  $region38: #{_lambda_.9} parent=0
    _
  %s8 = ssub.s32 1, %s6
  %s9 = scalar_select 0, %s8, %s6
  // Predicated region
  $region2: #{_lambda_.9} parent=0 // pred_check
    _
  $region3: #{_lambda_.9} parent=0 // pred_check_branch
    %11 = sbr.rel (0) target = $region5
  $region4: #{_lambda_.9} parent=0 // pred_region
    _
  $region5: #{_lambda_.9} parent=0 // pred_fallthru
    _
  // Predicated region
  $region6: #{_lambda_.9} parent=0 // pred_check
    _
  $region7: #{_lambda_.9} parent=0 // pred_check_branch
    %13 = sbr.rel (0) target = $region9
  $region8: #{_lambda_.9} parent=0 // pred_region
    _
  $region9: #{_lambda_.9} parent=0 // pred_fallthru
    _
  %p14 = scmp.eq.s32.totalorder 0, 0
  // Predicated region
  $region10: #{_lambda_.9} parent=0 // pred_check
    %p15 = pneg %p14
  $region11: #{_lambda_.9} parent=0 // pred_check_branch
    %17 = sbr.rel (%p15) target = $region13
  $region12: #{_lambda_.9} parent=0 // pred_region
    %18 = vst [vmem:[%s3] sm:$0xff] 0.0
    %19 = vst [vmem:[%s4] sm:$0xff] 0.0
  $region13: #{_lambda_.9} parent=0 // pred_fallthru
    _
  %v20 = vld [vmem:[%s0] sm:$0xff]
  %v21 = vld [vmem:[%s0 + $0x8] sm:$0xff]
  %v22 = vld [vmem:[%s0 + $0x10] sm:$0xf]
  %v23 = vld [vmem:[%s0 + $0x14] sm:$0xff]
  %v24 = vld [vmem:[%s0 + $0x1c] sm:$0xff]
  %v25 = vld [vmem:[%s0 + $0x24] sm:$0xf]
  %v26 = vld [vmem:[%s0 + $0x28] sm:$0xff]
  %v27 = vld [vmem:[%s0 + $0x30] sm:$0xff]
  %v28 = vld [vmem:[%s0 + $0x38] sm:$0xf]
  %v29 = vld [vmem:[%s0 + $0x3c] sm:$0xff]
  %v30 = vld [vmem:[%s0 + $0x44] sm:$0xff]
  %v31 = vld [vmem:[%s0 + $0x4c] sm:$0xf]
  %v32 = vld [vmem:[%s1] sm:$0xf]
  %v33 = vld [vmem:[%s1 + $0x4] sm:$0xf]
  %v34 = vld [vmem:[%s1 + $0x8] sm:$0xf]
  %v35 = vld [vmem:[%s1 + $0xc] sm:$0xf]
  %v36 = vld [vmem:[%s1 + $0x10] sm:$0xf]
  %v37 = vld [vmem:[%s1 + $0x14] sm:$0xf]
  %v38 = vld [vmem:[%s1 + $0x18] sm:$0xf]
  %v39 = vld [vmem:[%s1 + $0x1c] sm:$0xf]
  %v40 = vld [vmem:[%s1 + $0x20] sm:$0xf]
  %v41 = vld [vmem:[%s1 + $0x24] sm:$0xf]
  %v42 = vld [vmem:[%s1 + $0x28] sm:$0xf]
  %v43 = vld [vmem:[%s1 + $0x2c] sm:$0xf]
  %v44 = vld [vmem:[%s1 + $0x30] sm:$0xf]
  %v45 = vld [vmem:[%s1 + $0x34] sm:$0xf]
  %v46 = vld [vmem:[%s1 + $0x38] sm:$0xf]
  %v47 = vld [vmem:[%s1 + $0x3c] sm:$0xf]
  %v48 = vld [vmem:[%s1 + $0x40] sm:$0xf]
  %v49 = vld [vmem:[%s1 + $0x44] sm:$0xf]
  %v50 = vld [vmem:[%s1 + $0x48] sm:$0xf]
  %v51 = vld [vmem:[%s1 + $0x4c] sm:$0xf]
  %v52 = vld [vmem:[%s1 + $0x50] sm:$0xf]
  %v53 = vld [vmem:[%s1 + $0x54] sm:$0xf]
  %v54 = vld [vmem:[%s1 + $0x58] sm:$0xf]
  %v55 = vld [vmem:[%s1 + $0x5c] sm:$0xf]
  %v56 = vld [vmem:[%s1 + $0x60] sm:$0xf]
  %v57 = vld [vmem:[%s1 + $0x64] sm:$0xf]
  %v58 = vld [vmem:[%s1 + $0x68] sm:$0xf]
  %v59 = vld [vmem:[%s1 + $0x6c] sm:$0xf]
  %v60 = vld [vmem:[%s1 + $0x70] sm:$0xf]
  %v61 = vld [vmem:[%s1 + $0x74] sm:$0xf]
  %v62 = vld [vmem:[%s1 + $0x78] sm:$0xf]
  %v63 = vld [vmem:[%s1 + $0x7c] sm:$0xf]
  %v64 = vld [vmem:[%s1 + $0x80] sm:$0xf]
  %v65 = vld [vmem:[%s1 + $0x84] sm:$0xf]
  %v66 = vld [vmem:[%s1 + $0x88] sm:$0xf]
  %v67 = vld [vmem:[%s1 + $0x8c] sm:$0xf]
  %v68 = vld [vmem:[%s1 + $0x90] sm:$0xf]
  %v69 = vld [vmem:[%s1 + $0x94] sm:$0xf]
  %v70 = vld [vmem:[%s1 + $0x98] sm:$0xf]
  %v71 = vld [vmem:[%s1 + $0x9c] sm:$0xf]
  %v72 = vld [vmem:[%s1 + $0xa0] sm:$0xf]
  %v73 = vld [vmem:[%s1 + $0xa4] sm:$0xf]
  %v74 = vld [vmem:[%s1 + $0xa8] sm:$0xf]
  %v75 = vld [vmem:[%s1 + $0xac] sm:$0xf]
  %v76 = vld [vmem:[%s1 + $0xb0] sm:$0xf]
  %v77 = vld [vmem:[%s1 + $0xb4] sm:$0xf]
  %v78 = vld [vmem:[%s1 + $0xb8] sm:$0xf]
  %v79 = vld [vmem:[%s1 + $0xbc] sm:$0xf]
  %v80 = vld [vmem:[%s1 + $0xc0] sm:$0xf]
  %v81 = vld [vmem:[%s1 + $0xc4] sm:$0xf]
  %v82 = vld [vmem:[%s1 + $0xc8] sm:$0xf]
  %v83 = vld [vmem:[%s1 + $0xcc] sm:$0xf]
  %v84 = vld [vmem:[%s1 + $0xd0] sm:$0xf]
  %v85 = vld [vmem:[%s1 + $0xd4] sm:$0xf]
  %v86 = vld [vmem:[%s1 + $0xd8] sm:$0xf]
  %v87 = vld [vmem:[%s1 + $0xdc] sm:$0xf]
  %v88 = vld [vmem:[%s1 + $0xe0] sm:$0xf]
  %v89 = vld [vmem:[%s1 + $0xe4] sm:$0xf]
  %v90 = vld [vmem:[%s1 + $0xe8] sm:$0xf]
  %v91 = vld [vmem:[%s1 + $0xec] sm:$0xf]
  %v92 = vld [vmem:[%s1 + $0xf0] sm:$0xf]
  %v93 = vld [vmem:[%s1 + $0xf4] sm:$0xf]
  %v94 = vld [vmem:[%s1 + $0xf8] sm:$0xf]
  %v95 = vld [vmem:[%s1 + $0xfc] sm:$0xf]
  %v96 = vld [vmem:[%s1 + $0x100] sm:$0xf]
  %v97 = vld [vmem:[%s1 + $0x104] sm:$0xf]
  %v98 = vld [vmem:[%s1 + $0x108] sm:$0xf]
  %v99 = vld [vmem:[%s1 + $0x10c] sm:$0xf]
  %v100 = vld [vmem:[%s1 + $0x110] sm:$0xf]
  %v101 = vld [vmem:[%s1 + $0x114] sm:$0xf]
  %v102 = vld [vmem:[%s1 + $0x118] sm:$0xf]
  %v103 = vld [vmem:[%s1 + $0x11c] sm:$0xf]
  %v104 = vld [vmem:[%s1 + $0x120] sm:$0xf]
  %v105 = vld [vmem:[%s1 + $0x124] sm:$0xf]
  %v106 = vld [vmem:[%s1 + $0x128] sm:$0xf]
  %v107 = vld [vmem:[%s1 + $0x12c] sm:$0xf]
  %v108 = vld [vmem:[%s1 + $0x130] sm:$0xf]
  %v109 = vld [vmem:[%s1 + $0x134] sm:$0xf]
  %v110 = vld [vmem:[%s1 + $0x138] sm:$0xf]
  %v111 = vld [vmem:[%s1 + $0x13c] sm:$0xf]
  %v124 = vunpack.c.l.b16 %v20
  %v125 = vunpack.c.h.b16 %v20
  %v126 = vunpack.c.l.b16 %v21
  %v127 = vunpack.c.h.b16 %v21
  %v128 = vunpack.c.l.b16 %v22
  %v129 = vunpack.c.l.b16 %v23
  %v130 = vunpack.c.h.b16 %v23
  %v131 = vunpack.c.l.b16 %v24
  %v132 = vunpack.c.h.b16 %v24
  %v133 = vunpack.c.l.b16 %v25
  %v134 = vunpack.c.l.b16 %v26
  %v135 = vunpack.c.h.b16 %v26
  %v136 = vunpack.c.l.b16 %v27
  %v137 = vunpack.c.h.b16 %v27
  %v138 = vunpack.c.l.b16 %v28
  %v139 = vunpack.c.l.b16 %v29
  %v140 = vunpack.c.h.b16 %v29
  %v141 = vunpack.c.l.b16 %v30
  %v142 = vunpack.c.h.b16 %v30
  %v143 = vunpack.c.l.b16 %v31
  %v144 = vpack.c.b16 %v129, %v124
  %v145 = vpack.c.b16 %v130, %v125
  %v146 = vpack.c.b16 %v131, %v126
  %v147 = vpack.c.b16 %v132, %v127
  %v148 = vpack.c.b16 %v133, %v128
  %v149 = vpack.c.b16 %v139, %v134
  %v150 = vpack.c.b16 %v140, %v135
  %v151 = vpack.c.b16 %v141, %v136
  %v152 = vpack.c.b16 %v142, %v137
  %v153 = vpack.c.b16 %v143, %v138
  %v244 = vunpack.c.l.b16 %v32
  %v245 = vunpack.c.l.b16 %v33
  %v246 = vunpack.c.l.b16 %v34
  %v247 = vunpack.c.l.b16 %v35
  %v248 = vunpack.c.l.b16 %v36
  %v249 = vunpack.c.l.b16 %v37
  %v250 = vunpack.c.l.b16 %v38
  %v251 = vunpack.c.l.b16 %v39
  %v252 = vunpack.c.l.b16 %v40
  %v253 = vunpack.c.l.b16 %v41
  %v254 = vunpack.c.l.b16 %v42
  %v255 = vunpack.c.l.b16 %v43
  %v256 = vunpack.c.l.b16 %v44
  %v257 = vunpack.c.l.b16 %v45
  %v258 = vunpack.c.l.b16 %v46
  %v259 = vunpack.c.l.b16 %v47
  %v260 = vunpack.c.l.b16 %v48
  %v261 = vunpack.c.l.b16 %v49
  %v262 = vunpack.c.l.b16 %v50
  %v263 = vunpack.c.l.b16 %v51
  %v264 = vunpack.c.l.b16 %v52
  %v265 = vunpack.c.l.b16 %v53
  %v266 = vunpack.c.l.b16 %v54
  %v267 = vunpack.c.l.b16 %v55
  %v268 = vunpack.c.l.b16 %v56
  %v269 = vunpack.c.l.b16 %v57
  %v270 = vunpack.c.l.b16 %v58
  %v271 = vunpack.c.l.b16 %v59
  %v272 = vunpack.c.l.b16 %v60
  %v273 = vunpack.c.l.b16 %v61
  %v274 = vunpack.c.l.b16 %v62
  %v275 = vunpack.c.l.b16 %v63
  %v276 = vunpack.c.l.b16 %v64
  %v277 = vunpack.c.l.b16 %v65
  %v278 = vunpack.c.l.b16 %v66
  %v279 = vunpack.c.l.b16 %v67
  %v280 = vunpack.c.l.b16 %v68
  %v281 = vunpack.c.l.b16 %v69
  %v282 = vunpack.c.l.b16 %v70
  %v283 = vunpack.c.l.b16 %v71
  %v284 = vunpack.c.l.b16 %v72
  %v285 = vunpack.c.l.b16 %v73
  %v286 = vunpack.c.l.b16 %v74
  %v287 = vunpack.c.l.b16 %v75
  %v288 = vunpack.c.l.b16 %v76
  %v289 = vunpack.c.l.b16 %v77
  %v290 = vunpack.c.l.b16 %v78
  %v291 = vunpack.c.l.b16 %v79
  %v292 = vunpack.c.l.b16 %v80
  %v293 = vunpack.c.l.b16 %v81
  %v294 = vunpack.c.l.b16 %v82
  %v295 = vunpack.c.l.b16 %v83
  %v296 = vunpack.c.l.b16 %v84
  %v297 = vunpack.c.l.b16 %v85
  %v298 = vunpack.c.l.b16 %v86
  %v299 = vunpack.c.l.b16 %v87
  %v300 = vunpack.c.l.b16 %v88
  %v301 = vunpack.c.l.b16 %v89
  %v302 = vunpack.c.l.b16 %v90
  %v303 = vunpack.c.l.b16 %v91
  %v304 = vunpack.c.l.b16 %v92
  %v305 = vunpack.c.l.b16 %v93
  %v306 = vunpack.c.l.b16 %v94
  %v307 = vunpack.c.l.b16 %v95
  %v308 = vunpack.c.l.b16 %v96
  %v309 = vunpack.c.l.b16 %v97
  %v310 = vunpack.c.l.b16 %v98
  %v311 = vunpack.c.l.b16 %v99
  %v312 = vunpack.c.l.b16 %v100
  %v313 = vunpack.c.l.b16 %v101
  %v314 = vunpack.c.l.b16 %v102
  %v315 = vunpack.c.l.b16 %v103
  %v316 = vunpack.c.l.b16 %v104
  %v317 = vunpack.c.l.b16 %v105
  %v318 = vunpack.c.l.b16 %v106
  %v319 = vunpack.c.l.b16 %v107
  %v320 = vunpack.c.l.b16 %v108
  %v321 = vunpack.c.l.b16 %v109
  %v322 = vunpack.c.l.b16 %v110
  %v323 = vunpack.c.l.b16 %v111
  %v324 = vpack.c.b16 %v245, %v244
  %v325 = vpack.c.b16 %v247, %v246
  %v326 = vpack.c.b16 %v249, %v248
  %v327 = vpack.c.b16 %v251, %v250
  %v328 = vpack.c.b16 %v253, %v252
  %v329 = vpack.c.b16 %v255, %v254
  %v330 = vpack.c.b16 %v257, %v256
  %v331 = vpack.c.b16 %v259, %v258
  %v332 = vpack.c.b16 %v261, %v260
  %v333 = vpack.c.b16 %v263, %v262
  %v334 = vpack.c.b16 %v265, %v264
  %v335 = vpack.c.b16 %v267, %v266
  %v336 = vpack.c.b16 %v269, %v268
  %v337 = vpack.c.b16 %v271, %v270
  %v338 = vpack.c.b16 %v273, %v272
  %v339 = vpack.c.b16 %v275, %v274
  %v340 = vpack.c.b16 %v277, %v276
  %v341 = vpack.c.b16 %v279, %v278
  %v342 = vpack.c.b16 %v281, %v280
  %v343 = vpack.c.b16 %v283, %v282
  %v344 = vpack.c.b16 %v285, %v284
  %v345 = vpack.c.b16 %v287, %v286
  %v346 = vpack.c.b16 %v289, %v288
  %v347 = vpack.c.b16 %v291, %v290
  %v348 = vpack.c.b16 %v293, %v292
  %v349 = vpack.c.b16 %v295, %v294
  %v350 = vpack.c.b16 %v297, %v296
  %v351 = vpack.c.b16 %v299, %v298
  %v352 = vpack.c.b16 %v301, %v300
  %v353 = vpack.c.b16 %v303, %v302
  %v354 = vpack.c.b16 %v305, %v304
  %v355 = vpack.c.b16 %v307, %v306
  %v356 = vpack.c.b16 %v309, %v308
  %v357 = vpack.c.b16 %v311, %v310
  %v358 = vpack.c.b16 %v313, %v312
  %v359 = vpack.c.b16 %v315, %v314
  %v360 = vpack.c.b16 %v317, %v316
  %v361 = vpack.c.b16 %v319, %v318
  %v362 = vpack.c.b16 %v321, %v320
  %v363 = vpack.c.b16 %v323, %v322
  %404 = vmatpush.bf16.msra.mxu0 %v331
  %405 = vmatpush.bf16.msra.mxu0 %v330
  %406 = vmatpush.bf16.msra.mxu0 %v329
  %407 = vmatpush.bf16.msra.mxu0 %v328
  %408 = vmatpush.bf16.msra.mxu0 %v327
  %409 = vmatpush.bf16.msra.mxu0 %v326
  %410 = vmatpush.bf16.msra.mxu0 %v325
  %411 = vmatpush.bf16.msra.mxu0 %v324
  %412 = vmatmul.bf16.gmra.mxu0 %v144
  %v413 = vpop.f32.mrf.mxu0
  %v414 = vadd.f32 0.0, %v413
  %v415 = vpop.f32.mrf.mxu0
  %v416 = vadd.f32 0.0, %v415
  %417 = vmatmul.bf16.gmra.mxu0 %v149
  %v418 = vpop.f32.mrf.mxu0
  %v419 = vadd.f32 0.0, %v418
  %v420 = vpop.f32.mrf.mxu0
  %v421 = vadd.f32 0.0, %v420
  %422 = vdwg.mxu0
  %423 = vmatpush.bf16.msra.mxu0 %v339
  %424 = vmatpush.bf16.msra.mxu0 %v338
  %425 = vmatpush.bf16.msra.mxu0 %v337
  %426 = vmatpush.bf16.msra.mxu0 %v336
  %427 = vmatpush.bf16.msra.mxu0 %v335
  %428 = vmatpush.bf16.msra.mxu0 %v334
  %429 = vmatpush.bf16.msra.mxu0 %v333
  %430 = vmatpush.bf16.msra.mxu0 %v332
  %431 = vmatmul.bf16.gmra.mxu0 %v145
  %v432 = vpop.f32.mrf.mxu0
  %v433 = vadd.f32 %v414, %v432
  %v434 = vpop.f32.mrf.mxu0
  %v435 = vadd.f32 %v416, %v434
  %436 = vmatmul.bf16.gmra.mxu0 %v150
  %v437 = vpop.f32.mrf.mxu0
  %v438 = vadd.f32 %v419, %v437
  %v439 = vpop.f32.mrf.mxu0
  %v440 = vadd.f32 %v421, %v439
  %441 = vdwg.mxu0
  %442 = vmatpush.bf16.msra.mxu0 %v347
  %443 = vmatpush.bf16.msra.mxu0 %v346
  %444 = vmatpush.bf16.msra.mxu0 %v345
  %445 = vmatpush.bf16.msra.mxu0 %v344
  %446 = vmatpush.bf16.msra.mxu0 %v343
  %447 = vmatpush.bf16.msra.mxu0 %v342
  %448 = vmatpush.bf16.msra.mxu0 %v341
  %449 = vmatpush.bf16.msra.mxu0 %v340
  %450 = vmatmul.bf16.gmra.mxu0 %v146
  %v451 = vpop.f32.mrf.mxu0
  %v452 = vadd.f32 %v433, %v451
  %v453 = vpop.f32.mrf.mxu0
  %v454 = vadd.f32 %v435, %v453
  %455 = vmatmul.bf16.gmra.mxu0 %v151
  %v456 = vpop.f32.mrf.mxu0
  %v457 = vadd.f32 %v438, %v456
  %v458 = vpop.f32.mrf.mxu0
  %v459 = vadd.f32 %v440, %v458
  %460 = vdwg.mxu0
  %461 = vmatpush.bf16.msra.mxu0 %v355
  %462 = vmatpush.bf16.msra.mxu0 %v354
  %463 = vmatpush.bf16.msra.mxu0 %v353
  %464 = vmatpush.bf16.msra.mxu0 %v352
  %465 = vmatpush.bf16.msra.mxu0 %v351
  %466 = vmatpush.bf16.msra.mxu0 %v350
  %467 = vmatpush.bf16.msra.mxu0 %v349
  %468 = vmatpush.bf16.msra.mxu0 %v348
  %469 = vmatmul.bf16.gmra.mxu0 %v147
  %v470 = vpop.f32.mrf.mxu0
  %v471 = vadd.f32 %v452, %v470
  %v472 = vpop.f32.mrf.mxu0
  %v473 = vadd.f32 %v454, %v472
  %474 = vmatmul.bf16.gmra.mxu0 %v152
  %v475 = vpop.f32.mrf.mxu0
  %v476 = vadd.f32 %v457, %v475
  %v477 = vpop.f32.mrf.mxu0
  %v478 = vadd.f32 %v459, %v477
  %479 = vdwg.mxu0
  %480 = vmatpush.bf16.msra.mxu0 %v363
  %481 = vmatpush.bf16.msra.mxu0 %v362
  %482 = vmatpush.bf16.msra.mxu0 %v361
  %483 = vmatpush.bf16.msra.mxu0 %v360
  %484 = vmatpush.bf16.msra.mxu0 %v359
  %485 = vmatpush.bf16.msra.mxu0 %v358
  %486 = vmatpush.bf16.msra.mxu0 %v357
  %487 = vmatpush.bf16.msra.mxu0 %v356
  %488 = vmatmul.bf16.gmra.mxu0 %v148
  %v489 = vpop.f32.mrf.mxu0
  %v490 = vadd.f32 %v471, %v489
  %v491 = vpop.f32.mrf.mxu0
  %v492 = vadd.f32 %v473, %v491
  %493 = vmatmul.bf16.gmra.mxu0 %v153
  %v494 = vpop.f32.mrf.mxu0
  %v495 = vadd.f32 %v476, %v494
  %v496 = vpop.f32.mrf.mxu0
  %v497 = vadd.f32 %v478, %v496
  %498 = vdwg.mxu0
  %v499 = vld [vmem:[%s3] sm:$0xff]
  %v500 = vadd.f32 %v490, %v492
  %v501 = vadd.f32 %v500, %v495
  %v502 = vadd.f32 %v501, %v497
  %v503 = vadd.f32 %v499, %v502
  %504 = vst [vmem:[%s3] sm:$0xff] %v503
  %v505 = vld [vmem:[%s4] sm:$0xff]
  %v506 = vmul.f32 %v490, %v490
  %v507 = vmul.f32 %v492, %v492
  %v508 = vmul.f32 %v495, %v495
  %v509 = vmul.f32 %v497, %v497
  %v510 = vadd.f32 %v506, %v507
  %v511 = vadd.f32 %v510, %v508
  %v512 = vadd.f32 %v511, %v509
  %v513 = vadd.f32 %v505, %v512
  %514 = vst [vmem:[%s4] sm:$0xff] %v513
  %v515 = vpack.c.bf16 %v490, %v490
  %v516 = vpack.c.bf16 %v492, %v492
  %v517 = vpack.c.bf16 %v495, %v495
  %v518 = vpack.c.bf16 %v497, %v497
  %519 = vst [vmem:[%s2] sm:$0xf] %v515
  %520 = vst [vmem:[%s2 + $0x4] sm:$0xf] %v516
  %521 = vst [vmem:[%s2 + $0x8] sm:$0xf] %v517
  %522 = vst [vmem:[%s2 + $0xc] sm:$0xf] %v518
  // Predicated region
  $region14: #{_lambda_.9} parent=0 // pred_check
    _
  $region15: #{_lambda_.9} parent=0 // pred_check_branch
    %524 = sbr.rel (0) target = $region17
  $region16: #{_lambda_.9} parent=0 // pred_region
    _
  $region17: #{_lambda_.9} parent=0 // pred_fallthru
    _
  // Predicated region
  $region18: #{_lambda_.9} parent=0 // pred_check
    _
  $region19: #{_lambda_.9} parent=0 // pred_check_branch
    %526 = sbr.rel (0) target = $region21
  $region20: #{_lambda_.9} parent=0 // pred_region
    _
  $region21: #{_lambda_.9} parent=0 // pred_fallthru
    _
  // Predicated region
  $region22: #{_lambda_.9} parent=0 // pred_check
    _
  $region23: #{_lambda_.9} parent=0 // pred_check_branch
    %528 = sbr.rel (0) target = $region25
  $region24: #{_lambda_.9} parent=0 // pred_region
    _
  $region25: #{_lambda_.9} parent=0 // pred_fallthru
    _
  // Predicated region
  $region26: #{_lambda_.9} parent=0 // pred_check
    _
  $region27: #{_lambda_.9} parent=0 // pred_check_branch
    %530 = sbr.rel (0) target = $region29
  $region28: #{_lambda_.9} parent=0 // pred_region
    _
  $region29: #{_lambda_.9} parent=0 // pred_fallthru
    _
  // Predicated region
  $region30: #{_lambda_.9} parent=0 // pred_check
    _
  $region31: #{_lambda_.9} parent=0 // pred_check_branch
    %532 = sbr.rel (0) target = $region33
  $region32: #{_lambda_.9} parent=0 // pred_region
    _
  $region33: #{_lambda_.9} parent=0 // pred_fallthru
    _
  // Predicated region
  $region34: #{_lambda_.9} parent=0 // pred_check
    _
  $region35: #{_lambda_.9} parent=0 // pred_check_branch
    %534 = sbr.rel (0) target = $region37
  $region36: #{_lambda_.9} parent=0 // pred_region
    _
  $region37: #{_lambda_.9} parent=0 // pred_fallthru
    _

// kernel: _lambda_.10
$region0: #{_lambda_.10}
  #allocation0 [shape = 'u32[]', space=smem, size = 0x4, offset = 0x4, fixed_abs, tag = 'smem constant byte address 0x4 - core index']
  #allocation1 [shape = 'u32[72,128]{1,0:T(1,128)}', space=vmem, size = 0x9000, scoped, tag = 'internal scratch']
  %s0 = inlined_call_operand.vmem [shape: bf16[32,128], index: 0, kind: input, shape index: {}]
  %s1 = inlined_call_operand.vmem [shape: f32[1,128], index: 1, kind: input, shape index: {}]
  %s2 = inlined_call_operand.vmem [shape: f32[1,128], index: 2, kind: input, shape index: {}]
  %s3 = inlined_call_operand.vmem [shape: bf16[32,128], index: 3, kind: output, shape index: {}]
  %s4 = sld [smem:[#allocation0]]
  $region22: #{_lambda_.10} parent=0
    _
  %s6 = ssub.s32 1, %s4
  %s7 = scalar_select 0, %s6, %s4
  // Predicated region
  $region2: #{_lambda_.10} parent=0 // pred_check
    _
  $region3: #{_lambda_.10} parent=0 // pred_check_branch
    %9 = sbr.rel (0) target = $region5
  $region4: #{_lambda_.10} parent=0 // pred_region
    _
  $region5: #{_lambda_.10} parent=0 // pred_fallthru
    _
  // Predicated region
  $region6: #{_lambda_.10} parent=0 // pred_check
    _
  $region7: #{_lambda_.10} parent=0 // pred_check_branch
    %11 = sbr.rel (0) target = $region9
  $region8: #{_lambda_.10} parent=0 // pred_region
    _
  $region9: #{_lambda_.10} parent=0 // pred_fallthru
    _
  // Predicated region
  $region10: #{_lambda_.10} parent=0 // pred_check
    _
  $region11: #{_lambda_.10} parent=0 // pred_check_branch
    %13 = sbr.rel (0) target = $region13
  $region12: #{_lambda_.10} parent=0 // pred_region
    _
  $region13: #{_lambda_.10} parent=0 // pred_fallthru
    _
  %v14 = vld [vmem:[%s0] sm:$0xf]
  %v15 = vld [vmem:[%s0 + $0x4] sm:$0xf]
  %v16 = vld [vmem:[%s0 + $0x8] sm:$0xf]
  %v17 = vld [vmem:[%s0 + $0xc] sm:$0xf]
  %v18 = vunpack.c.l.bf16 %v14
  %v19 = vunpack.c.l.bf16 %v15
  %v20 = vunpack.c.l.bf16 %v16
  %v21 = vunpack.c.l.bf16 %v17
  %v22 = vld [vmem:[%s1] sm:$0x1]
  %v24 = vperm.slane %v22, 0
  %v26 = vmul.f32 %v18, %v24
  %v27 = vmul.f32 %v19, %v24
  %v28 = vmul.f32 %v20, %v24
  %v29 = vmul.f32 %v21, %v24
  %v30 = vld [vmem:[%s2] sm:$0x1]
  %v32 = vperm.slane %v30, 0
  %v34 = vadd.f32 %v26, %v32
  %v35 = vadd.f32 %v27, %v32
  %v36 = vadd.f32 %v28, %v32
  %v37 = vadd.f32 %v29, %v32
  %v38 = vmax.f32 %v34, 0.0
  %v39 = vmax.f32 %v35, 0.0
  %v40 = vmax.f32 %v36, 0.0
  %v41 = vmax.f32 %v37, 0.0
  %v42 = vpack.c.bf16 %v38, %v38
  %v43 = vpack.c.bf16 %v39, %v39
  %v44 = vpack.c.bf16 %v40, %v40
  %v45 = vpack.c.bf16 %v41, %v41
  %46 = vst [vmem:[%s3] sm:$0xf] %v42
  %47 = vst [vmem:[%s3 + $0x4] sm:$0xf] %v43
  %48 = vst [vmem:[%s3 + $0x8] sm:$0xf] %v44
  %49 = vst [vmem:[%s3 + $0xc] sm:$0xf] %v45
  // Predicated region
  $region14: #{_lambda_.10} parent=0 // pred_check
    _
  $region15: #{_lambda_.10} parent=0 // pred_check_branch
    %51 = sbr.rel (0) target = $region17
  $region16: #{_lambda_.10} parent=0 // pred_region
    _
  $region17: #{_lambda_.10} parent=0 // pred_fallthru
    _
  // Predicated region
  $region18: #{_lambda_.10} parent=0 // pred_check
    _
  $region19: #{_lambda_.10} parent=0 // pred_check_branch
    %53 = sbr.rel (0) target = $region21
  $region20: #{_lambda_.10} parent=0 // pred_region
    _
  $region21: #{_lambda_.10} parent=0 // pred_fallthru
    _

// kernel: tile.58
$region0: #{tile.58}
  #allocation0 [shape = 's32[1]{0}', space=sflag, size = 0x4, scoped, tag = 'scoped memory for tile.58']
  %s0 = inlined_call_operand.vmem [shape: f32[16], index: 0, kind: input, shape index: {}]
  %s1 = inlined_call_operand.vmem [shape: f32[4,16], index: 1, kind: output, shape index: {}]
  // Predicated region
  $region2: #{tile.58} parent=0 // pred_check
    _
  $region3: #{tile.58} parent=0 // pred_check_branch
    %3 = sbr.rel (0) target = $region5
  $region4: #{tile.58} parent=0 // pred_region
    _
  $region5: #{tile.58} parent=0 // pred_fallthru
    _
  %v4 = vld [vmem:[%s0] ss:$0 sm:$0xff]
  %5 = vst [vmem:[%s1] sm:$0xf] %v4

// kernel: tile.59
$region0: #{tile.59}
  %s0 = inlined_call_operand.vmem [shape: f32[4,16], index: 0, kind: input, shape index: {}]
  %s1 = inlined_call_operand.vmem [shape: f32[64], index: 1, kind: output, shape index: {}]
  $region1: #{tile.59} parent=0
    #allocation0 [shape = 'u8[4096]{0}', space=vmem, size = 0x1000, scoped, tag = 'scoped mem for output reshape']
    #allocation1 [shape = 'u8[4096]{0}', space=vmem, size = 0x1000, scoped, tag = 'scoped mem for input reshape']
    %s3 = ssub.s32 16, 1
    %v4 = vld [vmem:[%s0] sm:%s3]
    %5 = vst [vmem:[#allocation1] sm:%s3] %v4
    %v6 = vld [vmem:[#allocation1] sm:$0x1]
    %vm7 = vcmask 130048
    %8 = vst.msk [vmem:[#allocation0] sm:$0x1] %vm7, %v6
    %s9 = scalar_lea.vmem [#allocation1], 3
    %v10 = vld [vmem:[%s9] sm:$0x1]
    %11 = vrot.lane.b32.xlu0 %v10, 48
    %v12 = vpop.permute.xlu0 %11
    %vm13 = vcmask 523648
    %14 = vst.msk [vmem:[#allocation0] sm:$0x1] %vm13, %v12
    %s15 = scalar_lea.vmem [#allocation1], 2
    %v16 = vld [vmem:[%s15] sm:$0x1]
    %17 = vrot.lane.b32.xlu0 %v16, 32
    %v18 = vpop.permute.xlu0 %17
    %vm19 = vcmask 392448
    %20 = vst.msk [vmem:[#allocation0] sm:$0x1] %vm19, %v18
    %s21 = scalar_lea.vmem [#allocation1], 1
    %v22 = vld [vmem:[%s21] sm:$0x1]
    %23 = vrot.lane.b32.xlu0 %v22, 16
    %v24 = vpop.permute.xlu0 %23
    %vm25 = vcmask 261248
    %26 = vst.msk [vmem:[#allocation0] sm:$0x1] %vm25, %v24
    %s28 = ssub.s32 2, 1
    %v29 = vld [vmem:[#allocation0] sm:%s28]
    %s31 = ssub.s32 2, 1
    %32 = vst [vmem:[%s1] sm:%s31] %v29

// kernel: _lambda_.12
$region0: #{_lambda_.12}
  #allocation0 [shape = 'u32[]', space=smem, size = 0x4, offset = 0x4, fixed_abs, tag = 'smem constant byte address 0x4 - core index']
  #allocation1 [shape = 'u32[72,128]{1,0:T(1,128)}', space=vmem, size = 0x9000, scoped, tag = 'internal scratch']
  %s0 = inlined_call_operand.vmem [shape: bf16[128,128], index: 0, kind: input, shape index: {}]
  %s1 = inlined_call_operand.vmem [shape: f32[1,128], index: 1, kind: input, shape index: {}]
  %s2 = inlined_call_operand.vmem [shape: f32[1,128], index: 2, kind: input, shape index: {}]
  %s3 = inlined_call_operand.vmem [shape: bf16[128,128], index: 3, kind: output, shape index: {}]
  %s4 = sld [smem:[#allocation0]]
  $region22: #{_lambda_.12} parent=0
    _
  %s6 = ssub.s32 1, %s4
  %s7 = scalar_select 0, %s6, %s4
  // Predicated region
  $region2: #{_lambda_.12} parent=0 // pred_check
    _
  $region3: #{_lambda_.12} parent=0 // pred_check_branch
    %9 = sbr.rel (0) target = $region5
  $region4: #{_lambda_.12} parent=0 // pred_region
    _
  $region5: #{_lambda_.12} parent=0 // pred_fallthru
    _
  // Predicated region
  $region6: #{_lambda_.12} parent=0 // pred_check
    _
  $region7: #{_lambda_.12} parent=0 // pred_check_branch
    %11 = sbr.rel (0) target = $region9
  $region8: #{_lambda_.12} parent=0 // pred_region
    _
  $region9: #{_lambda_.12} parent=0 // pred_fallthru
    _
  // Predicated region
  $region10: #{_lambda_.12} parent=0 // pred_check
    _
  $region11: #{_lambda_.12} parent=0 // pred_check_branch
    %13 = sbr.rel (0) target = $region13
  $region12: #{_lambda_.12} parent=0 // pred_region
    _
  $region13: #{_lambda_.12} parent=0 // pred_fallthru
    _
  %v14 = vld [vmem:[%s0] sm:$0xf]
  %v15 = vld [vmem:[%s0 + $0x4] sm:$0xf]
  %v16 = vld [vmem:[%s0 + $0x8] sm:$0xf]
  %v17 = vld [vmem:[%s0 + $0xc] sm:$0xf]
  %v18 = vld [vmem:[%s0 + $0x10] sm:$0xf]
  %v19 = vld [vmem:[%s0 + $0x14] sm:$0xf]
  %v20 = vld [vmem:[%s0 + $0x18] sm:$0xf]
  %v21 = vld [vmem:[%s0 + $0x1c] sm:$0xf]
  %v22 = vld [vmem:[%s0 + $0x20] sm:$0xf]
  %v23 = vld [vmem:[%s0 + $0x24] sm:$0xf]
  %v24 = vld [vmem:[%s0 + $0x28] sm:$0xf]
  %v25 = vld [vmem:[%s0 + $0x2c] sm:$0xf]
  %v26 = vld [vmem:[%s0 + $0x30] sm:$0xf]
  %v27 = vld [vmem:[%s0 + $0x34] sm:$0xf]
  %v28 = vld [vmem:[%s0 + $0x38] sm:$0xf]
  %v29 = vld [vmem:[%s0 + $0x3c] sm:$0xf]
  %v30 = vunpack.c.l.bf16 %v14
  %v31 = vunpack.c.l.bf16 %v15
  %v32 = vunpack.c.l.bf16 %v16
  %v33 = vunpack.c.l.bf16 %v17
  %v34 = vunpack.c.l.bf16 %v18
  %v35 = vunpack.c.l.bf16 %v19
  %v36 = vunpack.c.l.bf16 %v20
  %v37 = vunpack.c.l.bf16 %v21
  %v38 = vunpack.c.l.bf16 %v22
  %v39 = vunpack.c.l.bf16 %v23
  %v40 = vunpack.c.l.bf16 %v24
  %v41 = vunpack.c.l.bf16 %v25
  %v42 = vunpack.c.l.bf16 %v26
  %v43 = vunpack.c.l.bf16 %v27
  %v44 = vunpack.c.l.bf16 %v28
  %v45 = vunpack.c.l.bf16 %v29
  %v46 = vld [vmem:[%s1] sm:$0x1]
  %v48 = vperm.slane %v46, 0
  %v50 = vmul.f32 %v30, %v48
  %v51 = vmul.f32 %v31, %v48
  %v52 = vmul.f32 %v32, %v48
  %v53 = vmul.f32 %v33, %v48
  %v54 = vmul.f32 %v34, %v48
  %v55 = vmul.f32 %v35, %v48
  %v56 = vmul.f32 %v36, %v48
  %v57 = vmul.f32 %v37, %v48
  %v58 = vmul.f32 %v38, %v48
  %v59 = vmul.f32 %v39, %v48
  %v60 = vmul.f32 %v40, %v48
  %v61 = vmul.f32 %v41, %v48
  %v62 = vmul.f32 %v42, %v48
  %v63 = vmul.f32 %v43, %v48
  %v64 = vmul.f32 %v44, %v48
  %v65 = vmul.f32 %v45, %v48
  %v66 = vld [vmem:[%s2] sm:$0x1]
  %v68 = vperm.slane %v66, 0
  %v70 = vadd.f32 %v50, %v68
  %v71 = vadd.f32 %v51, %v68
  %v72 = vadd.f32 %v52, %v68
  %v73 = vadd.f32 %v53, %v68
  %v74 = vadd.f32 %v54, %v68
  %v75 = vadd.f32 %v55, %v68
  %v76 = vadd.f32 %v56, %v68
  %v77 = vadd.f32 %v57, %v68
  %v78 = vadd.f32 %v58, %v68
  %v79 = vadd.f32 %v59, %v68
  %v80 = vadd.f32 %v60, %v68
  %v81 = vadd.f32 %v61, %v68
  %v82 = vadd.f32 %v62, %v68
  %v83 = vadd.f32 %v63, %v68
  %v84 = vadd.f32 %v64, %v68
  %v85 = vadd.f32 %v65, %v68
  %v86 = vmax.f32 %v70, 0.0
  %v87 = vmax.f32 %v71, 0.0
  %v88 = vmax.f32 %v72, 0.0
  %v89 = vmax.f32 %v73, 0.0
  %v90 = vmax.f32 %v74, 0.0
  %v91 = vmax.f32 %v75, 0.0
  %v92 = vmax.f32 %v76, 0.0
  %v93 = vmax.f32 %v77, 0.0
  %v94 = vmax.f32 %v78, 0.0
  %v95 = vmax.f32 %v79, 0.0
  %v96 = vmax.f32 %v80, 0.0
  %v97 = vmax.f32 %v81, 0.0
  %v98 = vmax.f32 %v82, 0.0
  %v99 = vmax.f32 %v83, 0.0
  %v100 = vmax.f32 %v84, 0.0
  %v101 = vmax.f32 %v85, 0.0
  %v102 = vpack.c.bf16 %v86, %v86
  %v103 = vpack.c.bf16 %v87, %v87
  %v104 = vpack.c.bf16 %v88, %v88
  %v105 = vpack.c.bf16 %v89, %v89
  %v106 = vpack.c.bf16 %v90, %v90
  %v107 = vpack.c.bf16 %v91, %v91
  %v108 = vpack.c.bf16 %v92, %v92
  %v109 = vpack.c.bf16 %v93, %v93
  %v110 = vpack.c.bf16 %v94, %v94
  %v111 = vpack.c.bf16 %v95, %v95
  %v112 = vpack.c.bf16 %v96, %v96
  %v113 = vpack.c.bf16 %v97, %v97
  %v114 = vpack.c.bf16 %v98, %v98
  %v115 = vpack.c.bf16 %v99, %v99
  %v116 = vpack.c.bf16 %v100, %v100
  %v117 = vpack.c.bf16 %v101, %v101
  %118 = vst [vmem:[%s3] sm:$0xf] %v102
  %119 = vst [vmem:[%s3 + $0x4] sm:$0xf] %v103
  %120 = vst [vmem:[%s3 + $0x8] sm:$0xf] %v104
  %121 = vst [vmem:[%s3 + $0xc] sm:$0xf] %v105
  %122 = vst [vmem:[%s3 + $0x10] sm:$0xf] %v106
  %123 = vst [vmem:[%s3 + $0x14] sm:$0xf] %v107
  %124 = vst [vmem:[%s3 + $0x18] sm:$0xf] %v108
  %125 = vst [vmem:[%s3 + $0x1c] sm:$0xf] %v109
  %126 = vst [vmem:[%s3 + $0x20] sm:$0xf] %v110
  %127 = vst [vmem:[%s3 + $0x24] sm:$0xf] %v111
  %128 = vst [vmem:[%s3 + $0x28] sm:$0xf] %v112
  %129 = vst [vmem:[%s3 + $0x2c] sm:$0xf] %v113
  %130 = vst [vmem:[%s3 + $0x30] sm:$0xf] %v114
  %131 = vst [vmem:[%s3 + $0x34] sm:$0xf] %v115
  %132 = vst [vmem:[%s3 + $0x38] sm:$0xf] %v116
  %133 = vst [vmem:[%s3 + $0x3c] sm:$0xf] %v117
  // Predicated region
  $region14: #{_lambda_.12} parent=0 // pred_check
    _
  $region15: #{_lambda_.12} parent=0 // pred_check_branch
    %135 = sbr.rel (0) target = $region17
  $region16: #{_lambda_.12} parent=0 // pred_region
    _
  $region17: #{_lambda_.12} parent=0 // pred_fallthru
    _
  // Predicated region
  $region18: #{_lambda_.12} parent=0 // pred_check
    _
  $region19: #{_lambda_.12} parent=0 // pred_check_branch
    %137 = sbr.rel (0) target = $region21
  $region20: #{_lambda_.12} parent=0 // pred_region
    _
  $region21: #{_lambda_.12} parent=0 // pred_fallthru
    _

// kernel: _lambda_.11
$region0: #{_lambda_.11}
  #allocation0 [shape = 'u32[]', space=smem, size = 0x4, offset = 0x4, fixed_abs, tag = 'smem constant byte address 0x4 - core index']
  #allocation1 [shape = 'u32[72,128]{1,0:T(1,128)}', space=vmem, size = 0x9000, scoped, tag = 'internal scratch']
  %s0 = inlined_call_operand.vmem [shape: bf16[128,384], index: 0, kind: input, shape index: {}]
  %s1 = inlined_call_operand.vmem [shape: bf16[384,128], index: 1, kind: input, shape index: {}]
  %s2 = inlined_call_operand.vmem [shape: bf16[128,128], index: 2, kind: output, shape index: {0}]
  %s3 = inlined_call_operand.vmem [shape: f32[8,128], index: 3, kind: output, shape index: {1}]
  %s4 = inlined_call_operand.vmem [shape: f32[8,128], index: 4, kind: output, shape index: {2}]
  %5 = xla_tuple %s2, %s3, %s4
  %s6 = sld [smem:[#allocation0]]
  $region38: #{_lambda_.11} parent=0
    _
  %s8 = ssub.s32 1, %s6
  %s9 = scalar_select 0, %s8, %s6
  // Predicated region
  $region2: #{_lambda_.11} parent=0 // pred_check
    _
  $region3: #{_lambda_.11} parent=0 // pred_check_branch
    %11 = sbr.rel (0) target = $region5
  $region4: #{_lambda_.11} parent=0 // pred_region
    _
  $region5: #{_lambda_.11} parent=0 // pred_fallthru
    _
  // Predicated region
  $region6: #{_lambda_.11} parent=0 // pred_check
    _
  $region7: #{_lambda_.11} parent=0 // pred_check_branch
    %13 = sbr.rel (0) target = $region9
  $region8: #{_lambda_.11} parent=0 // pred_region
    _
  $region9: #{_lambda_.11} parent=0 // pred_fallthru
    _
  %p14 = scmp.eq.s32.totalorder 0, 0
  // Predicated region
  $region10: #{_lambda_.11} parent=0 // pred_check
    %p15 = pneg %p14
  $region11: #{_lambda_.11} parent=0 // pred_check_branch
    %17 = sbr.rel (%p15) target = $region13
  $region12: #{_lambda_.11} parent=0 // pred_region
    %18 = vst [vmem:[%s3] sm:$0xff] 0.0
    %19 = vst [vmem:[%s4] sm:$0xff] 0.0
  $region13: #{_lambda_.11} parent=0 // pred_fallthru
    _
  %v20 = vld [vmem:[%s0] sm:$0xff]
  %v21 = vld [vmem:[%s0 + $0x8] sm:$0xf]
  %v22 = vld [vmem:[%s0 + $0xc] sm:$0xff]
  %v23 = vld [vmem:[%s0 + $0x14] sm:$0xf]
  %v24 = vld [vmem:[%s0 + $0x18] sm:$0xff]
  %v25 = vld [vmem:[%s0 + $0x20] sm:$0xf]
  %v26 = vld [vmem:[%s0 + $0x24] sm:$0xff]
  %v27 = vld [vmem:[%s0 + $0x2c] sm:$0xf]
  %v28 = vld [vmem:[%s0 + $0x30] sm:$0xff]
  %v29 = vld [vmem:[%s0 + $0x38] sm:$0xf]
  %v30 = vld [vmem:[%s0 + $0x3c] sm:$0xff]
  %v31 = vld [vmem:[%s0 + $0x44] sm:$0xf]
  %v32 = vld [vmem:[%s0 + $0x48] sm:$0xff]
  %v33 = vld [vmem:[%s0 + $0x50] sm:$0xf]
  %v34 = vld [vmem:[%s0 + $0x54] sm:$0xff]
  %v35 = vld [vmem:[%s0 + $0x5c] sm:$0xf]
  %v36 = vld [vmem:[%s0 + $0x60] sm:$0xff]
  %v37 = vld [vmem:[%s0 + $0x68] sm:$0xf]
  %v38 = vld [vmem:[%s0 + $0x6c] sm:$0xff]
  %v39 = vld [vmem:[%s0 + $0x74] sm:$0xf]
  %v40 = vld [vmem:[%s0 + $0x78] sm:$0xff]
  %v41 = vld [vmem:[%s0 + $0x80] sm:$0xf]
  %v42 = vld [vmem:[%s0 + $0x84] sm:$0xff]
  %v43 = vld [vmem:[%s0 + $0x8c] sm:$0xf]
  %v44 = vld [vmem:[%s0 + $0x90] sm:$0xff]
  %v45 = vld [vmem:[%s0 + $0x98] sm:$0xf]
  %v46 = vld [vmem:[%s0 + $0x9c] sm:$0xff]
  %v47 = vld [vmem:[%s0 + $0xa4] sm:$0xf]
  %v48 = vld [vmem:[%s0 + $0xa8] sm:$0xff]
  %v49 = vld [vmem:[%s0 + $0xb0] sm:$0xf]
  %v50 = vld [vmem:[%s0 + $0xb4] sm:$0xff]
  %v51 = vld [vmem:[%s0 + $0xbc] sm:$0xf]
  %v52 = vld [vmem:[%s1] sm:$0xf]
  %v53 = vld [vmem:[%s1 + $0x4] sm:$0xf]
  %v54 = vld [vmem:[%s1 + $0x8] sm:$0xf]
  %v55 = vld [vmem:[%s1 + $0xc] sm:$0xf]
  %v56 = vld [vmem:[%s1 + $0x10] sm:$0xf]
  %v57 = vld [vmem:[%s1 + $0x14] sm:$0xf]
  %v58 = vld [vmem:[%s1 + $0x18] sm:$0xf]
  %v59 = vld [vmem:[%s1 + $0x1c] sm:$0xf]
  %v60 = vld [vmem:[%s1 + $0x20] sm:$0xf]
  %v61 = vld [vmem:[%s1 + $0x24] sm:$0xf]
  %v62 = vld [vmem:[%s1 + $0x28] sm:$0xf]
  %v63 = vld [vmem:[%s1 + $0x2c] sm:$0xf]
  %v64 = vld [vmem:[%s1 + $0x30] sm:$0xf]
  %v65 = vld [vmem:[%s1 + $0x34] sm:$0xf]
  %v66 = vld [vmem:[%s1 + $0x38] sm:$0xf]
  %v67 = vld [vmem:[%s1 + $0x3c] sm:$0xf]
  %v68 = vld [vmem:[%s1 + $0x40] sm:$0xf]
  %v69 = vld [vmem:[%s1 + $0x44] sm:$0xf]
  %v70 = vld [vmem:[%s1 + $0x48] sm:$0xf]
  %v71 = vld [vmem:[%s1 + $0x4c] sm:$0xf]
  %v72 = vld [vmem:[%s1 + $0x50] sm:$0xf]
  %v73 = vld [vmem:[%s1 + $0x54] sm:$0xf]
  %v74 = vld [vmem:[%s1 + $0x58] sm:$0xf]
  %v75 = vld [vmem:[%s1 + $0x5c] sm:$0xf]
  %v76 = vld [vmem:[%s1 + $0x60] sm:$0xf]
  %v77 = vld [vmem:[%s1 + $0x64] sm:$0xf]
  %v78 = vld [vmem:[%s1 + $0x68] sm:$0xf]
  %v79 = vld [vmem:[%s1 + $0x6c] sm:$0xf]
  %v80 = vld [vmem:[%s1 + $0x70] sm:$0xf]
  %v81 = vld [vmem:[%s1 + $0x74] sm:$0xf]
  %v82 = vld [vmem:[%s1 + $0x78] sm:$0xf]
  %v83 = vld [vmem:[%s1 + $0x7c] sm:$0xf]
  %v84 = vld [vmem:[%s1 + $0x80] sm:$0xf]
  %v85 = vld [vmem:[%s1 + $0x84] sm:$0xf]
  %v86 = vld [vmem:[%s1 + $0x88] sm:$0xf]
  %v87 = vld [vmem:[%s1 + $0x8c] sm:$0xf]
  %v88 = vld [vmem:[%s1 + $0x90] sm:$0xf]
  %v89 = vld [vmem:[%s1 + $0x94] sm:$0xf]
  %v90 = vld [vmem:[%s1 + $0x98] sm:$0xf]
  %v91 = vld [vmem:[%s1 + $0x9c] sm:$0xf]
  %v92 = vld [vmem:[%s1 + $0xa0] sm:$0xf]
  %v93 = vld [vmem:[%s1 + $0xa4] sm:$0xf]
  %v94 = vld [vmem:[%s1 + $0xa8] sm:$0xf]
  %v95 = vld [vmem:[%s1 + $0xac] sm:$0xf]
  %v96 = vld [vmem:[%s1 + $0xb0] sm:$0xf]
  %v97 = vld [vmem:[%s1 + $0xb4] sm:$0xf]
  %v98 = vld [vmem:[%s1 + $0xb8] sm:$0xf]
  %v99 = vld [vmem:[%s1 + $0xbc] sm:$0xf]
  %v132 = vunpack.c.l.b16 %v20
  %v133 = vunpack.c.h.b16 %v20
  %v134 = vunpack.c.l.b16 %v21
  %v135 = vunpack.c.l.b16 %v22
  %v136 = vunpack.c.h.b16 %v22
  %v137 = vunpack.c.l.b16 %v23
  %v138 = vunpack.c.l.b16 %v24
  %v139 = vunpack.c.h.b16 %v24
  %v140 = vunpack.c.l.b16 %v25
  %v141 = vunpack.c.l.b16 %v26
  %v142 = vunpack.c.h.b16 %v26
  %v143 = vunpack.c.l.b16 %v27
  %v144 = vunpack.c.l.b16 %v28
  %v145 = vunpack.c.h.b16 %v28
  %v146 = vunpack.c.l.b16 %v29
  %v147 = vunpack.c.l.b16 %v30
  %v148 = vunpack.c.h.b16 %v30
  %v149 = vunpack.c.l.b16 %v31
  %v150 = vunpack.c.l.b16 %v32
  %v151 = vunpack.c.h.b16 %v32
  %v152 = vunpack.c.l.b16 %v33
  %v153 = vunpack.c.l.b16 %v34
  %v154 = vunpack.c.h.b16 %v34
  %v155 = vunpack.c.l.b16 %v35
  %v156 = vunpack.c.l.b16 %v36
  %v157 = vunpack.c.h.b16 %v36
  %v158 = vunpack.c.l.b16 %v37
  %v159 = vunpack.c.l.b16 %v38
  %v160 = vunpack.c.h.b16 %v38
  %v161 = vunpack.c.l.b16 %v39
  %v162 = vunpack.c.l.b16 %v40
  %v163 = vunpack.c.h.b16 %v40
  %v164 = vunpack.c.l.b16 %v41
  %v165 = vunpack.c.l.b16 %v42
  %v166 = vunpack.c.h.b16 %v42
  %v167 = vunpack.c.l.b16 %v43
  %v168 = vunpack.c.l.b16 %v44
  %v169 = vunpack.c.h.b16 %v44
  %v170 = vunpack.c.l.b16 %v45
  %v171 = vunpack.c.l.b16 %v46
  %v172 = vunpack.c.h.b16 %v46
  %v173 = vunpack.c.l.b16 %v47
  %v174 = vunpack.c.l.b16 %v48
  %v175 = vunpack.c.h.b16 %v48
  %v176 = vunpack.c.l.b16 %v49
  %v177 = vunpack.c.l.b16 %v50
  %v178 = vunpack.c.h.b16 %v50
  %v179 = vunpack.c.l.b16 %v51
  %v180 = vpack.c.b16 %v135, %v132
  %v181 = vpack.c.b16 %v136, %v133
  %v182 = vpack.c.b16 %v137, %v134
  %v183 = vpack.c.b16 %v141, %v138
  %v184 = vpack.c.b16 %v142, %v139
  %v185 = vpack.c.b16 %v143, %v140
  %v186 = vpack.c.b16 %v147, %v144
  %v187 = vpack.c.b16 %v148, %v145
  %v188 = vpack.c.b16 %v149, %v146
  %v189 = vpack.c.b16 %v153, %v150
  %v190 = vpack.c.b16 %v154, %v151
  %v191 = vpack.c.b16 %v155, %v152
  %v192 = vpack.c.b16 %v159, %v156
  %v193 = vpack.c.b16 %v160, %v157
  %v194 = vpack.c.b16 %v161, %v158
  %v195 = vpack.c.b16 %v165, %v162
  %v196 = vpack.c.b16 %v166, %v163
  %v197 = vpack.c.b16 %v167, %v164
  %v198 = vpack.c.b16 %v171, %v168
  %v199 = vpack.c.b16 %v172, %v169
  %v200 = vpack.c.b16 %v173, %v170
  %v201 = vpack.c.b16 %v177, %v174
  %v202 = vpack.c.b16 %v178, %v175
  %v203 = vpack.c.b16 %v179, %v176
  %v276 = vunpack.c.l.b16 %v52
  %v277 = vunpack.c.l.b16 %v53
  %v278 = vunpack.c.l.b16 %v54
  %v279 = vunpack.c.l.b16 %v55
  %v280 = vunpack.c.l.b16 %v56
  %v281 = vunpack.c.l.b16 %v57
  %v282 = vunpack.c.l.b16 %v58
  %v283 = vunpack.c.l.b16 %v59
  %v284 = vunpack.c.l.b16 %v60
  %v285 = vunpack.c.l.b16 %v61
  %v286 = vunpack.c.l.b16 %v62
  %v287 = vunpack.c.l.b16 %v63
  %v288 = vunpack.c.l.b16 %v64
  %v289 = vunpack.c.l.b16 %v65
  %v290 = vunpack.c.l.b16 %v66
  %v291 = vunpack.c.l.b16 %v67
  %v292 = vunpack.c.l.b16 %v68
  %v293 = vunpack.c.l.b16 %v69
  %v294 = vunpack.c.l.b16 %v70
  %v295 = vunpack.c.l.b16 %v71
  %v296 = vunpack.c.l.b16 %v72
  %v297 = vunpack.c.l.b16 %v73
  %v298 = vunpack.c.l.b16 %v74
  %v299 = vunpack.c.l.b16 %v75
  %v300 = vunpack.c.l.b16 %v76
  %v301 = vunpack.c.l.b16 %v77
  %v302 = vunpack.c.l.b16 %v78
  %v303 = vunpack.c.l.b16 %v79
  %v304 = vunpack.c.l.b16 %v80
  %v305 = vunpack.c.l.b16 %v81
  %v306 = vunpack.c.l.b16 %v82
  %v307 = vunpack.c.l.b16 %v83
  %v308 = vunpack.c.l.b16 %v84
  %v309 = vunpack.c.l.b16 %v85
  %v310 = vunpack.c.l.b16 %v86
  %v311 = vunpack.c.l.b16 %v87
  %v312 = vunpack.c.l.b16 %v88
  %v313 = vunpack.c.l.b16 %v89
  %v314 = vunpack.c.l.b16 %v90
  %v315 = vunpack.c.l.b16 %v91
  %v316 = vunpack.c.l.b16 %v92
  %v317 = vunpack.c.l.b16 %v93
  %v318 = vunpack.c.l.b16 %v94
  %v319 = vunpack.c.l.b16 %v95
  %v320 = vunpack.c.l.b16 %v96
  %v321 = vunpack.c.l.b16 %v97
  %v322 = vunpack.c.l.b16 %v98
  %v323 = vunpack.c.l.b16 %v99
  %v324 = vpack.c.b16 %v277, %v276
  %v325 = vpack.c.b16 %v279, %v278
  %v326 = vpack.c.b16 %v281, %v280
  %v327 = vpack.c.b16 %v283, %v282
  %v328 = vpack.c.b16 %v285, %v284
  %v329 = vpack.c.b16 %v287, %v286
  %v330 = vpack.c.b16 %v289, %v288
  %v331 = vpack.c.b16 %v291, %v290
  %v332 = vpack.c.b16 %v293, %v292
  %v333 = vpack.c.b16 %v295, %v294
  %v334 = vpack.c.b16 %v297, %v296
  %v335 = vpack.c.b16 %v299, %v298
  %v336 = vpack.c.b16 %v301, %v300
  %v337 = vpack.c.b16 %v303, %v302
  %v338 = vpack.c.b16 %v305, %v304
  %v339 = vpack.c.b16 %v307, %v306
  %v340 = vpack.c.b16 %v309, %v308
  %v341 = vpack.c.b16 %v311, %v310
  %v342 = vpack.c.b16 %v313, %v312
  %v343 = vpack.c.b16 %v315, %v314
  %v344 = vpack.c.b16 %v317, %v316
  %v345 = vpack.c.b16 %v319, %v318
  %v346 = vpack.c.b16 %v321, %v320
  %v347 = vpack.c.b16 %v323, %v322
  %372 = vmatpush.bf16.msra.mxu0 %v331
  %373 = vmatpush.bf16.msra.mxu0 %v330
  %374 = vmatpush.bf16.msra.mxu0 %v329
  %375 = vmatpush.bf16.msra.mxu0 %v328
  %376 = vmatpush.bf16.msra.mxu0 %v327
  %377 = vmatpush.bf16.msra.mxu0 %v326
  %378 = vmatpush.bf16.msra.mxu0 %v325
  %379 = vmatpush.bf16.msra.mxu0 %v324
  %380 = vmatmul.bf16.gmra.mxu0 %v180
  %v381 = vpop.f32.mrf.mxu0
  %v382 = vadd.f32 0.0, %v381
  %v383 = vpop.f32.mrf.mxu0
  %v384 = vadd.f32 0.0, %v383
  %385 = vmatmul.bf16.gmra.mxu0 %v183
  %v386 = vpop.f32.mrf.mxu0
  %v387 = vadd.f32 0.0, %v386
  %v388 = vpop.f32.mrf.mxu0
  %v389 = vadd.f32 0.0, %v388
  %390 = vmatmul.bf16.gmra.mxu0 %v186
  %v391 = vpop.f32.mrf.mxu0
  %v392 = vadd.f32 0.0, %v391
  %v393 = vpop.f32.mrf.mxu0
  %v394 = vadd.f32 0.0, %v393
  %395 = vmatmul.bf16.gmra.mxu0 %v189
  %v396 = vpop.f32.mrf.mxu0
  %v397 = vadd.f32 0.0, %v396
  %v398 = vpop.f32.mrf.mxu0
  %v399 = vadd.f32 0.0, %v398
  %400 = vmatmul.bf16.gmra.mxu0 %v192
  %v401 = vpop.f32.mrf.mxu0
  %v402 = vadd.f32 0.0, %v401
  %v403 = vpop.f32.mrf.mxu0
  %v404 = vadd.f32 0.0, %v403
  %405 = vmatmul.bf16.gmra.mxu0 %v195
  %v406 = vpop.f32.mrf.mxu0
  %v407 = vadd.f32 0.0, %v406
  %v408 = vpop.f32.mrf.mxu0
  %v409 = vadd.f32 0.0, %v408
  %410 = vmatmul.bf16.gmra.mxu0 %v198
  %v411 = vpop.f32.mrf.mxu0
  %v412 = vadd.f32 0.0, %v411
  %v413 = vpop.f32.mrf.mxu0
  %v414 = vadd.f32 0.0, %v413
  %415 = vmatmul.bf16.gmra.mxu0 %v201
  %v416 = vpop.f32.mrf.mxu0
  %v417 = vadd.f32 0.0, %v416
  %v418 = vpop.f32.mrf.mxu0
  %v419 = vadd.f32 0.0, %v418
  %420 = vdwg.mxu0
  %421 = vmatpush.bf16.msra.mxu0 %v339
  %422 = vmatpush.bf16.msra.mxu0 %v338
  %423 = vmatpush.bf16.msra.mxu0 %v337
  %424 = vmatpush.bf16.msra.mxu0 %v336
  %425 = vmatpush.bf16.msra.mxu0 %v335
  %426 = vmatpush.bf16.msra.mxu0 %v334
  %427 = vmatpush.bf16.msra.mxu0 %v333
  %428 = vmatpush.bf16.msra.mxu0 %v332
  %429 = vmatmul.bf16.gmra.mxu0 %v181
  %v430 = vpop.f32.mrf.mxu0
  %v431 = vadd.f32 %v382, %v430
  %v432 = vpop.f32.mrf.mxu0
  %v433 = vadd.f32 %v384, %v432
  %434 = vmatmul.bf16.gmra.mxu0 %v184
  %v435 = vpop.f32.mrf.mxu0
  %v436 = vadd.f32 %v387, %v435
  %v437 = vpop.f32.mrf.mxu0
  %v438 = vadd.f32 %v389, %v437
  %439 = vmatmul.bf16.gmra.mxu0 %v187
  %v440 = vpop.f32.mrf.mxu0
  %v441 = vadd.f32 %v392, %v440
  %v442 = vpop.f32.mrf.mxu0
  %v443 = vadd.f32 %v394, %v442
  %444 = vmatmul.bf16.gmra.mxu0 %v190
  %v445 = vpop.f32.mrf.mxu0
  %v446 = vadd.f32 %v397, %v445
  %v447 = vpop.f32.mrf.mxu0
  %v448 = vadd.f32 %v399, %v447
  %449 = vmatmul.bf16.gmra.mxu0 %v193
  %v450 = vpop.f32.mrf.mxu0
  %v451 = vadd.f32 %v402, %v450
  %v452 = vpop.f32.mrf.mxu0
  %v453 = vadd.f32 %v404, %v452
  %454 = vmatmul.bf16.gmra.mxu0 %v196
  %v455 = vpop.f32.mrf.mxu0
  %v456 = vadd.f32 %v407, %v455
  %v457 = vpop.f32.mrf.mxu0
  %v458 = vadd.f32 %v409, %v457
  %459 = vmatmul.bf16.gmra.mxu0 %v199
  %v460 = vpop.f32.mrf.mxu0
  %v461 = vadd.f32 %v412, %v460
  %v462 = vpop.f32.mrf.mxu0
  %v463 = vadd.f32 %v414, %v462
  %464 = vmatmul.bf16.gmra.mxu0 %v202
  %v465 = vpop.f32.mrf.mxu0
  %v466 = vadd.f32 %v417, %v465
  %v467 = vpop.f32.mrf.mxu0
  %v468 = vadd.f32 %v419, %v467
  %469 = vdwg.mxu0
  %470 = vmatpush.bf16.msra.mxu0 %v347
  %471 = vmatpush.bf16.msra.mxu0 %v346
  %472 = vmatpush.bf16.msra.mxu0 %v345
  %473 = vmatpush.bf16.msra.mxu0 %v344
  %474 = vmatpush.bf16.msra.mxu0 %v343
  %475 = vmatpush.bf16.msra.mxu0 %v342
  %476 = vmatpush.bf16.msra.mxu0 %v341
  %477 = vmatpush.bf16.msra.mxu0 %v340
  %478 = vmatmul.bf16.gmra.mxu0 %v182
  %v479 = vpop.f32.mrf.mxu0
  %v480 = vadd.f32 %v431, %v479
  %v481 = vpop.f32.mrf.mxu0
  %v482 = vadd.f32 %v433, %v481
  %483 = vmatmul.bf16.gmra.mxu0 %v185
  %v484 = vpop.f32.mrf.mxu0
  %v485 = vadd.f32 %v436, %v484
  %v486 = vpop.f32.mrf.mxu0
  %v487 = vadd.f32 %v438, %v486
  %488 = vmatmul.bf16.gmra.mxu0 %v188
  %v489 = vpop.f32.mrf.mxu0
  %v490 = vadd.f32 %v441, %v489
  %v491 = vpop.f32.mrf.mxu0
  %v492 = vadd.f32 %v443, %v491
  %493 = vmatmul.bf16.gmra.mxu0 %v191
  %v494 = vpop.f32.mrf.mxu0
  %v495 = vadd.f32 %v446, %v494
  %v496 = vpop.f32.mrf.mxu0
  %v497 = vadd.f32 %v448, %v496
  %498 = vmatmul.bf16.gmra.mxu0 %v194
  %v499 = vpop.f32.mrf.mxu0
  %v500 = vadd.f32 %v451, %v499
  %v501 = vpop.f32.mrf.mxu0
  %v502 = vadd.f32 %v453, %v501
  %503 = vmatmul.bf16.gmra.mxu0 %v197
  %v504 = vpop.f32.mrf.mxu0
  %v505 = vadd.f32 %v456, %v504
  %v506 = vpop.f32.mrf.mxu0
  %v507 = vadd.f32 %v458, %v506
  %508 = vmatmul.bf16.gmra.mxu0 %v200
  %v509 = vpop.f32.mrf.mxu0
  %v510 = vadd.f32 %v461, %v509
  %v511 = vpop.f32.mrf.mxu0
  %v512 = vadd.f32 %v463, %v511
  %513 = vmatmul.bf16.gmra.mxu0 %v203
  %v514 = vpop.f32.mrf.mxu0
  %v515 = vadd.f32 %v466, %v514
  %v516 = vpop.f32.mrf.mxu0
  %v517 = vadd.f32 %v468, %v516
  %518 = vdwg.mxu0
  %v519 = vld [vmem:[%s3] sm:$0xff]
  %v520 = vadd.f32 %v480, %v482
  %v521 = vadd.f32 %v520, %v485
  %v522 = vadd.f32 %v521, %v487
  %v523 = vadd.f32 %v522, %v490
  %v524 = vadd.f32 %v523, %v492
  %v525 = vadd.f32 %v524, %v495
  %v526 = vadd.f32 %v525, %v497
  %v527 = vadd.f32 %v526, %v500
  %v528 = vadd.f32 %v527, %v502
  %v529 = vadd.f32 %v528, %v505
  %v530 = vadd.f32 %v529, %v507
  %v531 = vadd.f32 %v530, %v510
  %v532 = vadd.f32 %v531, %v512
  %v533 = vadd.f32 %v532, %v515
  %v534 = vadd.f32 %v533, %v517
  %v535 = vadd.f32 %v519, %v534
  %536 = vst [vmem:[%s3] sm:$0xff] %v535
  %v537 = vld [vmem:[%s4] sm:$0xff]
  %v538 = vmul.f32 %v480, %v480
  %v539 = vmul.f32 %v482, %v482
  %v540 = vmul.f32 %v485, %v485
  %v541 = vmul.f32 %v487, %v487
  %v542 = vmul.f32 %v490, %v490
  %v543 = vmul.f32 %v492, %v492
  %v544 = vmul.f32 %v495, %v495
  %v545 = vmul.f32 %v497, %v497
  %v546 = vmul.f32 %v500, %v500
  %v547 = vmul.f32 %v502, %v502
  %v548 = vmul.f32 %v505, %v505
  %v549 = vmul.f32 %v507, %v507
  %v550 = vmul.f32 %v510, %v510
  %v551 = vmul.f32 %v512, %v512
  %v552 = vmul.f32 %v515, %v515
  %v553 = vmul.f32 %v517, %v517
  %v554 = vadd.f32 %v538, %v539
  %v555 = vadd.f32 %v554, %v540
  %v556 = vadd.f32 %v555, %v541
  %v557 = vadd.f32 %v556, %v542
  %v558 = vadd.f32 %v557, %v543
  %v559 = vadd.f32 %v558, %v544
  %v560 = vadd.f32 %v559, %v545
  %v561 = vadd.f32 %v560, %v546
  %v562 = vadd.f32 %v561, %v547
  %v563 = vadd.f32 %v562, %v548
  %v564 = vadd.f32 %v563, %v549
  %v565 = vadd.f32 %v564, %v550
  %v566 = vadd.f32 %v565, %v551
  %v567 = vadd.f32 %v566, %v552
  %v568 = vadd.f32 %v567, %v553
  %v569 = vadd.f32 %v537, %v568
  %570 = vst [vmem:[%s4] sm:$0xff] %v569
  %v571 = vpack.c.bf16 %v480, %v480
  %v572 = vpack.c.bf16 %v482, %v482
  %v573 = vpack.c.bf16 %v485, %v485
  %v574 = vpack.c.bf16 %v487, %v487
  %v575 = vpack.c.bf16 %v490, %v490
  %v576 = vpack.c.bf16 %v492, %v492
  %v577 = vpack.c.bf16 %v495, %v495
  %v578 = vpack.c.bf16 %v497, %v497
  %v579 = vpack.c.bf16 %v500, %v500
  %v580 = vpack.c.bf16 %v502, %v502
  %v581 = vpack.c.bf16 %v505, %v505
  %v582 = vpack.c.bf16 %v507, %v507
  %v583 = vpack.c.bf16 %v510, %v510
  %v584 = vpack.c.bf16 %v512, %v512
  %v585 = vpack.c.bf16 %v515, %v515
  %v586 = vpack.c.bf16 %v517, %v517
  %587 = vst [vmem:[%s2] sm:$0xf] %v571
  %588 = vst [vmem:[%s2 + $0x4] sm:$0xf] %v572
  %589 = vst [vmem:[%s2 + $0x8] sm:$0xf] %v573
  %590 = vst [vmem:[%s2 + $0xc] sm:$0xf] %v574
  %591 = vst [vmem:[%s2 + $0x10] sm:$0xf] %v575
  %592 = vst [vmem:[%s2 + $0x14] sm:$0xf] %v576
  %593 = vst [vmem:[%s2 + $0x18] sm:$0xf] %v577
  %594 = vst [vmem:[%s2 + $0x1c] sm:$0xf] %v578
  %595 = vst [vmem:[%s2 + $0x20] sm:$0xf] %v579
  %596 = vst [vmem:[%s2 + $0x24] sm:$0xf] %v580
  %597 = vst [vmem:[%s2 + $0x28] sm:$0xf] %v581
  %598 = vst [vmem:[%s2 + $0x2c] sm:$0xf] %v582
  %599 = vst [vmem:[%s2 + $0x30] sm:$0xf] %v583
  %600 = vst [vmem:[%s2 + $0x34] sm:$0xf] %v584
  %601 = vst [vmem:[%s2 + $0x38] sm:$0xf] %v585
  %602 = vst [vmem:[%s2 + $0x3c] sm:$0xf] %v586
  // Predicated region
  $region14: #{_lambda_.11} parent=0 // pred_check
    _
  $region15: #{_lambda_.11} parent=0 // pred_check_branch
    %604 = sbr.rel (0) target = $region17
  $region16: #{_lambda_.11} parent=0 // pred_region
    _
  $region17: #{_lambda_.11} parent=0 // pred_fallthru
    _
  // Predicated region
  $region18: #{_lambda_.11} parent=0 // pred_check
    _
  $region19: #{_lambda_.11} parent=0 // pred_check_branch
    %606 = sbr.rel (0) target = $region21
  $region20: #{_lambda_.11} parent=0 // pred_region
    _
  $region21: #{_lambda_.11} parent=0 // pred_fallthru
    _
  // Predicated region
  $region22: #{_lambda_.11} parent=0 // pred_check
    _
  $region23: #{_lambda_.11} parent=0 // pred_check_branch
    %608 = sbr.rel (0) target = $region25
  $region24: #{_lambda_.11} parent=0 // pred_region
    _
  $region25: #{_lambda_.11} parent=0 // pred_fallthru
    _
  // Predicated region
  $region26: #{_lambda_.11} parent=0 // pred_check
    _
  $region27: #{_lambda_.11} parent=0 // pred_check_branch
    %610 = sbr.rel (0) target = $region29
  $region28: #{_lambda_.11} parent=0 // pred_region
    _
  $region29: #{_lambda_.11} parent=0 // pred_fallthru
    _
  // Predicated region
  $region30: #{_lambda_.11} parent=0 // pred_check
    _
  $region31: #{_lambda_.11} parent=0 // pred_check_branch
    %612 = sbr.rel (0) target = $region33
  $region32: #{_lambda_.11} parent=0 // pred_region
    _
  $region33: #{_lambda_.11} parent=0 // pred_fallthru
    _
  // Predicated region
  $region34: #{_lambda_.11} parent=0 // pred_check
    _
  $region35: #{_lambda_.11} parent=0 // pred_check_branch
    %614 = sbr.rel (0) target = $region37
  $region36: #{_lambda_.11} parent=0 // pred_region
    _
  $region37: #{_lambda_.11} parent=0 // pred_fallthru
    _

// kernel: _lambda_.13
$region0: #{_lambda_.13}
  #allocation0 [shape = 'u32[]', space=smem, size = 0x4, offset = 0x4, fixed_abs, tag = 'smem constant byte address 0x4 - core index']
  #allocation1 [shape = 'u32[72,128]{1,0:T(1,128)}', space=vmem, size = 0x9000, scoped, tag = 'internal scratch']
  %s0 = inlined_call_operand.vmem [shape: bf16[512,256], index: 0, kind: input, shape index: {}]
  %s1 = inlined_call_operand.vmem [shape: bf16[256,128], index: 1, kind: input, shape index: {}]
  %s2 = inlined_call_operand.vmem [shape: bf16[512,128], index: 2, kind: output, shape index: {}]
  %s3 = sld [smem:[#allocation0]]
  $region18: #{_lambda_.13} parent=0
    _
  %s5 = ssub.s32 1, %s3
  %s6 = scalar_select 0, %s5, %s3
  // Predicated region
  $region2: #{_lambda_.13} parent=0 // pred_check
    _
  $region3: #{_lambda_.13} parent=0 // pred_check_branch
    %8 = sbr.rel (0) target = $region5
  $region4: #{_lambda_.13} parent=0 // pred_region
    _
  $region5: #{_lambda_.13} parent=0 // pred_fallthru
    _
  // Predicated region
  $region6: #{_lambda_.13} parent=0 // pred_check
    _
  $region7: #{_lambda_.13} parent=0 // pred_check_branch
    %10 = sbr.rel (0) target = $region9
  $region8: #{_lambda_.13} parent=0 // pred_region
    _
  $region9: #{_lambda_.13} parent=0 // pred_fallthru
    _
  %v11 = vld [vmem:[%s0] sm:$0xff]
  %v12 = vld [vmem:[%s0 + $0x8] sm:$0xff]
  %v13 = vld [vmem:[%s0 + $0x10] sm:$0xff]
  %v14 = vld [vmem:[%s0 + $0x18] sm:$0xff]
  %v15 = vld [vmem:[%s0 + $0x20] sm:$0xff]
  %v16 = vld [vmem:[%s0 + $0x28] sm:$0xff]
  %v17 = vld [vmem:[%s0 + $0x30] sm:$0xff]
  %v18 = vld [vmem:[%s0 + $0x38] sm:$0xff]
  %v19 = vld [vmem:[%s0 + $0x40] sm:$0xff]
  %v20 = vld [vmem:[%s0 + $0x48] sm:$0xff]
  %v21 = vld [vmem:[%s0 + $0x50] sm:$0xff]
  %v22 = vld [vmem:[%s0 + $0x58] sm:$0xff]
  %v23 = vld [vmem:[%s0 + $0x60] sm:$0xff]
  %v24 = vld [vmem:[%s0 + $0x68] sm:$0xff]
  %v25 = vld [vmem:[%s0 + $0x70] sm:$0xff]
  %v26 = vld [vmem:[%s0 + $0x78] sm:$0xff]
  %v27 = vld [vmem:[%s0 + $0x80] sm:$0xff]
  %v28 = vld [vmem:[%s0 + $0x88] sm:$0xff]
  %v29 = vld [vmem:[%s0 + $0x90] sm:$0xff]
  %v30 = vld [vmem:[%s0 + $0x98] sm:$0xff]
  %v31 = vld [vmem:[%s0 + $0xa0] sm:$0xff]
  %v32 = vld [vmem:[%s0 + $0xa8] sm:$0xff]
  %v33 = vld [vmem:[%s0 + $0xb0] sm:$0xff]
  %v34 = vld [vmem:[%s0 + $0xb8] sm:$0xff]
  %v35 = vld [vmem:[%s0 + $0xc0] sm:$0xff]
  %v36 = vld [vmem:[%s0 + $0xc8] sm:$0xff]
  %v37 = vld [vmem:[%s0 + $0xd0] sm:$0xff]
  %v38 = vld [vmem:[%s0 + $0xd8] sm:$0xff]
  %v39 = vld [vmem:[%s0 + $0xe0] sm:$0xff]
  %v40 = vld [vmem:[%s0 + $0xe8] sm:$0xff]
  %v41 = vld [vmem:[%s0 + $0xf0] sm:$0xff]
  %v42 = vld [vmem:[%s0 + $0xf8] sm:$0xff]
  %v43 = vld [vmem:[%s0 + $0x100] sm:$0xff]
  %v44 = vld [vmem:[%s0 + $0x108] sm:$0xff]
  %v45 = vld [vmem:[%s0 + $0x110] sm:$0xff]
  %v46 = vld [vmem:[%s0 + $0x118] sm:$0xff]
  %v47 = vld [vmem:[%s0 + $0x120] sm:$0xff]
  %v48 = vld [vmem:[%s0 + $0x128] sm:$0xff]
  %v49 = vld [vmem:[%s0 + $0x130] sm:$0xff]
  %v50 = vld [vmem:[%s0 + $0x138] sm:$0xff]
  %v51 = vld [vmem:[%s0 + $0x140] sm:$0xff]
  %v52 = vld [vmem:[%s0 + $0x148] sm:$0xff]
  %v53 = vld [vmem:[%s0 + $0x150] sm:$0xff]
  %v54 = vld [vmem:[%s0 + $0x158] sm:$0xff]
  %v55 = vld [vmem:[%s0 + $0x160] sm:$0xff]
  %v56 = vld [vmem:[%s0 + $0x168] sm:$0xff]
  %v57 = vld [vmem:[%s0 + $0x170] sm:$0xff]
  %v58 = vld [vmem:[%s0 + $0x178] sm:$0xff]
  %v59 = vld [vmem:[%s0 + $0x180] sm:$0xff]
  %v60 = vld [vmem:[%s0 + $0x188] sm:$0xff]
  %v61 = vld [vmem:[%s0 + $0x190] sm:$0xff]
  %v62 = vld [vmem:[%s0 + $0x198] sm:$0xff]
  %v63 = vld [vmem:[%s0 + $0x1a0] sm:$0xff]
  %v64 = vld [vmem:[%s0 + $0x1a8] sm:$0xff]
  %v65 = vld [vmem:[%s0 + $0x1b0] sm:$0xff]
  %v66 = vld [vmem:[%s0 + $0x1b8] sm:$0xff]
  %v67 = vld [vmem:[%s0 + $0x1c0] sm:$0xff]
  %v68 = vld [vmem:[%s0 + $0x1c8] sm:$0xff]
  %v69 = vld [vmem:[%s0 + $0x1d0] sm:$0xff]
  %v70 = vld [vmem:[%s0 + $0x1d8] sm:$0xff]
  %v71 = vld [vmem:[%s0 + $0x1e0] sm:$0xff]
  %v72 = vld [vmem:[%s0 + $0x1e8] sm:$0xff]
  %v73 = vld [vmem:[%s0 + $0x1f0] sm:$0xff]
  %v74 = vld [vmem:[%s0 + $0x1f8] sm:$0xff]
  %v75 = vld [vmem:[%s1] sm:$0xf]
  %v76 = vld [vmem:[%s1 + $0x4] sm:$0xf]
  %v77 = vld [vmem:[%s1 + $0x8] sm:$0xf]
  %v78 = vld [vmem:[%s1 + $0xc] sm:$0xf]
  %v79 = vld [vmem:[%s1 + $0x10] sm:$0xf]
  %v80 = vld [vmem:[%s1 + $0x14] sm:$0xf]
  %v81 = vld [vmem:[%s1 + $0x18] sm:$0xf]
  %v82 = vld [vmem:[%s1 + $0x1c] sm:$0xf]
  %v83 = vld [vmem:[%s1 + $0x20] sm:$0xf]
  %v84 = vld [vmem:[%s1 + $0x24] sm:$0xf]
  %v85 = vld [vmem:[%s1 + $0x28] sm:$0xf]
  %v86 = vld [vmem:[%s1 + $0x2c] sm:$0xf]
  %v87 = vld [vmem:[%s1 + $0x30] sm:$0xf]
  %v88 = vld [vmem:[%s1 + $0x34] sm:$0xf]
  %v89 = vld [vmem:[%s1 + $0x38] sm:$0xf]
  %v90 = vld [vmem:[%s1 + $0x3c] sm:$0xf]
  %v91 = vld [vmem:[%s1 + $0x40] sm:$0xf]
  %v92 = vld [vmem:[%s1 + $0x44] sm:$0xf]
  %v93 = vld [vmem:[%s1 + $0x48] sm:$0xf]
  %v94 = vld [vmem:[%s1 + $0x4c] sm:$0xf]
  %v95 = vld [vmem:[%s1 + $0x50] sm:$0xf]
  %v96 = vld [vmem:[%s1 + $0x54] sm:$0xf]
  %v97 = vld [vmem:[%s1 + $0x58] sm:$0xf]
  %v98 = vld [vmem:[%s1 + $0x5c] sm:$0xf]
  %v99 = vld [vmem:[%s1 + $0x60] sm:$0xf]
  %v100 = vld [vmem:[%s1 + $0x64] sm:$0xf]
  %v101 = vld [vmem:[%s1 + $0x68] sm:$0xf]
  %v102 = vld [vmem:[%s1 + $0x6c] sm:$0xf]
  %v103 = vld [vmem:[%s1 + $0x70] sm:$0xf]
  %v104 = vld [vmem:[%s1 + $0x74] sm:$0xf]
  %v105 = vld [vmem:[%s1 + $0x78] sm:$0xf]
  %v106 = vld [vmem:[%s1 + $0x7c] sm:$0xf]
  %v171 = vunpack.c.l.b16 %v11
  %v172 = vunpack.c.h.b16 %v11
  %v173 = vunpack.c.l.b16 %v12
  %v174 = vunpack.c.h.b16 %v12
  %v175 = vunpack.c.l.b16 %v13
  %v176 = vunpack.c.h.b16 %v13
  %v177 = vunpack.c.l.b16 %v14
  %v178 = vunpack.c.h.b16 %v14
  %v179 = vunpack.c.l.b16 %v15
  %v180 = vunpack.c.h.b16 %v15
  %v181 = vunpack.c.l.b16 %v16
  %v182 = vunpack.c.h.b16 %v16
  %v183 = vunpack.c.l.b16 %v17
  %v184 = vunpack.c.h.b16 %v17
  %v185 = vunpack.c.l.b16 %v18
  %v186 = vunpack.c.h.b16 %v18
  %v187 = vunpack.c.l.b16 %v19
  %v188 = vunpack.c.h.b16 %v19
  %v189 = vunpack.c.l.b16 %v20
  %v190 = vunpack.c.h.b16 %v20
  %v191 = vunpack.c.l.b16 %v21
  %v192 = vunpack.c.h.b16 %v21
  %v193 = vunpack.c.l.b16 %v22
  %v194 = vunpack.c.h.b16 %v22
  %v195 = vunpack.c.l.b16 %v23
  %v196 = vunpack.c.h.b16 %v23
  %v197 = vunpack.c.l.b16 %v24
  %v198 = vunpack.c.h.b16 %v24
  %v199 = vunpack.c.l.b16 %v25
  %v200 = vunpack.c.h.b16 %v25
  %v201 = vunpack.c.l.b16 %v26
  %v202 = vunpack.c.h.b16 %v26
  %v203 = vunpack.c.l.b16 %v27
  %v204 = vunpack.c.h.b16 %v27
  %v205 = vunpack.c.l.b16 %v28
  %v206 = vunpack.c.h.b16 %v28
  %v207 = vunpack.c.l.b16 %v29
  %v208 = vunpack.c.h.b16 %v29
  %v209 = vunpack.c.l.b16 %v30
  %v210 = vunpack.c.h.b16 %v30
  %v211 = vunpack.c.l.b16 %v31
  %v212 = vunpack.c.h.b16 %v31
  %v213 = vunpack.c.l.b16 %v32
  %v214 = vunpack.c.h.b16 %v32
  %v215 = vunpack.c.l.b16 %v33
  %v216 = vunpack.c.h.b16 %v33
  %v217 = vunpack.c.l.b16 %v34
  %v218 = vunpack.c.h.b16 %v34
  %v219 = vunpack.c.l.b16 %v35
  %v220 = vunpack.c.h.b16 %v35
  %v221 = vunpack.c.l.b16 %v36
  %v222 = vunpack.c.h.b16 %v36
  %v223 = vunpack.c.l.b16 %v37
  %v224 = vunpack.c.h.b16 %v37
  %v225 = vunpack.c.l.b16 %v38
  %v226 = vunpack.c.h.b16 %v38
  %v227 = vunpack.c.l.b16 %v39
  %v228 = vunpack.c.h.b16 %v39
  %v229 = vunpack.c.l.b16 %v40
  %v230 = vunpack.c.h.b16 %v40
  %v231 = vunpack.c.l.b16 %v41
  %v232 = vunpack.c.h.b16 %v41
  %v233 = vunpack.c.l.b16 %v42
  %v234 = vunpack.c.h.b16 %v42
  %v235 = vunpack.c.l.b16 %v43
  %v236 = vunpack.c.h.b16 %v43
  %v237 = vunpack.c.l.b16 %v44
  %v238 = vunpack.c.h.b16 %v44
  %v239 = vunpack.c.l.b16 %v45
  %v240 = vunpack.c.h.b16 %v45
  %v241 = vunpack.c.l.b16 %v46
  %v242 = vunpack.c.h.b16 %v46
  %v243 = vunpack.c.l.b16 %v47
  %v244 = vunpack.c.h.b16 %v47
  %v245 = vunpack.c.l.b16 %v48
  %v246 = vunpack.c.h.b16 %v48
  %v247 = vunpack.c.l.b16 %v49
  %v248 = vunpack.c.h.b16 %v49
  %v249 = vunpack.c.l.b16 %v50
  %v250 = vunpack.c.h.b16 %v50
  %v251 = vunpack.c.l.b16 %v51
  %v252 = vunpack.c.h.b16 %v51
  %v253 = vunpack.c.l.b16 %v52
  %v254 = vunpack.c.h.b16 %v52
  %v255 = vunpack.c.l.b16 %v53
  %v256 = vunpack.c.h.b16 %v53
  %v257 = vunpack.c.l.b16 %v54
  %v258 = vunpack.c.h.b16 %v54
  %v259 = vunpack.c.l.b16 %v55
  %v260 = vunpack.c.h.b16 %v55
  %v261 = vunpack.c.l.b16 %v56
  %v262 = vunpack.c.h.b16 %v56
  %v263 = vunpack.c.l.b16 %v57
  %v264 = vunpack.c.h.b16 %v57
  %v265 = vunpack.c.l.b16 %v58
  %v266 = vunpack.c.h.b16 %v58
  %v267 = vunpack.c.l.b16 %v59
  %v268 = vunpack.c.h.b16 %v59
  %v269 = vunpack.c.l.b16 %v60
  %v270 = vunpack.c.h.b16 %v60
  %v271 = vunpack.c.l.b16 %v61
  %v272 = vunpack.c.h.b16 %v61
  %v273 = vunpack.c.l.b16 %v62
  %v274 = vunpack.c.h.b16 %v62
  %v275 = vunpack.c.l.b16 %v63
  %v276 = vunpack.c.h.b16 %v63
  %v277 = vunpack.c.l.b16 %v64
  %v278 = vunpack.c.h.b16 %v64
  %v279 = vunpack.c.l.b16 %v65
  %v280 = vunpack.c.h.b16 %v65
  %v281 = vunpack.c.l.b16 %v66
  %v282 = vunpack.c.h.b16 %v66
  %v283 = vunpack.c.l.b16 %v67
  %v284 = vunpack.c.h.b16 %v67
  %v285 = vunpack.c.l.b16 %v68
  %v286 = vunpack.c.h.b16 %v68
  %v287 = vunpack.c.l.b16 %v69
  %v288 = vunpack.c.h.b16 %v69
  %v289 = vunpack.c.l.b16 %v70
  %v290 = vunpack.c.h.b16 %v70
  %v291 = vunpack.c.l.b16 %v71
  %v292 = vunpack.c.h.b16 %v71
  %v293 = vunpack.c.l.b16 %v72
  %v294 = vunpack.c.h.b16 %v72
  %v295 = vunpack.c.l.b16 %v73
  %v296 = vunpack.c.h.b16 %v73
  %v297 = vunpack.c.l.b16 %v74
  %v298 = vunpack.c.h.b16 %v74
  %v299 = vpack.c.b16 %v173, %v171
  %v300 = vpack.c.b16 %v174, %v172
  %v301 = vpack.c.b16 %v177, %v175
  %v302 = vpack.c.b16 %v178, %v176
  %v303 = vpack.c.b16 %v181, %v179
  %v304 = vpack.c.b16 %v182, %v180
  %v305 = vpack.c.b16 %v185, %v183
  %v306 = vpack.c.b16 %v186, %v184
  %v307 = vpack.c.b16 %v189, %v187
  %v308 = vpack.c.b16 %v190, %v188
  %v309 = vpack.c.b16 %v193, %v191
  %v310 = vpack.c.b16 %v194, %v192
  %v311 = vpack.c.b16 %v197, %v195
  %v312 = vpack.c.b16 %v198, %v196
  %v313 = vpack.c.b16 %v201, %v199
  %v314 = vpack.c.b16 %v202, %v200
  %v315 = vpack.c.b16 %v205, %v203
  %v316 = vpack.c.b16 %v206, %v204
  %v317 = vpack.c.b16 %v209, %v207
  %v318 = vpack.c.b16 %v210, %v208
  %v319 = vpack.c.b16 %v213, %v211
  %v320 = vpack.c.b16 %v214, %v212
  %v321 = vpack.c.b16 %v217, %v215
  %v322 = vpack.c.b16 %v218, %v216
  %v323 = vpack.c.b16 %v221, %v219
  %v324 = vpack.c.b16 %v222, %v220
  %v325 = vpack.c.b16 %v225, %v223
  %v326 = vpack.c.b16 %v226, %v224
  %v327 = vpack.c.b16 %v229, %v227
  %v328 = vpack.c.b16 %v230, %v228
  %v329 = vpack.c.b16 %v233, %v231
  %v330 = vpack.c.b16 %v234, %v232
  %v331 = vpack.c.b16 %v237, %v235
  %v332 = vpack.c.b16 %v238, %v236
  %v333 = vpack.c.b16 %v241, %v239
  %v334 = vpack.c.b16 %v242, %v240
  %v335 = vpack.c.b16 %v245, %v243
  %v336 = vpack.c.b16 %v246, %v244
  %v337 = vpack.c.b16 %v249, %v247
  %v338 = vpack.c.b16 %v250, %v248
  %v339 = vpack.c.b16 %v253, %v251
  %v340 = vpack.c.b16 %v254, %v252
  %v341 = vpack.c.b16 %v257, %v255
  %v342 = vpack.c.b16 %v258, %v256
  %v343 = vpack.c.b16 %v261, %v259
  %v344 = vpack.c.b16 %v262, %v260
  %v345 = vpack.c.b16 %v265, %v263
  %v346 = vpack.c.b16 %v266, %v264
  %v347 = vpack.c.b16 %v269, %v267
  %v348 = vpack.c.b16 %v270, %v268
  %v349 = vpack.c.b16 %v273, %v271
  %v350 = vpack.c.b16 %v274, %v272
  %v351 = vpack.c.b16 %v277, %v275
  %v352 = vpack.c.b16 %v278, %v276
  %v353 = vpack.c.b16 %v281, %v279
  %v354 = vpack.c.b16 %v282, %v280
  %v355 = vpack.c.b16 %v285, %v283
  %v356 = vpack.c.b16 %v286, %v284
  %v357 = vpack.c.b16 %v289, %v287
  %v358 = vpack.c.b16 %v290, %v288
  %v359 = vpack.c.b16 %v293, %v291
  %v360 = vpack.c.b16 %v294, %v292
  %v361 = vpack.c.b16 %v297, %v295
  %v362 = vpack.c.b16 %v298, %v296
  %v459 = vunpack.c.l.b16 %v75
  %v460 = vunpack.c.l.b16 %v76
  %v461 = vunpack.c.l.b16 %v77
  %v462 = vunpack.c.l.b16 %v78
  %v463 = vunpack.c.l.b16 %v79
  %v464 = vunpack.c.l.b16 %v80
  %v465 = vunpack.c.l.b16 %v81
  %v466 = vunpack.c.l.b16 %v82
  %v467 = vunpack.c.l.b16 %v83
  %v468 = vunpack.c.l.b16 %v84
  %v469 = vunpack.c.l.b16 %v85
  %v470 = vunpack.c.l.b16 %v86
  %v471 = vunpack.c.l.b16 %v87
  %v472 = vunpack.c.l.b16 %v88
  %v473 = vunpack.c.l.b16 %v89
  %v474 = vunpack.c.l.b16 %v90
  %v475 = vunpack.c.l.b16 %v91
  %v476 = vunpack.c.l.b16 %v92
  %v477 = vunpack.c.l.b16 %v93
  %v478 = vunpack.c.l.b16 %v94
  %v479 = vunpack.c.l.b16 %v95
  %v480 = vunpack.c.l.b16 %v96
  %v481 = vunpack.c.l.b16 %v97
  %v482 = vunpack.c.l.b16 %v98
  %v483 = vunpack.c.l.b16 %v99
  %v484 = vunpack.c.l.b16 %v100
  %v485 = vunpack.c.l.b16 %v101
  %v486 = vunpack.c.l.b16 %v102
  %v487 = vunpack.c.l.b16 %v103
  %v488 = vunpack.c.l.b16 %v104
  %v489 = vunpack.c.l.b16 %v105
  %v490 = vunpack.c.l.b16 %v106
  %v491 = vpack.c.b16 %v460, %v459
  %v492 = vpack.c.b16 %v462, %v461
  %v493 = vpack.c.b16 %v464, %v463
  %v494 = vpack.c.b16 %v466, %v465
  %v495 = vpack.c.b16 %v468, %v467
  %v496 = vpack.c.b16 %v470, %v469
  %v497 = vpack.c.b16 %v472, %v471
  %v498 = vpack.c.b16 %v474, %v473
  %v499 = vpack.c.b16 %v476, %v475
  %v500 = vpack.c.b16 %v478, %v477
  %v501 = vpack.c.b16 %v480, %v479
  %v502 = vpack.c.b16 %v482, %v481
  %v503 = vpack.c.b16 %v484, %v483
  %v504 = vpack.c.b16 %v486, %v485
  %v505 = vpack.c.b16 %v488, %v487
  %v506 = vpack.c.b16 %v490, %v489
  %523 = vmatpush.bf16.msra.mxu0 %v498
  %524 = vmatpush.bf16.msra.mxu0 %v497
  %525 = vmatpush.bf16.msra.mxu0 %v496
  %526 = vmatpush.bf16.msra.mxu0 %v495
  %527 = vmatpush.bf16.msra.mxu0 %v494
  %528 = vmatpush.bf16.msra.mxu0 %v493
  %529 = vmatpush.bf16.msra.mxu0 %v492
  %530 = vmatpush.bf16.msra.mxu0 %v491
  %531 = vmatmul.bf16.gmra.mxu0 %v299
  %v532 = vpop.f32.mrf.mxu0
  %v533 = vadd.f32 0.0, %v532
  %v534 = vpop.f32.mrf.mxu0
  %v535 = vadd.f32 0.0, %v534
  %536 = vmatmul.bf16.gmra.mxu0 %v301
  %v537 = vpop.f32.mrf.mxu0
  %v538 = vadd.f32 0.0, %v537
  %v539 = vpop.f32.mrf.mxu0
  %v540 = vadd.f32 0.0, %v539
  %541 = vmatmul.bf16.gmra.mxu0 %v303
  %v542 = vpop.f32.mrf.mxu0
  %v543 = vadd.f32 0.0, %v542
  %v544 = vpop.f32.mrf.mxu0
  %v545 = vadd.f32 0.0, %v544
  %546 = vmatmul.bf16.gmra.mxu0 %v305
  %v547 = vpop.f32.mrf.mxu0
  %v548 = vadd.f32 0.0, %v547
  %v549 = vpop.f32.mrf.mxu0
  %v550 = vadd.f32 0.0, %v549
  %551 = vmatmul.bf16.gmra.mxu0 %v307
  %v552 = vpop.f32.mrf.mxu0
  %v553 = vadd.f32 0.0, %v552
  %v554 = vpop.f32.mrf.mxu0
  %v555 = vadd.f32 0.0, %v554
  %556 = vmatmul.bf16.gmra.mxu0 %v309
  %v557 = vpop.f32.mrf.mxu0
  %v558 = vadd.f32 0.0, %v557
  %v559 = vpop.f32.mrf.mxu0
  %v560 = vadd.f32 0.0, %v559
  %561 = vmatmul.bf16.gmra.mxu0 %v311
  %v562 = vpop.f32.mrf.mxu0
  %v563 = vadd.f32 0.0, %v562
  %v564 = vpop.f32.mrf.mxu0
  %v565 = vadd.f32 0.0, %v564
  %566 = vmatmul.bf16.gmra.mxu0 %v313
  %v567 = vpop.f32.mrf.mxu0
  %v568 = vadd.f32 0.0, %v567
  %v569 = vpop.f32.mrf.mxu0
  %v570 = vadd.f32 0.0, %v569
  %571 = vmatmul.bf16.gmra.mxu0 %v315
  %v572 = vpop.f32.mrf.mxu0
  %v573 = vadd.f32 0.0, %v572
  %v574 = vpop.f32.mrf.mxu0
  %v575 = vadd.f32 0.0, %v574
  %576 = vmatmul.bf16.gmra.mxu0 %v317
  %v577 = vpop.f32.mrf.mxu0
  %v578 = vadd.f32 0.0, %v577
  %v579 = vpop.f32.mrf.mxu0
  %v580 = vadd.f32 0.0, %v579
  %581 = vmatmul.bf16.gmra.mxu0 %v319
  %v582 = vpop.f32.mrf.mxu0
  %v583 = vadd.f32 0.0, %v582
  %v584 = vpop.f32.mrf.mxu0
  %v585 = vadd.f32 0.0, %v584
  %586 = vmatmul.bf16.gmra.mxu0 %v321
  %v587 = vpop.f32.mrf.mxu0
  %v588 = vadd.f32 0.0, %v587
  %v589 = vpop.f32.mrf.mxu0
  %v590 = vadd.f32 0.0, %v589
  %591 = vmatmul.bf16.gmra.mxu0 %v323
  %v592 = vpop.f32.mrf.mxu0
  %v593 = vadd.f32 0.0, %v592
  %v594 = vpop.f32.mrf.mxu0
  %v595 = vadd.f32 0.0, %v594
  %596 = vmatmul.bf16.gmra.mxu0 %v325
  %v597 = vpop.f32.mrf.mxu0
  %v598 = vadd.f32 0.0, %v597
  %v599 = vpop.f32.mrf.mxu0
  %v600 = vadd.f32 0.0, %v599
  %601 = vmatmul.bf16.gmra.mxu0 %v327
  %v602 = vpop.f32.mrf.mxu0
  %v603 = vadd.f32 0.0, %v602
  %v604 = vpop.f32.mrf.mxu0
  %v605 = vadd.f32 0.0, %v604
  %606 = vmatmul.bf16.gmra.mxu0 %v329
  %v607 = vpop.f32.mrf.mxu0
  %v608 = vadd.f32 0.0, %v607
  %v609 = vpop.f32.mrf.mxu0
  %v610 = vadd.f32 0.0, %v609
  %611 = vmatmul.bf16.gmra.mxu0 %v331
  %v612 = vpop.f32.mrf.mxu0
  %v613 = vadd.f32 0.0, %v612
  %v614 = vpop.f32.mrf.mxu0
  %v615 = vadd.f32 0.0, %v614
  %616 = vmatmul.bf16.gmra.mxu0 %v333
  %v617 = vpop.f32.mrf.mxu0
  %v618 = vadd.f32 0.0, %v617
  %v619 = vpop.f32.mrf.mxu0
  %v620 = vadd.f32 0.0, %v619
  %621 = vmatmul.bf16.gmra.mxu0 %v335
  %v622 = vpop.f32.mrf.mxu0
  %v623 = vadd.f32 0.0, %v622
  %v624 = vpop.f32.mrf.mxu0
  %v625 = vadd.f32 0.0, %v624
  %626 = vmatmul.bf16.gmra.mxu0 %v337
  %v627 = vpop.f32.mrf.mxu0
  %v628 = vadd.f32 0.0, %v627
  %v629 = vpop.f32.mrf.mxu0
  %v630 = vadd.f32 0.0, %v629
  %631 = vmatmul.bf16.gmra.mxu0 %v339
  %v632 = vpop.f32.mrf.mxu0
  %v633 = vadd.f32 0.0, %v632
  %v634 = vpop.f32.mrf.mxu0
  %v635 = vadd.f32 0.0, %v634
  %636 = vmatmul.bf16.gmra.mxu0 %v341
  %v637 = vpop.f32.mrf.mxu0
  %v638 = vadd.f32 0.0, %v637
  %v639 = vpop.f32.mrf.mxu0
  %v640 = vadd.f32 0.0, %v639
  %641 = vmatmul.bf16.gmra.mxu0 %v343
  %v642 = vpop.f32.mrf.mxu0
  %v643 = vadd.f32 0.0, %v642
  %v644 = vpop.f32.mrf.mxu0
  %v645 = vadd.f32 0.0, %v644
  %646 = vmatmul.bf16.gmra.mxu0 %v345
  %v647 = vpop.f32.mrf.mxu0
  %v648 = vadd.f32 0.0, %v647
  %v649 = vpop.f32.mrf.mxu0
  %v650 = vadd.f32 0.0, %v649
  %651 = vmatmul.bf16.gmra.mxu0 %v347
  %v652 = vpop.f32.mrf.mxu0
  %v653 = vadd.f32 0.0, %v652
  %v654 = vpop.f32.mrf.mxu0
  %v655 = vadd.f32 0.0, %v654
  %656 = vmatmul.bf16.gmra.mxu0 %v349
  %v657 = vpop.f32.mrf.mxu0
  %v658 = vadd.f32 0.0, %v657
  %v659 = vpop.f32.mrf.mxu0
  %v660 = vadd.f32 0.0, %v659
  %661 = vmatmul.bf16.gmra.mxu0 %v351
  %v662 = vpop.f32.mrf.mxu0
  %v663 = vadd.f32 0.0, %v662
  %v664 = vpop.f32.mrf.mxu0
  %v665 = vadd.f32 0.0, %v664
  %666 = vmatmul.bf16.gmra.mxu0 %v353
  %v667 = vpop.f32.mrf.mxu0
  %v668 = vadd.f32 0.0, %v667
  %v669 = vpop.f32.mrf.mxu0
  %v670 = vadd.f32 0.0, %v669
  %671 = vmatmul.bf16.gmra.mxu0 %v355
  %v672 = vpop.f32.mrf.mxu0
  %v673 = vadd.f32 0.0, %v672
  %v674 = vpop.f32.mrf.mxu0
  %v675 = vadd.f32 0.0, %v674
  %676 = vmatmul.bf16.gmra.mxu0 %v357
  %v677 = vpop.f32.mrf.mxu0
  %v678 = vadd.f32 0.0, %v677
  %v679 = vpop.f32.mrf.mxu0
  %v680 = vadd.f32 0.0, %v679
  %681 = vmatmul.bf16.gmra.mxu0 %v359
  %v682 = vpop.f32.mrf.mxu0
  %v683 = vadd.f32 0.0, %v682
  %v684 = vpop.f32.mrf.mxu0
  %v685 = vadd.f32 0.0, %v684
  %686 = vmatmul.bf16.gmra.mxu0 %v361
  %v687 = vpop.f32.mrf.mxu0
  %v688 = vadd.f32 0.0, %v687
  %v689 = vpop.f32.mrf.mxu0
  %v690 = vadd.f32 0.0, %v689
  %691 = vdwg.mxu0
  %692 = vmatpush.bf16.msra.mxu0 %v506
  %693 = vmatpush.bf16.msra.mxu0 %v505
  %694 = vmatpush.bf16.msra.mxu0 %v504
  %695 = vmatpush.bf16.msra.mxu0 %v503
  %696 = vmatpush.bf16.msra.mxu0 %v502
  %697 = vmatpush.bf16.msra.mxu0 %v501
  %698 = vmatpush.bf16.msra.mxu0 %v500
  %699 = vmatpush.bf16.msra.mxu0 %v499
  %700 = vmatmul.bf16.gmra.mxu0 %v300
  %v701 = vpop.f32.mrf.mxu0
  %v702 = vadd.f32 %v533, %v701
  %v703 = vpop.f32.mrf.mxu0
  %v704 = vadd.f32 %v535, %v703
  %705 = vmatmul.bf16.gmra.mxu0 %v302
  %v706 = vpop.f32.mrf.mxu0
  %v707 = vadd.f32 %v538, %v706
  %v708 = vpop.f32.mrf.mxu0
  %v709 = vadd.f32 %v540, %v708
  %710 = vmatmul.bf16.gmra.mxu0 %v304
  %v711 = vpop.f32.mrf.mxu0
  %v712 = vadd.f32 %v543, %v711
  %v713 = vpop.f32.mrf.mxu0
  %v714 = vadd.f32 %v545, %v713
  %715 = vmatmul.bf16.gmra.mxu0 %v306
  %v716 = vpop.f32.mrf.mxu0
  %v717 = vadd.f32 %v548, %v716
  %v718 = vpop.f32.mrf.mxu0
  %v719 = vadd.f32 %v550, %v718
  %720 = vmatmul.bf16.gmra.mxu0 %v308
  %v721 = vpop.f32.mrf.mxu0
  %v722 = vadd.f32 %v553, %v721
  %v723 = vpop.f32.mrf.mxu0
  %v724 = vadd.f32 %v555, %v723
  %725 = vmatmul.bf16.gmra.mxu0 %v310
  %v726 = vpop.f32.mrf.mxu0
  %v727 = vadd.f32 %v558, %v726
  %v728 = vpop.f32.mrf.mxu0
  %v729 = vadd.f32 %v560, %v728
  %730 = vmatmul.bf16.gmra.mxu0 %v312
  %v731 = vpop.f32.mrf.mxu0
  %v732 = vadd.f32 %v563, %v731
  %v733 = vpop.f32.mrf.mxu0
  %v734 = vadd.f32 %v565, %v733
  %735 = vmatmul.bf16.gmra.mxu0 %v314
  %v736 = vpop.f32.mrf.mxu0
  %v737 = vadd.f32 %v568, %v736
  %v738 = vpop.f32.mrf.mxu0
  %v739 = vadd.f32 %v570, %v738
  %740 = vmatmul.bf16.gmra.mxu0 %v316
  %v741 = vpop.f32.mrf.mxu0
  %v742 = vadd.f32 %v573, %v741
  %v743 = vpop.f32.mrf.mxu0
  %v744 = vadd.f32 %v575, %v743
  %745 = vmatmul.bf16.gmra.mxu0 %v318
  %v746 = vpop.f32.mrf.mxu0
  %v747 = vadd.f32 %v578, %v746
  %v748 = vpop.f32.mrf.mxu0
  %v749 = vadd.f32 %v580, %v748
  %750 = vmatmul.bf16.gmra.mxu0 %v320
  %v751 = vpop.f32.mrf.mxu0
  %v752 = vadd.f32 %v583, %v751
  %v753 = vpop.f32.mrf.mxu0
  %v754 = vadd.f32 %v585, %v753
  %755 = vmatmul.bf16.gmra.mxu0 %v322
  %v756 = vpop.f32.mrf.mxu0
  %v757 = vadd.f32 %v588, %v756
  %v758 = vpop.f32.mrf.mxu0
  %v759 = vadd.f32 %v590, %v758
  %760 = vmatmul.bf16.gmra.mxu0 %v324
  %v761 = vpop.f32.mrf.mxu0
  %v762 = vadd.f32 %v593, %v761
  %v763 = vpop.f32.mrf.mxu0
  %v764 = vadd.f32 %v595, %v763
  %765 = vmatmul.bf16.gmra.mxu0 %v326
  %v766 = vpop.f32.mrf.mxu0
  %v767 = vadd.f32 %v598, %v766
  %v768 = vpop.f32.mrf.mxu0
  %v769 = vadd.f32 %v600, %v768
  %770 = vmatmul.bf16.gmra.mxu0 %v328
  %v771 = vpop.f32.mrf.mxu0
  %v772 = vadd.f32 %v603, %v771
  %v773 = vpop.f32.mrf.mxu0
  %v774 = vadd.f32 %v605, %v773
  %775 = vmatmul.bf16.gmra.mxu0 %v330
  %v776 = vpop.f32.mrf.mxu0
  %v777 = vadd.f32 %v608, %v776
  %v778 = vpop.f32.mrf.mxu0
  %v779 = vadd.f32 %v610, %v778
  %780 = vmatmul.bf16.gmra.mxu0 %v332
  %v781 = vpop.f32.mrf.mxu0
  %v782 = vadd.f32 %v613, %v781
  %v783 = vpop.f32.mrf.mxu0
  %v784 = vadd.f32 %v615, %v783
  %785 = vmatmul.bf16.gmra.mxu0 %v334
  %v786 = vpop.f32.mrf.mxu0
  %v787 = vadd.f32 %v618, %v786
  %v788 = vpop.f32.mrf.mxu0
  %v789 = vadd.f32 %v620, %v788
  %790 = vmatmul.bf16.gmra.mxu0 %v336
  %v791 = vpop.f32.mrf.mxu0
  %v792 = vadd.f32 %v623, %v791
  %v793 = vpop.f32.mrf.mxu0
  %v794 = vadd.f32 %v625, %v793
  %795 = vmatmul.bf16.gmra.mxu0 %v338
  %v796 = vpop.f32.mrf.mxu0
  %v797 = vadd.f32 %v628, %v796
  %v798 = vpop.f32.mrf.mxu0
  %v799 = vadd.f32 %v630, %v798
  %800 = vmatmul.bf16.gmra.mxu0 %v340
  %v801 = vpop.f32.mrf.mxu0
  %v802 = vadd.f32 %v633, %v801
  %v803 = vpop.f32.mrf.mxu0
  %v804 = vadd.f32 %v635, %v803
  %805 = vmatmul.bf16.gmra.mxu0 %v342
  %v806 = vpop.f32.mrf.mxu0
  %v807 = vadd.f32 %v638, %v806
  %v808 = vpop.f32.mrf.mxu0
  %v809 = vadd.f32 %v640, %v808
  %810 = vmatmul.bf16.gmra.mxu0 %v344
  %v811 = vpop.f32.mrf.mxu0
  %v812 = vadd.f32 %v643, %v811
  %v813 = vpop.f32.mrf.mxu0
  %v814 = vadd.f32 %v645, %v813
  %815 = vmatmul.bf16.gmra.mxu0 %v346
  %v816 = vpop.f32.mrf.mxu0
  %v817 = vadd.f32 %v648, %v816
  %v818 = vpop.f32.mrf.mxu0
  %v819 = vadd.f32 %v650, %v818
  %820 = vmatmul.bf16.gmra.mxu0 %v348
  %v821 = vpop.f32.mrf.mxu0
  %v822 = vadd.f32 %v653, %v821
  %v823 = vpop.f32.mrf.mxu0
  %v824 = vadd.f32 %v655, %v823
  %825 = vmatmul.bf16.gmra.mxu0 %v350
  %v826 = vpop.f32.mrf.mxu0
  %v827 = vadd.f32 %v658, %v826
  %v828 = vpop.f32.mrf.mxu0
  %v829 = vadd.f32 %v660, %v828
  %830 = vmatmul.bf16.gmra.mxu0 %v352
  %v831 = vpop.f32.mrf.mxu0
  %v832 = vadd.f32 %v663, %v831
  %v833 = vpop.f32.mrf.mxu0
  %v834 = vadd.f32 %v665, %v833
  %835 = vmatmul.bf16.gmra.mxu0 %v354
  %v836 = vpop.f32.mrf.mxu0
  %v837 = vadd.f32 %v668, %v836
  %v838 = vpop.f32.mrf.mxu0
  %v839 = vadd.f32 %v670, %v838
  %840 = vmatmul.bf16.gmra.mxu0 %v356
  %v841 = vpop.f32.mrf.mxu0
  %v842 = vadd.f32 %v673, %v841
  %v843 = vpop.f32.mrf.mxu0
  %v844 = vadd.f32 %v675, %v843
  %845 = vmatmul.bf16.gmra.mxu0 %v358
  %v846 = vpop.f32.mrf.mxu0
  %v847 = vadd.f32 %v678, %v846
  %v848 = vpop.f32.mrf.mxu0
  %v849 = vadd.f32 %v680, %v848
  %850 = vmatmul.bf16.gmra.mxu0 %v360
  %v851 = vpop.f32.mrf.mxu0
  %v852 = vadd.f32 %v683, %v851
  %v853 = vpop.f32.mrf.mxu0
  %v854 = vadd.f32 %v685, %v853
  %855 = vmatmul.bf16.gmra.mxu0 %v362
  %v856 = vpop.f32.mrf.mxu0
  %v857 = vadd.f32 %v688, %v856
  %v858 = vpop.f32.mrf.mxu0
  %v859 = vadd.f32 %v690, %v858
  %860 = vdwg.mxu0
  %v861 = vtanh.pop %v702
  %v862 = vtanh.pop %v704
  %v863 = vtanh.pop %v707
  %v864 = vtanh.pop %v709
  %v865 = vtanh.pop %v712
  %v866 = vtanh.pop %v714
  %v867 = vtanh.pop %v717
  %v868 = vtanh.pop %v719
  %v869 = vtanh.pop %v722
  %v870 = vtanh.pop %v724
  %v871 = vtanh.pop %v727
  %v872 = vtanh.pop %v729
  %v873 = vtanh.pop %v732
  %v874 = vtanh.pop %v734
  %v875 = vtanh.pop %v737
  %v876 = vtanh.pop %v739
  %v877 = vtanh.pop %v742
  %v878 = vtanh.pop %v744
  %v879 = vtanh.pop %v747
  %v880 = vtanh.pop %v749
  %v881 = vtanh.pop %v752
  %v882 = vtanh.pop %v754
  %v883 = vtanh.pop %v757
  %v884 = vtanh.pop %v759
  %v885 = vtanh.pop %v762
  %v886 = vtanh.pop %v764
  %v887 = vtanh.pop %v767
  %v888 = vtanh.pop %v769
  %v889 = vtanh.pop %v772
  %v890 = vtanh.pop %v774
  %v891 = vtanh.pop %v777
  %v892 = vtanh.pop %v779
  %v893 = vtanh.pop %v782
  %v894 = vtanh.pop %v784
  %v895 = vtanh.pop %v787
  %v896 = vtanh.pop %v789
  %v897 = vtanh.pop %v792
  %v898 = vtanh.pop %v794
  %v899 = vtanh.pop %v797
  %v900 = vtanh.pop %v799
  %v901 = vtanh.pop %v802
  %v902 = vtanh.pop %v804
  %v903 = vtanh.pop %v807
  %v904 = vtanh.pop %v809
  %v905 = vtanh.pop %v812
  %v906 = vtanh.pop %v814
  %v907 = vtanh.pop %v817
  %v908 = vtanh.pop %v819
  %v909 = vtanh.pop %v822
  %v910 = vtanh.pop %v824
  %v911 = vtanh.pop %v827
  %v912 = vtanh.pop %v829
  %v913 = vtanh.pop %v832
  %v914 = vtanh.pop %v834
  %v915 = vtanh.pop %v837
  %v916 = vtanh.pop %v839
  %v917 = vtanh.pop %v842
  %v918 = vtanh.pop %v844
  %v919 = vtanh.pop %v847
  %v920 = vtanh.pop %v849
  %v921 = vtanh.pop %v852
  %v922 = vtanh.pop %v854
  %v923 = vtanh.pop %v857
  %v924 = vtanh.pop %v859
  %v925 = vpack.c.bf16 %v861, %v861
  %v926 = vpack.c.bf16 %v862, %v862
  %v927 = vpack.c.bf16 %v863, %v863
  %v928 = vpack.c.bf16 %v864, %v864
  %v929 = vpack.c.bf16 %v865, %v865
  %v930 = vpack.c.bf16 %v866, %v866
  %v931 = vpack.c.bf16 %v867, %v867
  %v932 = vpack.c.bf16 %v868, %v868
  %v933 = vpack.c.bf16 %v869, %v869
  %v934 = vpack.c.bf16 %v870, %v870
  %v935 = vpack.c.bf16 %v871, %v871
  %v936 = vpack.c.bf16 %v872, %v872
  %v937 = vpack.c.bf16 %v873, %v873
  %v938 = vpack.c.bf16 %v874, %v874
  %v939 = vpack.c.bf16 %v875, %v875
  %v940 = vpack.c.bf16 %v876, %v876
  %v941 = vpack.c.bf16 %v877, %v877
  %v942 = vpack.c.bf16 %v878, %v878
  %v943 = vpack.c.bf16 %v879, %v879
  %v944 = vpack.c.bf16 %v880, %v880
  %v945 = vpack.c.bf16 %v881, %v881
  %v946 = vpack.c.bf16 %v882, %v882
  %v947 = vpack.c.bf16 %v883, %v883
  %v948 = vpack.c.bf16 %v884, %v884
  %v949 = vpack.c.bf16 %v885, %v885
  %v950 = vpack.c.bf16 %v886, %v886
  %v951 = vpack.c.bf16 %v887, %v887
  %v952 = vpack.c.bf16 %v888, %v888
  %v953 = vpack.c.bf16 %v889, %v889
  %v954 = vpack.c.bf16 %v890, %v890
  %v955 = vpack.c.bf16 %v891, %v891
  %v956 = vpack.c.bf16 %v892, %v892
  %v957 = vpack.c.bf16 %v893, %v893
  %v958 = vpack.c.bf16 %v894, %v894
  %v959 = vpack.c.bf16 %v895, %v895
  %v960 = vpack.c.bf16 %v896, %v896
  %v961 = vpack.c.bf16 %v897, %v897
  %v962 = vpack.c.bf16 %v898, %v898
  %v963 = vpack.c.bf16 %v899, %v899
  %v964 = vpack.c.bf16 %v900, %v900
  %v965 = vpack.c.bf16 %v901, %v901
  %v966 = vpack.c.bf16 %v902, %v902
  %v967 = vpack.c.bf16 %v903, %v903
  %v968 = vpack.c.bf16 %v904, %v904
  %v969 = vpack.c.bf16 %v905, %v905
  %v970 = vpack.c.bf16 %v906, %v906
  %v971 = vpack.c.bf16 %v907, %v907
  %v972 = vpack.c.bf16 %v908, %v908
  %v973 = vpack.c.bf16 %v909, %v909
  %v974 = vpack.c.bf16 %v910, %v910
  %v975 = vpack.c.bf16 %v911, %v911
  %v976 = vpack.c.bf16 %v912, %v912
  %v977 = vpack.c.bf16 %v913, %v913
  %v978 = vpack.c.bf16 %v914, %v914
  %v979 = vpack.c.bf16 %v915, %v915
  %v980 = vpack.c.bf16 %v916, %v916
  %v981 = vpack.c.bf16 %v917, %v917
  %v982 = vpack.c.bf16 %v918, %v918
  %v983 = vpack.c.bf16 %v919, %v919
  %v984 = vpack.c.bf16 %v920, %v920
  %v985 = vpack.c.bf16 %v921, %v921
  %v986 = vpack.c.bf16 %v922, %v922
  %v987 = vpack.c.bf16 %v923, %v923
  %v988 = vpack.c.bf16 %v924, %v924
  %989 = vst [vmem:[%s2] sm:$0xf] %v925
  %990 = vst [vmem:[%s2 + $0x4] sm:$0xf] %v926
  %991 = vst [vmem:[%s2 + $0x8] sm:$0xf] %v927
  %992 = vst [vmem:[%s2 + $0xc] sm:$0xf] %v928
  %993 = vst [vmem:[%s2 + $0x10] sm:$0xf] %v929
  %994 = vst [vmem:[%s2 + $0x14] sm:$0xf] %v930
  %995 = vst [vmem:[%s2 + $0x18] sm:$0xf] %v931
  %996 = vst [vmem:[%s2 + $0x1c] sm:$0xf] %v932
  %997 = vst [vmem:[%s2 + $0x20] sm:$0xf] %v933
  %998 = vst [vmem:[%s2 + $0x24] sm:$0xf] %v934
  %999 = vst [vmem:[%s2 + $0x28] sm:$0xf] %v935
  %1000 = vst [vmem:[%s2 + $0x2c] sm:$0xf] %v936
  %1001 = vst [vmem:[%s2 + $0x30] sm:$0xf] %v937
  %1002 = vst [vmem:[%s2 + $0x34] sm:$0xf] %v938
  %1003 = vst [vmem:[%s2 + $0x38] sm:$0xf] %v939
  %1004 = vst [vmem:[%s2 + $0x3c] sm:$0xf] %v940
  %1005 = vst [vmem:[%s2 + $0x40] sm:$0xf] %v941
  %1006 = vst [vmem:[%s2 + $0x44] sm:$0xf] %v942
  %1007 = vst [vmem:[%s2 + $0x48] sm:$0xf] %v943
  %1008 = vst [vmem:[%s2 + $0x4c] sm:$0xf] %v944
  %1009 = vst [vmem:[%s2 + $0x50] sm:$0xf] %v945
  %1010 = vst [vmem:[%s2 + $0x54] sm:$0xf] %v946
  %1011 = vst [vmem:[%s2 + $0x58] sm:$0xf] %v947
  %1012 = vst [vmem:[%s2 + $0x5c] sm:$0xf] %v948
  %1013 = vst [vmem:[%s2 + $0x60] sm:$0xf] %v949
  %1014 = vst [vmem:[%s2 + $0x64] sm:$0xf] %v950
  %1015 = vst [vmem:[%s2 + $0x68] sm:$0xf] %v951
  %1016 = vst [vmem:[%s2 + $0x6c] sm:$0xf] %v952
  %1017 = vst [vmem:[%s2 + $0x70] sm:$0xf] %v953
  %1018 = vst [vmem:[%s2 + $0x74] sm:$0xf] %v954
  %1019 = vst [vmem:[%s2 + $0x78] sm:$0xf] %v955
  %1020 = vst [vmem:[%s2 + $0x7c] sm:$0xf] %v956
  %1021 = vst [vmem:[%s2 + $0x80] sm:$0xf] %v957
  %1022 = vst [vmem:[%s2 + $0x84] sm:$0xf] %v958
  %1023 = vst [vmem:[%s2 + $0x88] sm:$0xf] %v959
  %1024 = vst [vmem:[%s2 + $0x8c] sm:$0xf] %v960
  %1025 = vst [vmem:[%s2 + $0x90] sm:$0xf] %v961
  %1026 = vst [vmem:[%s2 + $0x94] sm:$0xf] %v962
  %1027 = vst [vmem:[%s2 + $0x98] sm:$0xf] %v963
  %1028 = vst [vmem:[%s2 + $0x9c] sm:$0xf] %v964
  %1029 = vst [vmem:[%s2 + $0xa0] sm:$0xf] %v965
  %1030 = vst [vmem:[%s2 + $0xa4] sm:$0xf] %v966
  %1031 = vst [vmem:[%s2 + $0xa8] sm:$0xf] %v967
  %1032 = vst [vmem:[%s2 + $0xac] sm:$0xf] %v968
  %1033 = vst [vmem:[%s2 + $0xb0] sm:$0xf] %v969
  %1034 = vst [vmem:[%s2 + $0xb4] sm:$0xf] %v970
  %1035 = vst [vmem:[%s2 + $0xb8] sm:$0xf] %v971
  %1036 = vst [vmem:[%s2 + $0xbc] sm:$0xf] %v972
  %1037 = vst [vmem:[%s2 + $0xc0] sm:$0xf] %v973
  %1038 = vst [vmem:[%s2 + $0xc4] sm:$0xf] %v974
  %1039 = vst [vmem:[%s2 + $0xc8] sm:$0xf] %v975
  %1040 = vst [vmem:[%s2 + $0xcc] sm:$0xf] %v976
  %1041 = vst [vmem:[%s2 + $0xd0] sm:$0xf] %v977
  %1042 = vst [vmem:[%s2 + $0xd4] sm:$0xf] %v978
  %1043 = vst [vmem:[%s2 + $0xd8] sm:$0xf] %v979
  %1044 = vst [vmem:[%s2 + $0xdc] sm:$0xf] %v980
  %1045 = vst [vmem:[%s2 + $0xe0] sm:$0xf] %v981
  %1046 = vst [vmem:[%s2 + $0xe4] sm:$0xf] %v982
  %1047 = vst [vmem:[%s2 + $0xe8] sm:$0xf] %v983
  %1048 = vst [vmem:[%s2 + $0xec] sm:$0xf] %v984
  %1049 = vst [vmem:[%s2 + $0xf0] sm:$0xf] %v985
  %1050 = vst [vmem:[%s2 + $0xf4] sm:$0xf] %v986
  %1051 = vst [vmem:[%s2 + $0xf8] sm:$0xf] %v987
  %1052 = vst [vmem:[%s2 + $0xfc] sm:$0xf] %v988
  // Predicated region
  $region10: #{_lambda_.13} parent=0 // pred_check
    _
  $region11: #{_lambda_.13} parent=0 // pred_check_branch
    %1054 = sbr.rel (0) target = $region13
  $region12: #{_lambda_.13} parent=0 // pred_region
    _
  $region13: #{_lambda_.13} parent=0 // pred_fallthru
    _
  // Predicated region
  $region14: #{_lambda_.13} parent=0 // pred_check
    _
  $region15: #{_lambda_.13} parent=0 // pred_check_branch
    %1056 = sbr.rel (0) target = $region17
  $region16: #{_lambda_.13} parent=0 // pred_region
    _
  $region17: #{_lambda_.13} parent=0 // pred_fallthru
    _

</llo_original>
